<compile_context>
chip_gen: v7x
topology: tpu7x:2x2x1
jax: 0.10.0
libtpu: 0.0.40
codegen_flags: <defaults>
</compile_context>

<pallas_src>
import functools

import jax
import jax.numpy as jnp
from jax.experimental import pallas as pl
from jax.experimental.pallas import tpu as pltpu


def _round_up(x, m):
    return (x + m - 1) // m * m


def _vmem_tile_bytes(rows, cols, itemsize):
    """Padded VMEM footprint of a (rows, cols) buffer of the given itemsize."""
    sub = 8 * (4 // itemsize) if itemsize < 4 else 8
    return _round_up(max(rows, 1), sub) * _round_up(max(cols, 1), 128) * itemsize


def _conv_bn_kernel(*refs, tap_offsets, tm, halo, cin, add_residual,
                    mask_output, apply_relu):
    """One lane tile of the 3x3x3 conv.

    Stages [left halo | cur | right halo] into an f32 VMEM buffer, scatters the
    27 statically-shifted tap views into a (27*Cin, tm) stacked-K slab, runs a
    single (Cout, 27*Cin) @ (27*Cin, tm) MXU matmul, then applies the folded-BN
    shift, optional pre-aligned residual add, ReLU and ring mask."""
    it = iter(refs)
    lhalo_ref = next(it)
    cur_ref = next(it)
    rhalo_ref = next(it)
    res_ref = next(it) if add_residual else None
    mask_ref = next(it) if mask_output else None
    w_ref = next(it)
    shift_ref = next(it)
    o_ref = next(it)
    xbuf_ref = next(it)
    slab_ref = next(it)

    # Stage left halo | current tile | right halo contiguously (lane-aligned
    # stores, f32) so every tap is a static lane-offset slice of one buffer.
    xbuf_ref[:, :halo] = lhalo_ref[0].astype(jnp.float32)
    xbuf_ref[:, halo:halo + tm] = cur_ref[0].astype(jnp.float32)
    xbuf_ref[:, halo + tm:] = rhalo_ref[0].astype(jnp.float32)

    # Stack the 27 shifted tap views along the MXU contraction dimension.
    for tap, off in enumerate(tap_offsets):
        slab_ref[tap * cin:(tap + 1) * cin, :] = xbuf_ref[:, off:off + tm]

    # One big matmul instead of 27 tiny K=Cin dots + 26 accumulate adds.
    y = jnp.dot(w_ref[...], slab_ref[...], preferred_element_type=jnp.float32)
    y = y + shift_ref[...]                          # folded-BN shift
    if add_residual:
        y = y + res_ref[0].astype(jnp.float32)      # pre-aligned residual tile
    if apply_relu:
        y = jnp.maximum(y, 0.0)
    if mask_output:
        y = y * mask_ref[...]                       # zero padded ring / tail
    o_ref[0] = y.astype(o_ref.dtype)


def _conv3x3x3_bn(act, w2d, shift, spatial_padded, *, tm, halo, T,
                  residual=None, mask=None, apply_relu=True,
                  out_dtype=jnp.float32):
    """act: (N, Cin, L) flat activations; volume position p at column tm + p,
    zero guards elsewhere.  w2d: (Cout, 27*Cin) folded weights (f32).
    shift: (Cout, 1) folded-BN shift.  Output: (N, Cout, L) in the SAME flat
    layout (guard tiles left unwritten; interior outputs never read them)."""
    N, Cin, L = act.shape
    Cout = w2d.shape[0]
    Dp, Hp, Wp = spatial_padded
    Mp = Dp * Hp * Wp
    G0 = Hp * Wp + Wp + 1                       # center-tap flat offset
    ratio = tm // halo
    assert tm % 128 == 0 and halo % 128 == 0 and tm % halo == 0
    assert halo >= G0 and L == (T + 2) * tm and T * tm >= Mp

    # Offsets of the 27 taps inside the staged [halo | tm | halo] buffer.
    tap_offsets = tuple(halo - G0 + kd * Hp * Wp + kh * Wp + kw
                        for kd in range(3) for kh in range(3) for kw in range(3))

    lhalo_spec = pl.BlockSpec((1, Cin, halo),
                              lambda n, t: (n, 0, (t + 1) * ratio - 1))
    cur_spec = pl.BlockSpec((1, Cin, tm), lambda n, t: (n, 0, t + 1))
    rhalo_spec = pl.BlockSpec((1, Cin, halo),
                              lambda n, t: (n, 0, (t + 2) * ratio))

    in_specs = [lhalo_spec, cur_spec, rhalo_spec]
    args = [act, act, act]
    if residual is not None:
        in_specs.append(pl.BlockSpec((1, Cin, tm), lambda n, t: (n, 0, t + 1)))
        args.append(residual)
    if mask is not None:
        in_specs.append(pl.BlockSpec((1, tm), lambda n, t: (0, t)))
        args.append(mask)
    in_specs += [
        pl.BlockSpec((Cout, 27 * Cin), lambda n, t: (0, 0)),  # resident weights
        pl.BlockSpec((Cout, 1), lambda n, t: (0, 0)),         # BN shift
    ]
    args += [w2d, shift]

    scratch = [pltpu.VMEM((Cin, tm + 2 * halo), jnp.float32),  # staged tile+halos
               pltpu.VMEM((27 * Cin, tm), jnp.float32)]        # stacked-K slab

    kernel = functools.partial(
        _conv_bn_kernel, tap_offsets=tap_offsets, tm=tm, halo=halo, cin=Cin,
        add_residual=residual is not None, mask_output=mask is not None,
        apply_relu=apply_relu)

    # Explicit VMEM budget from the actual footprint (double-buffered blocks +
    # scratch), with headroom.
    a_it = jnp.dtype(act.dtype).itemsize
    o_it = jnp.dtype(out_dtype).itemsize
    fp = 2 * _vmem_tile_bytes(Cin, tm, a_it)
    fp += 2 * 2 * _vmem_tile_bytes(Cin, halo, a_it)
    if residual is not None:
        fp += 2 * _vmem_tile_bytes(Cin, tm, a_it)
    if mask is not None:
        fp += 2 * _vmem_tile_bytes(1, tm, 4)
    fp += 2 * _vmem_tile_bytes(Cout, 27 * Cin, 4)
    fp += 2 * _vmem_tile_bytes(Cout, 1, 4)
    fp += 2 * _vmem_tile_bytes(Cout, tm, o_it)
    fp += _vmem_tile_bytes(Cin, tm + 2 * halo, 4)
    fp += _vmem_tile_bytes(27 * Cin, tm, 4)
    vmem_limit = int(min(64 << 20, max(24 << 20, 2 * fp + (4 << 20))))

    flops = 2 * 27 * Cin * Cout * N * T * tm
    bytes_accessed = (N * T * Cin * (tm + 2 * halo) * a_it
                      + (N * T * Cin * tm * a_it if residual is not None else 0)
                      + (N * T * tm * 4 if mask is not None else 0)
                      + N * T * Cout * tm * o_it
                      + 27 * Cin * Cout * 4 + Cout * 4)

    return pl.pallas_call(
        kernel,
        out_shape=jax.ShapeDtypeStruct((N, Cout, L), out_dtype),
        grid_spec=pltpu.PrefetchScalarGridSpec(
            num_scalar_prefetch=0,
            grid=(N, T),
            in_specs=in_specs,
            out_specs=pl.BlockSpec((1, Cout, tm), lambda n, t: (n, 0, t + 1)),
            scratch_shapes=scratch,
        ),
        compiler_params=pltpu.CompilerParams(
            dimension_semantics=("parallel", "parallel"),
            vmem_limit_bytes=vmem_limit),
        cost_estimate=pl.CostEstimate(
            flops=flops, transcendentals=0, bytes_accessed=bytes_accessed),
    )(*args)


def init_simple_rb_params(key, in_channel, eps=1e-5):
    """Deterministic synthetic parameters matching the PyTorch module shapes."""
    k1, k2, k3, k4, k5, k6 = jax.random.split(key, 6)
    fan_in = in_channel * 27
    w_std = (2.0 / fan_in) ** 0.5
    return dict(
        w1=jax.random.normal(k1, (in_channel, in_channel, 3, 3, 3), jnp.float32) * w_std,
        w2=jax.random.normal(k2, (in_channel, in_channel, 3, 3, 3), jnp.float32) * w_std,
        g1=1.0 + 0.1 * jax.random.normal(k3, (in_channel,), jnp.float32),
        b1=0.1 * jax.random.normal(k4, (in_channel,), jnp.float32),
        g2=1.0 + 0.1 * jax.random.normal(k5, (in_channel,), jnp.float32),
        b2=0.1 * jax.random.normal(k6, (in_channel,), jnp.float32),
        rm1=jnp.zeros((in_channel,), jnp.float32),
        rv1=jnp.ones((in_channel,), jnp.float32),
        rm2=jnp.zeros((in_channel,), jnp.float32),
        rv2=jnp.ones((in_channel,), jnp.float32),
        eps=eps,
    )


def simple_rb_forward(params, x_ncdhw, *, act_dtype=jnp.bfloat16,
                      tm_target=1024):
    """x_ncdhw: (N, C, D, H, W) float32 (PyTorch NCDHW). Returns same shape."""
    N, C, D, H, W = x_ncdhw.shape
    Dp, Hp, Wp = D + 2, H + 2, W + 2
    Mp = Dp * Hp * Wp
    G0 = Hp * Wp + Wp + 1
    eps = params["eps"]

    halo = _round_up(G0, 128)
    # Lane-dense tile width: multiple of halo, near tm_target, no larger than
    # the volume needs, and bounded so the (C, tm) f32 accumulator stays well
    # under the vreg file (<= ~96 KiB).
    vreg_cap = max(halo, (96 * 1024 // (4 * C)) // halo * halo)
    tm = max(halo, min(max(halo, tm_target // halo * halo),
                       _round_up(Mp, halo), vreg_cap))
    T = -(-Mp // tm)
    L = (T + 2) * tm                 # one zero guard tile on each side

    # Unified guard-padded flat layout shared by x, the conv1->conv2
    # intermediate and both conv outputs: volume position p at column tm + p.
    xp = jnp.pad(x_ncdhw, ((0, 0), (0, 0), (1, 1), (1, 1), (1, 1)))
    xflat = jnp.pad(xp.reshape(N, C, Mp),
                    ((0, 0), (0, 0), (tm, L - Mp - tm))).astype(act_dtype)

    # Interior mask on the padded grid (zero at the ring and past Mp) so conv1
    # writes a buffer conv2 can consume directly (no XLA repack in between).
    p = jnp.arange(T * tm, dtype=jnp.int32)
    d = p // (Hp * Wp)
    r = p - d * (Hp * Wp)
    h = r // Wp
    w = r - h * Wp
    interior = ((p < Mp) & (d >= 1) & (d <= Dp - 2)
                & (h >= 1) & (h <= Hp - 2) & (w >= 1) & (w <= Wp - 2))
    mask = interior.astype(jnp.float32).reshape(1, T * tm)

    def fold_bn(wt, g, b, rm, rv):
        # Fold the eval-mode BN scale into the conv weights (trace-time, free).
        scale = g / jnp.sqrt(rv + eps)                          # (C,)
        shift = (b - rm * scale).reshape(C, 1).astype(jnp.float32)
        ws = wt * scale[:, None, None, None, None]              # (Cout,Cin,3,3,3)
        w2d = jnp.transpose(ws, (0, 2, 3, 4, 1)).reshape(C, 27 * C)
        return w2d.astype(jnp.float32), shift

    w1, sh1 = fold_bn(params["w1"], params["g1"], params["b1"],
                      params["rm1"], params["rv1"])
    w2, sh2 = fold_bn(params["w2"], params["g2"], params["b2"],
                      params["rm2"], params["rv2"])

    # conv1 + bn1 + relu, ring/tail masked to zero -> directly reusable layout.
    y1 = _conv3x3x3_bn(xflat, w1, sh1, (Dp, Hp, Wp), tm=tm, halo=halo, T=T,
                       residual=None, mask=mask, apply_relu=True,
                       out_dtype=act_dtype)
    # conv2 + bn2 + residual add + relu (residual = aligned cur tile of xflat).
    out = _conv3x3x3_bn(y1, w2, sh2, (Dp, Hp, Wp), tm=tm, halo=halo, T=T,
                        residual=xflat, mask=None, apply_relu=True,
                        out_dtype=jnp.float32)

    out = out[:, :, tm:tm + Mp].reshape(N, C, Dp, Hp, Wp)
    return out[:, :, 1:-1, 1:-1, 1:-1]


def _reference(params, x):
    """Pure-JAX reference (lax conv, f32) of the same forward, for verification."""
    eps = params["eps"]

    def conv(x, w):
        return jax.lax.conv_general_dilated(
            x, w, window_strides=(1, 1, 1), padding=((1, 1),) * 3,
            dimension_numbers=("NCDHW", "OIDHW", "NCDHW"))

    def bn(x, g, b, rm, rv):
        s = (1, -1, 1, 1, 1)
        return (x - rm.reshape(s)) / jnp.sqrt(rv.reshape(s) + eps) \
            * g.reshape(s) + b.reshape(s)

    h = jax.nn.relu(bn(conv(x, params["w1"]),
                       params["g1"], params["b1"], params["rm1"], params["rv1"]))
    h = bn(conv(h, params["w2"]),
           params["g2"], params["b2"], params["rm2"], params["rv2"])
    return jax.nn.relu(x + h)


if __name__ == "__main__":
    key = jax.random.PRNGKey(0)
    k_x, k_p = jax.random.split(key)

    N, C, D, H, W = 2, 4, 8, 8, 8
    x = jax.random.normal(k_x, (N, C, D, H, W), jnp.float32)
    params = init_simple_rb_params(k_p, C)

    fwd = jax.jit(simple_rb_forward)
    out = jax.block_until_ready(fwd(params, x))

    ref = jax.block_until_ready(_reference(params, x))
    assert out.shape == ref.shape == (N, C, D, H, W)
    # Activations are stored in HBM as bfloat16 -> compare at bf16 tolerance.
    assert bool(jnp.allclose(out, ref, atol=2e-2, rtol=2e-2)), \
        "Pallas SimpleRB output mismatch vs JAX reference"

    print("KERNEL_OK")
</pallas_src>

<mosaic_0001>
module attributes {stable_mosaic.version = 11 : i64} {
  func.func @_conv_bn_kernel(%arg0: i32, %arg1: i32, %arg2: memref<1x4x128xbf16, #tpu.memory_space<vmem>>, %arg3: memref<1x4x1024xbf16, #tpu.memory_space<vmem>>, %arg4: memref<1x4x128xbf16, #tpu.memory_space<vmem>>, %arg5: memref<1x1024xf32, #tpu.memory_space<vmem>>, %arg6: memref<4x108xf32, #tpu.memory_space<vmem>>, %arg7: memref<4x1xf32, #tpu.memory_space<vmem>>, %arg8: memref<1x4x1024xbf16, #tpu.memory_space<vmem>>, %arg9: memref<4x1280xf32, #tpu.memory_space<vmem>>, %arg10: memref<108x1024xf32, #tpu.memory_space<vmem>>) attributes {dimension_semantics = [#tpu.dimension_semantics<parallel>, #tpu.dimension_semantics<parallel>], iteration_bounds = array<i64: 2, 1>, scalar_prefetch = 0 : i64, scratch_operands = 2 : i64, tpu.core_type = #tpu.core_type<tc>, window_params = [{transform_indices = @transform_0, window_bounds = array<i64: 1, 4, 128>}, {transform_indices = @transform_1, window_bounds = array<i64: 1, 4, 1024>}, {transform_indices = @transform_2, window_bounds = array<i64: 1, 4, 128>}, {transform_indices = @transform_3, window_bounds = array<i64: 1, 1024>}, {pipeline_mode = #tpu.pipeline_mode<synchronous>, transform_indices = @transform_4, window_bounds = array<i64: 4, 108>}, {pipeline_mode = #tpu.pipeline_mode<synchronous>, transform_indices = @transform_5, window_bounds = array<i64: 4, 1>}, {transform_indices = @transform_6, window_bounds = array<i64: 1, 4, 1024>}]} {
    %c0 = arith.constant 0 : index
    %c0_0 = arith.constant 0 : index
    %c0_1 = arith.constant 0 : index
    %0 = vector.load %arg2[%c0, %c0_0, %c0_1] : memref<1x4x128xbf16, #tpu.memory_space<vmem>>, vector<1x4x128xbf16>
    %1 = vector.shape_cast %0 : vector<1x4x128xbf16> to vector<4x128xbf16>
    %2 = arith.extf %1 : vector<4x128xbf16> to vector<4x128xf32>
    %c0_2 = arith.constant 0 : index
    %c0_3 = arith.constant 0 : index
    %3 = vector.load %arg9[%c0_2, %c0_3] : memref<4x1280xf32, #tpu.memory_space<vmem>>, vector<4x128xf32>
    tpu.vector_store %arg9[%c0_2, %c0_3], %2 {strides = array<i32>} : memref<4x1280xf32, #tpu.memory_space<vmem>>, vector<4x128xf32>,
    %c0_4 = arith.constant 0 : index
    %c0_5 = arith.constant 0 : index
    %c0_6 = arith.constant 0 : index
    %4 = vector.load %arg3[%c0_4, %c0_5, %c0_6] : memref<1x4x1024xbf16, #tpu.memory_space<vmem>>, vector<1x4x1024xbf16>
    %5 = vector.shape_cast %4 : vector<1x4x1024xbf16> to vector<4x1024xbf16>
    %6 = arith.extf %5 : vector<4x1024xbf16> to vector<4x1024xf32>
    %c0_7 = arith.constant 0 : index
    %c128 = arith.constant 128 : index
    %7 = vector.load %arg9[%c0_7, %c128] : memref<4x1280xf32, #tpu.memory_space<vmem>>, vector<4x1024xf32>
    tpu.vector_store %arg9[%c0_7, %c128], %6 {strides = array<i32>} : memref<4x1280xf32, #tpu.memory_space<vmem>>, vector<4x1024xf32>,
    %c0_8 = arith.constant 0 : index
    %c0_9 = arith.constant 0 : index
    %c0_10 = arith.constant 0 : index
    %8 = vector.load %arg4[%c0_8, %c0_9, %c0_10] : memref<1x4x128xbf16, #tpu.memory_space<vmem>>, vector<1x4x128xbf16>
    %9 = vector.shape_cast %8 : vector<1x4x128xbf16> to vector<4x128xbf16>
    %10 = arith.extf %9 : vector<4x128xbf16> to vector<4x128xf32>
    %c0_11 = arith.constant 0 : index
    %c1152 = arith.constant 1152 : index
    %11 = vector.load %arg9[%c0_11, %c1152] : memref<4x1280xf32, #tpu.memory_space<vmem>>, vector<4x128xf32>
    tpu.vector_store %arg9[%c0_11, %c1152], %10 {strides = array<i32>} : memref<4x1280xf32, #tpu.memory_space<vmem>>, vector<4x128xf32>,
    %c0_12 = arith.constant 0 : index
    %c17 = arith.constant 17 : index
    %12 = vector.load %arg9[%c0_12, %c17] : memref<4x1280xf32, #tpu.memory_space<vmem>>, vector<4x1024xf32>
    %c0_13 = arith.constant 0 : index
    %c0_14 = arith.constant 0 : index
    %13 = vector.load %arg10[%c0_13, %c0_14] : memref<108x1024xf32, #tpu.memory_space<vmem>>, vector<4x1024xf32>
    tpu.vector_store %arg10[%c0_13, %c0_14], %12 {strides = array<i32>} : memref<108x1024xf32, #tpu.memory_space<vmem>>, vector<4x1024xf32>,
    %c0_15 = arith.constant 0 : index
    %c18 = arith.constant 18 : index
    %14 = vector.load %arg9[%c0_15, %c18] : memref<4x1280xf32, #tpu.memory_space<vmem>>, vector<4x1024xf32>
    %c4 = arith.constant 4 : index
    %c0_16 = arith.constant 0 : index
    %15 = vector.load %arg10[%c4, %c0_16] : memref<108x1024xf32, #tpu.memory_space<vmem>>, vector<4x1024xf32>
    tpu.vector_store %arg10[%c4, %c0_16], %14 {strides = array<i32>} : memref<108x1024xf32, #tpu.memory_space<vmem>>, vector<4x1024xf32>,
    %c0_17 = arith.constant 0 : index
    %c19 = arith.constant 19 : index
    %16 = vector.load %arg9[%c0_17, %c19] : memref<4x1280xf32, #tpu.memory_space<vmem>>, vector<4x1024xf32>
    %c8 = arith.constant 8 : index
    %c0_18 = arith.constant 0 : index
    %17 = vector.load %arg10[%c8, %c0_18] : memref<108x1024xf32, #tpu.memory_space<vmem>>, vector<4x1024xf32>
    tpu.vector_store %arg10[%c8, %c0_18], %16 {strides = array<i32>} : memref<108x1024xf32, #tpu.memory_space<vmem>>, vector<4x1024xf32>,
    %c0_19 = arith.constant 0 : index
    %c27 = arith.constant 27 : index
    %18 = vector.load %arg9[%c0_19, %c27] : memref<4x1280xf32, #tpu.memory_space<vmem>>, vector<4x1024xf32>
    %c12 = arith.constant 12 : index
    %c0_20 = arith.constant 0 : index
    %19 = vector.load %arg10[%c12, %c0_20] : memref<108x1024xf32, #tpu.memory_space<vmem>>, vector<4x1024xf32>
    tpu.vector_store %arg10[%c12, %c0_20], %18 {strides = array<i32>} : memref<108x1024xf32, #tpu.memory_space<vmem>>, vector<4x1024xf32>,
    %c0_21 = arith.constant 0 : index
    %c28 = arith.constant 28 : index
    %20 = vector.load %arg9[%c0_21, %c28] : memref<4x1280xf32, #tpu.memory_space<vmem>>, vector<4x1024xf32>
    %c16 = arith.constant 16 : index
    %c0_22 = arith.constant 0 : index
    %21 = vector.load %arg10[%c16, %c0_22] : memref<108x1024xf32, #tpu.memory_space<vmem>>, vector<4x1024xf32>
    tpu.vector_store %arg10[%c16, %c0_22], %20 {strides = array<i32>} : memref<108x1024xf32, #tpu.memory_space<vmem>>, vector<4x1024xf32>,
    %c0_23 = arith.constant 0 : index
    %c29 = arith.constant 29 : index
    %22 = vector.load %arg9[%c0_23, %c29] : memref<4x1280xf32, #tpu.memory_space<vmem>>, vector<4x1024xf32>
    %c20 = arith.constant 20 : index
    %c0_24 = arith.constant 0 : index
    %23 = vector.load %arg10[%c20, %c0_24] : memref<108x1024xf32, #tpu.memory_space<vmem>>, vector<4x1024xf32>
    tpu.vector_store %arg10[%c20, %c0_24], %22 {strides = array<i32>} : memref<108x1024xf32, #tpu.memory_space<vmem>>, vector<4x1024xf32>,
    %c0_25 = arith.constant 0 : index
    %c37 = arith.constant 37 : index
    %24 = vector.load %arg9[%c0_25, %c37] : memref<4x1280xf32, #tpu.memory_space<vmem>>, vector<4x1024xf32>
    %c24 = arith.constant 24 : index
    %c0_26 = arith.constant 0 : index
    %25 = vector.load %arg10[%c24, %c0_26] : memref<108x1024xf32, #tpu.memory_space<vmem>>, vector<4x1024xf32>
    tpu.vector_store %arg10[%c24, %c0_26], %24 {strides = array<i32>} : memref<108x1024xf32, #tpu.memory_space<vmem>>, vector<4x1024xf32>,
    %c0_27 = arith.constant 0 : index
    %c38 = arith.constant 38 : index
    %26 = vector.load %arg9[%c0_27, %c38] : memref<4x1280xf32, #tpu.memory_space<vmem>>, vector<4x1024xf32>
    %c28_28 = arith.constant 28 : index
    %c0_29 = arith.constant 0 : index
    %27 = vector.load %arg10[%c28_28, %c0_29] : memref<108x1024xf32, #tpu.memory_space<vmem>>, vector<4x1024xf32>
    tpu.vector_store %arg10[%c28_28, %c0_29], %26 {strides = array<i32>} : memref<108x1024xf32, #tpu.memory_space<vmem>>, vector<4x1024xf32>,
    %c0_30 = arith.constant 0 : index
    %c39 = arith.constant 39 : index
    %28 = vector.load %arg9[%c0_30, %c39] : memref<4x1280xf32, #tpu.memory_space<vmem>>, vector<4x1024xf32>
    %c32 = arith.constant 32 : index
    %c0_31 = arith.constant 0 : index
    %29 = vector.load %arg10[%c32, %c0_31] : memref<108x1024xf32, #tpu.memory_space<vmem>>, vector<4x1024xf32>
    tpu.vector_store %arg10[%c32, %c0_31], %28 {strides = array<i32>} : memref<108x1024xf32, #tpu.memory_space<vmem>>, vector<4x1024xf32>,
    %c0_32 = arith.constant 0 : index
    %c117 = arith.constant 117 : index
    %30 = vector.load %arg9[%c0_32, %c117] : memref<4x1280xf32, #tpu.memory_space<vmem>>, vector<4x1024xf32>
    %c36 = arith.constant 36 : index
    %c0_33 = arith.constant 0 : index
    %31 = vector.load %arg10[%c36, %c0_33] : memref<108x1024xf32, #tpu.memory_space<vmem>>, vector<4x1024xf32>
    tpu.vector_store %arg10[%c36, %c0_33], %30 {strides = array<i32>} : memref<108x1024xf32, #tpu.memory_space<vmem>>, vector<4x1024xf32>,
    %c0_34 = arith.constant 0 : index
    %c118 = arith.constant 118 : index
    %32 = vector.load %arg9[%c0_34, %c118] : memref<4x1280xf32, #tpu.memory_space<vmem>>, vector<4x1024xf32>
    %c40 = arith.constant 40 : index
    %c0_35 = arith.constant 0 : index
    %33 = vector.load %arg10[%c40, %c0_35] : memref<108x1024xf32, #tpu.memory_space<vmem>>, vector<4x1024xf32>
    tpu.vector_store %arg10[%c40, %c0_35], %32 {strides = array<i32>} : memref<108x1024xf32, #tpu.memory_space<vmem>>, vector<4x1024xf32>,
    %c0_36 = arith.constant 0 : index
    %c119 = arith.constant 119 : index
    %34 = vector.load %arg9[%c0_36, %c119] : memref<4x1280xf32, #tpu.memory_space<vmem>>, vector<4x1024xf32>
    %c44 = arith.constant 44 : index
    %c0_37 = arith.constant 0 : index
    %35 = vector.load %arg10[%c44, %c0_37] : memref<108x1024xf32, #tpu.memory_space<vmem>>, vector<4x1024xf32>
    tpu.vector_store %arg10[%c44, %c0_37], %34 {strides = array<i32>} : memref<108x1024xf32, #tpu.memory_space<vmem>>, vector<4x1024xf32>,
    %c0_38 = arith.constant 0 : index
    %c127 = arith.constant 127 : index
    %36 = vector.load %arg9[%c0_38, %c127] : memref<4x1280xf32, #tpu.memory_space<vmem>>, vector<4x1024xf32>
    %c48 = arith.constant 48 : index
    %c0_39 = arith.constant 0 : index
    %37 = vector.load %arg10[%c48, %c0_39] : memref<108x1024xf32, #tpu.memory_space<vmem>>, vector<4x1024xf32>
    tpu.vector_store %arg10[%c48, %c0_39], %36 {strides = array<i32>} : memref<108x1024xf32, #tpu.memory_space<vmem>>, vector<4x1024xf32>,
    %c0_40 = arith.constant 0 : index
    %c128_41 = arith.constant 128 : index
    %38 = vector.load %arg9[%c0_40, %c128_41] : memref<4x1280xf32, #tpu.memory_space<vmem>>, vector<4x1024xf32>
    %c52 = arith.constant 52 : index
    %c0_42 = arith.constant 0 : index
    %39 = vector.load %arg10[%c52, %c0_42] : memref<108x1024xf32, #tpu.memory_space<vmem>>, vector<4x1024xf32>
    tpu.vector_store %arg10[%c52, %c0_42], %38 {strides = array<i32>} : memref<108x1024xf32, #tpu.memory_space<vmem>>, vector<4x1024xf32>,
    %c0_43 = arith.constant 0 : index
    %c129 = arith.constant 129 : index
    %40 = vector.load %arg9[%c0_43, %c129] : memref<4x1280xf32, #tpu.memory_space<vmem>>, vector<4x1024xf32>
    %c56 = arith.constant 56 : index
    %c0_44 = arith.constant 0 : index
    %41 = vector.load %arg10[%c56, %c0_44] : memref<108x1024xf32, #tpu.memory_space<vmem>>, vector<4x1024xf32>
    tpu.vector_store %arg10[%c56, %c0_44], %40 {strides = array<i32>} : memref<108x1024xf32, #tpu.memory_space<vmem>>, vector<4x1024xf32>,
    %c0_45 = arith.constant 0 : index
    %c137 = arith.constant 137 : index
    %42 = vector.load %arg9[%c0_45, %c137] : memref<4x1280xf32, #tpu.memory_space<vmem>>, vector<4x1024xf32>
    %c60 = arith.constant 60 : index
    %c0_46 = arith.constant 0 : index
    %43 = vector.load %arg10[%c60, %c0_46] : memref<108x1024xf32, #tpu.memory_space<vmem>>, vector<4x1024xf32>
    tpu.vector_store %arg10[%c60, %c0_46], %42 {strides = array<i32>} : memref<108x1024xf32, #tpu.memory_space<vmem>>, vector<4x1024xf32>,
    %c0_47 = arith.constant 0 : index
    %c138 = arith.constant 138 : index
    %44 = vector.load %arg9[%c0_47, %c138] : memref<4x1280xf32, #tpu.memory_space<vmem>>, vector<4x1024xf32>
    %c64 = arith.constant 64 : index
    %c0_48 = arith.constant 0 : index
    %45 = vector.load %arg10[%c64, %c0_48] : memref<108x1024xf32, #tpu.memory_space<vmem>>, vector<4x1024xf32>
    tpu.vector_store %arg10[%c64, %c0_48], %44 {strides = array<i32>} : memref<108x1024xf32, #tpu.memory_space<vmem>>, vector<4x1024xf32>,
    %c0_49 = arith.constant 0 : index
    %c139 = arith.constant 139 : index
    %46 = vector.load %arg9[%c0_49, %c139] : memref<4x1280xf32, #tpu.memory_space<vmem>>, vector<4x1024xf32>
    %c68 = arith.constant 68 : index
    %c0_50 = arith.constant 0 : index
    %47 = vector.load %arg10[%c68, %c0_50] : memref<108x1024xf32, #tpu.memory_space<vmem>>, vector<4x1024xf32>
    tpu.vector_store %arg10[%c68, %c0_50], %46 {strides = array<i32>} : memref<108x1024xf32, #tpu.memory_space<vmem>>, vector<4x1024xf32>,
    %c0_51 = arith.constant 0 : index
    %c217 = arith.constant 217 : index
    %48 = vector.load %arg9[%c0_51, %c217] : memref<4x1280xf32, #tpu.memory_space<vmem>>, vector<4x1024xf32>
    %c72 = arith.constant 72 : index
    %c0_52 = arith.constant 0 : index
    %49 = vector.load %arg10[%c72, %c0_52] : memref<108x1024xf32, #tpu.memory_space<vmem>>, vector<4x1024xf32>
    tpu.vector_store %arg10[%c72, %c0_52], %48 {strides = array<i32>} : memref<108x1024xf32, #tpu.memory_space<vmem>>, vector<4x1024xf32>,
    %c0_53 = arith.constant 0 : index
    %c218 = arith.constant 218 : index
    %50 = vector.load %arg9[%c0_53, %c218] : memref<4x1280xf32, #tpu.memory_space<vmem>>, vector<4x1024xf32>
    %c76 = arith.constant 76 : index
    %c0_54 = arith.constant 0 : index
    %51 = vector.load %arg10[%c76, %c0_54] : memref<108x1024xf32, #tpu.memory_space<vmem>>, vector<4x1024xf32>
    tpu.vector_store %arg10[%c76, %c0_54], %50 {strides = array<i32>} : memref<108x1024xf32, #tpu.memory_space<vmem>>, vector<4x1024xf32>,
    %c0_55 = arith.constant 0 : index
    %c219 = arith.constant 219 : index
    %52 = vector.load %arg9[%c0_55, %c219] : memref<4x1280xf32, #tpu.memory_space<vmem>>, vector<4x1024xf32>
    %c80 = arith.constant 80 : index
    %c0_56 = arith.constant 0 : index
    %53 = vector.load %arg10[%c80, %c0_56] : memref<108x1024xf32, #tpu.memory_space<vmem>>, vector<4x1024xf32>
    tpu.vector_store %arg10[%c80, %c0_56], %52 {strides = array<i32>} : memref<108x1024xf32, #tpu.memory_space<vmem>>, vector<4x1024xf32>,
    %c0_57 = arith.constant 0 : index
    %c227 = arith.constant 227 : index
    %54 = vector.load %arg9[%c0_57, %c227] : memref<4x1280xf32, #tpu.memory_space<vmem>>, vector<4x1024xf32>
    %c84 = arith.constant 84 : index
    %c0_58 = arith.constant 0 : index
    %55 = vector.load %arg10[%c84, %c0_58] : memref<108x1024xf32, #tpu.memory_space<vmem>>, vector<4x1024xf32>
    tpu.vector_store %arg10[%c84, %c0_58], %54 {strides = array<i32>} : memref<108x1024xf32, #tpu.memory_space<vmem>>, vector<4x1024xf32>,
    %c0_59 = arith.constant 0 : index
    %c228 = arith.constant 228 : index
    %56 = vector.load %arg9[%c0_59, %c228] : memref<4x1280xf32, #tpu.memory_space<vmem>>, vector<4x1024xf32>
    %c88 = arith.constant 88 : index
    %c0_60 = arith.constant 0 : index
    %57 = vector.load %arg10[%c88, %c0_60] : memref<108x1024xf32, #tpu.memory_space<vmem>>, vector<4x1024xf32>
    tpu.vector_store %arg10[%c88, %c0_60], %56 {strides = array<i32>} : memref<108x1024xf32, #tpu.memory_space<vmem>>, vector<4x1024xf32>,
    %c0_61 = arith.constant 0 : index
    %c229 = arith.constant 229 : index
    %58 = vector.load %arg9[%c0_61, %c229] : memref<4x1280xf32, #tpu.memory_space<vmem>>, vector<4x1024xf32>
    %c92 = arith.constant 92 : index
    %c0_62 = arith.constant 0 : index
    %59 = vector.load %arg10[%c92, %c0_62] : memref<108x1024xf32, #tpu.memory_space<vmem>>, vector<4x1024xf32>
    tpu.vector_store %arg10[%c92, %c0_62], %58 {strides = array<i32>} : memref<108x1024xf32, #tpu.memory_space<vmem>>, vector<4x1024xf32>,
    %c0_63 = arith.constant 0 : index
    %c237 = arith.constant 237 : index
    %60 = vector.load %arg9[%c0_63, %c237] : memref<4x1280xf32, #tpu.memory_space<vmem>>, vector<4x1024xf32>
    %c96 = arith.constant 96 : index
    %c0_64 = arith.constant 0 : index
    %61 = vector.load %arg10[%c96, %c0_64] : memref<108x1024xf32, #tpu.memory_space<vmem>>, vector<4x1024xf32>
    tpu.vector_store %arg10[%c96, %c0_64], %60 {strides = array<i32>} : memref<108x1024xf32, #tpu.memory_space<vmem>>, vector<4x1024xf32>,
    %c0_65 = arith.constant 0 : index
    %c238 = arith.constant 238 : index
    %62 = vector.load %arg9[%c0_65, %c238] : memref<4x1280xf32, #tpu.memory_space<vmem>>, vector<4x1024xf32>
    %c100 = arith.constant 100 : index
    %c0_66 = arith.constant 0 : index
    %63 = vector.load %arg10[%c100, %c0_66] : memref<108x1024xf32, #tpu.memory_space<vmem>>, vector<4x1024xf32>
    tpu.vector_store %arg10[%c100, %c0_66], %62 {strides = array<i32>} : memref<108x1024xf32, #tpu.memory_space<vmem>>, vector<4x1024xf32>,
    %c0_67 = arith.constant 0 : index
    %c239 = arith.constant 239 : index
    %64 = vector.load %arg9[%c0_67, %c239] : memref<4x1280xf32, #tpu.memory_space<vmem>>, vector<4x1024xf32>
    %c104 = arith.constant 104 : index
    %c0_68 = arith.constant 0 : index
    %65 = vector.load %arg10[%c104, %c0_68] : memref<108x1024xf32, #tpu.memory_space<vmem>>, vector<4x1024xf32>
    tpu.vector_store %arg10[%c104, %c0_68], %64 {strides = array<i32>} : memref<108x1024xf32, #tpu.memory_space<vmem>>, vector<4x1024xf32>,
    %c0_69 = arith.constant 0 : index
    %c0_70 = arith.constant 0 : index
    %66 = vector.load %arg6[%c0_69, %c0_70] : memref<4x108xf32, #tpu.memory_space<vmem>>, vector<4x108xf32>
    %c0_71 = arith.constant 0 : index
    %c0_72 = arith.constant 0 : index
    %67 = vector.load %arg10[%c0_71, %c0_72] : memref<108x1024xf32, #tpu.memory_space<vmem>>, vector<108x1024xf32>
    %cst = arith.constant dense<0.000000e+00> : vector<4x1024xf32>
    %68 = tpu.matmul %66, %67, %cst {dimension_numbers = #tpu.dot_dimension_numbers<[1], [0], [0], [1], [0, 0, 1, 1], [], []>} : vector<4x108xf32>, vector<108x1024xf32>, vector<4x1024xf32> -> vector<4x1024xf32>
    %c0_73 = arith.constant 0 : index
    %c0_74 = arith.constant 0 : index
    %69 = vector.load %arg7[%c0_73, %c0_74] : memref<4x1xf32, #tpu.memory_space<vmem>>, vector<4x1xf32>
    %70 = vector.broadcast %69 : vector<4x1xf32> to vector<4x1024xf32>
    %71 = arith.addf %68, %70 : vector<4x1024xf32>
    %cst_75 = arith.constant 0.000000e+00 : f32
    %72 = vector.broadcast %cst_75 : f32 to vector<4x1024xf32>
    %73 = arith.maximumf %71, %72 : vector<4x1024xf32>
    %c0_76 = arith.constant 0 : index
    %c0_77 = arith.constant 0 : index
    %74 = vector.load %arg5[%c0_76, %c0_77] : memref<1x1024xf32, #tpu.memory_space<vmem>>, vector<1x1024xf32>
    %75 = vector.broadcast %74 : vector<1x1024xf32> to vector<4x1024xf32>
    %76 = arith.mulf %73, %75 : vector<4x1024xf32>
    %77 = arith.truncf %76 : vector<4x1024xf32> to vector<4x1024xbf16>
    %c0_78 = arith.constant 0 : index
    %c0_79 = arith.constant 0 : index
    %c0_80 = arith.constant 0 : index
    %78 = vector.load %arg8[%c0_78, %c0_79, %c0_80] : memref<1x4x1024xbf16, #tpu.memory_space<vmem>>, vector<1x4x1024xbf16>
    %79 = vector.shape_cast %78 : vector<1x4x1024xbf16> to vector<4x1024xbf16>
    %80 = vector.shape_cast %77 : vector<4x1024xbf16> to vector<1x4x1024xbf16>
    tpu.vector_store %arg8[%c0_78, %c0_79, %c0_80], %80 {strides = array<i32>} : memref<1x4x1024xbf16, #tpu.memory_space<vmem>>, vector<1x4x1024xbf16>,
    return
  }
  func.func @transform_0(%arg0: i32, %arg1: i32) -> (i32, i32, i32) {
    %c1_i32 = arith.constant 1 : i32
    %0 = arith.addi %arg1, %c1_i32 : i32
    %c8_i32 = arith.constant 8 : i32
    %1 = arith.muli %0, %c8_i32 : i32
    %c1_i32_0 = arith.constant 1 : i32
    %2 = arith.subi %1, %c1_i32_0 : i32
    %c0_i32 = arith.constant 0 : i32
    %c0_i32_1 = arith.constant 0 : i32
    return %arg0, %c0_i32, %2 : i32, i32, i32
  }
  func.func @transform_1(%arg0: i32, %arg1: i32) -> (i32, i32, i32) {
    %c1_i32 = arith.constant 1 : i32
    %0 = arith.addi %arg1, %c1_i32 : i32
    %c0_i32 = arith.constant 0 : i32
    %c0_i32_0 = arith.constant 0 : i32
    return %arg0, %c0_i32, %0 : i32, i32, i32
  }
  func.func @transform_2(%arg0: i32, %arg1: i32) -> (i32, i32, i32) {
    %c2_i32 = arith.constant 2 : i32
    %0 = arith.addi %arg1, %c2_i32 : i32
    %c8_i32 = arith.constant 8 : i32
    %1 = arith.muli %0, %c8_i32 : i32
    %c0_i32 = arith.constant 0 : i32
    %c0_i32_0 = arith.constant 0 : i32
    return %arg0, %c0_i32, %1 : i32, i32, i32
  }
  func.func @transform_3(%arg0: i32, %arg1: i32) -> (i32, i32) {
    %c0_i32 = arith.constant 0 : i32
    %c0_i32_0 = arith.constant 0 : i32
    return %c0_i32, %arg1 : i32, i32
  }
  func.func @transform_4(%arg0: i32, %arg1: i32) -> (i32, i32) {
    %c0_i32 = arith.constant 0 : i32
    %c0_i32_0 = arith.constant 0 : i32
    %c0_i32_1 = arith.constant 0 : i32
    return %c0_i32, %c0_i32_0 : i32, i32
  }
  func.func @transform_5(%arg0: i32, %arg1: i32) -> (i32, i32) {
    %c0_i32 = arith.constant 0 : i32
    %c0_i32_0 = arith.constant 0 : i32
    %c0_i32_1 = arith.constant 0 : i32
    return %c0_i32, %c0_i32_0 : i32, i32
  }
  func.func @transform_6(%arg0: i32, %arg1: i32) -> (i32, i32, i32) {
    %c1_i32 = arith.constant 1 : i32
    %0 = arith.addi %arg1, %c1_i32 : i32
    %c0_i32 = arith.constant 0 : i32
    %c0_i32_0 = arith.constant 0 : i32
    return %arg0, %c0_i32, %0 : i32, i32, i32
  }
}

module attributes {stable_mosaic.version = 11 : i64} {
  func.func @_conv_bn_kernel(%arg0: i32, %arg1: i32, %arg2: memref<1x4x128xbf16, #tpu.memory_space<vmem>>, %arg3: memref<1x4x1024xbf16, #tpu.memory_space<vmem>>, %arg4: memref<1x4x128xbf16, #tpu.memory_space<vmem>>, %arg5: memref<1x4x1024xbf16, #tpu.memory_space<vmem>>, %arg6: memref<4x108xf32, #tpu.memory_space<vmem>>, %arg7: memref<4x1xf32, #tpu.memory_space<vmem>>, %arg8: memref<1x4x1024xf32, #tpu.memory_space<vmem>>, %arg9: memref<4x1280xf32, #tpu.memory_space<vmem>>, %arg10: memref<108x1024xf32, #tpu.memory_space<vmem>>) attributes {dimension_semantics = [#tpu.dimension_semantics<parallel>, #tpu.dimension_semantics<parallel>], iteration_bounds = array<i64: 2, 1>, scalar_prefetch = 0 : i64, scratch_operands = 2 : i64, tpu.core_type = #tpu.core_type<tc>, window_params = [{transform_indices = @transform_0, window_bounds = array<i64: 1, 4, 128>}, {transform_indices = @transform_1, window_bounds = array<i64: 1, 4, 1024>}, {transform_indices = @transform_2, window_bounds = array<i64: 1, 4, 128>}, {transform_indices = @transform_3, window_bounds = array<i64: 1, 4, 1024>}, {pipeline_mode = #tpu.pipeline_mode<synchronous>, transform_indices = @transform_4, window_bounds = array<i64: 4, 108>}, {pipeline_mode = #tpu.pipeline_mode<synchronous>, transform_indices = @transform_5, window_bounds = array<i64: 4, 1>}, {transform_indices = @transform_6, window_bounds = array<i64: 1, 4, 1024>}]} {
    %c0 = arith.constant 0 : index
    %c0_0 = arith.constant 0 : index
    %c0_1 = arith.constant 0 : index
    %0 = vector.load %arg2[%c0, %c0_0, %c0_1] : memref<1x4x128xbf16, #tpu.memory_space<vmem>>, vector<1x4x128xbf16>
    %1 = vector.shape_cast %0 : vector<1x4x128xbf16> to vector<4x128xbf16>
    %2 = arith.extf %1 : vector<4x128xbf16> to vector<4x128xf32>
    %c0_2 = arith.constant 0 : index
    %c0_3 = arith.constant 0 : index
    %3 = vector.load %arg9[%c0_2, %c0_3] : memref<4x1280xf32, #tpu.memory_space<vmem>>, vector<4x128xf32>
    tpu.vector_store %arg9[%c0_2, %c0_3], %2 {strides = array<i32>} : memref<4x1280xf32, #tpu.memory_space<vmem>>, vector<4x128xf32>,
    %c0_4 = arith.constant 0 : index
    %c0_5 = arith.constant 0 : index
    %c0_6 = arith.constant 0 : index
    %4 = vector.load %arg3[%c0_4, %c0_5, %c0_6] : memref<1x4x1024xbf16, #tpu.memory_space<vmem>>, vector<1x4x1024xbf16>
    %5 = vector.shape_cast %4 : vector<1x4x1024xbf16> to vector<4x1024xbf16>
    %6 = arith.extf %5 : vector<4x1024xbf16> to vector<4x1024xf32>
    %c0_7 = arith.constant 0 : index
    %c128 = arith.constant 128 : index
    %7 = vector.load %arg9[%c0_7, %c128] : memref<4x1280xf32, #tpu.memory_space<vmem>>, vector<4x1024xf32>
    tpu.vector_store %arg9[%c0_7, %c128], %6 {strides = array<i32>} : memref<4x1280xf32, #tpu.memory_space<vmem>>, vector<4x1024xf32>,
    %c0_8 = arith.constant 0 : index
    %c0_9 = arith.constant 0 : index
    %c0_10 = arith.constant 0 : index
    %8 = vector.load %arg4[%c0_8, %c0_9, %c0_10] : memref<1x4x128xbf16, #tpu.memory_space<vmem>>, vector<1x4x128xbf16>
    %9 = vector.shape_cast %8 : vector<1x4x128xbf16> to vector<4x128xbf16>
    %10 = arith.extf %9 : vector<4x128xbf16> to vector<4x128xf32>
    %c0_11 = arith.constant 0 : index
    %c1152 = arith.constant 1152 : index
    %11 = vector.load %arg9[%c0_11, %c1152] : memref<4x1280xf32, #tpu.memory_space<vmem>>, vector<4x128xf32>
    tpu.vector_store %arg9[%c0_11, %c1152], %10 {strides = array<i32>} : memref<4x1280xf32, #tpu.memory_space<vmem>>, vector<4x128xf32>,
    %c0_12 = arith.constant 0 : index
    %c17 = arith.constant 17 : index
    %12 = vector.load %arg9[%c0_12, %c17] : memref<4x1280xf32, #tpu.memory_space<vmem>>, vector<4x1024xf32>
    %c0_13 = arith.constant 0 : index
    %c0_14 = arith.constant 0 : index
    %13 = vector.load %arg10[%c0_13, %c0_14] : memref<108x1024xf32, #tpu.memory_space<vmem>>, vector<4x1024xf32>
    tpu.vector_store %arg10[%c0_13, %c0_14], %12 {strides = array<i32>} : memref<108x1024xf32, #tpu.memory_space<vmem>>, vector<4x1024xf32>,
    %c0_15 = arith.constant 0 : index
    %c18 = arith.constant 18 : index
    %14 = vector.load %arg9[%c0_15, %c18] : memref<4x1280xf32, #tpu.memory_space<vmem>>, vector<4x1024xf32>
    %c4 = arith.constant 4 : index
    %c0_16 = arith.constant 0 : index
    %15 = vector.load %arg10[%c4, %c0_16] : memref<108x1024xf32, #tpu.memory_space<vmem>>, vector<4x1024xf32>
    tpu.vector_store %arg10[%c4, %c0_16], %14 {strides = array<i32>} : memref<108x1024xf32, #tpu.memory_space<vmem>>, vector<4x1024xf32>,
    %c0_17 = arith.constant 0 : index
    %c19 = arith.constant 19 : index
    %16 = vector.load %arg9[%c0_17, %c19] : memref<4x1280xf32, #tpu.memory_space<vmem>>, vector<4x1024xf32>
    %c8 = arith.constant 8 : index
    %c0_18 = arith.constant 0 : index
    %17 = vector.load %arg10[%c8, %c0_18] : memref<108x1024xf32, #tpu.memory_space<vmem>>, vector<4x1024xf32>
    tpu.vector_store %arg10[%c8, %c0_18], %16 {strides = array<i32>} : memref<108x1024xf32, #tpu.memory_space<vmem>>, vector<4x1024xf32>,
    %c0_19 = arith.constant 0 : index
    %c27 = arith.constant 27 : index
    %18 = vector.load %arg9[%c0_19, %c27] : memref<4x1280xf32, #tpu.memory_space<vmem>>, vector<4x1024xf32>
    %c12 = arith.constant 12 : index
    %c0_20 = arith.constant 0 : index
    %19 = vector.load %arg10[%c12, %c0_20] : memref<108x1024xf32, #tpu.memory_space<vmem>>, vector<4x1024xf32>
    tpu.vector_store %arg10[%c12, %c0_20], %18 {strides = array<i32>} : memref<108x1024xf32, #tpu.memory_space<vmem>>, vector<4x1024xf32>,
    %c0_21 = arith.constant 0 : index
    %c28 = arith.constant 28 : index
    %20 = vector.load %arg9[%c0_21, %c28] : memref<4x1280xf32, #tpu.memory_space<vmem>>, vector<4x1024xf32>
    %c16 = arith.constant 16 : index
    %c0_22 = arith.constant 0 : index
    %21 = vector.load %arg10[%c16, %c0_22] : memref<108x1024xf32, #tpu.memory_space<vmem>>, vector<4x1024xf32>
    tpu.vector_store %arg10[%c16, %c0_22], %20 {strides = array<i32>} : memref<108x1024xf32, #tpu.memory_space<vmem>>, vector<4x1024xf32>,
    %c0_23 = arith.constant 0 : index
    %c29 = arith.constant 29 : index
    %22 = vector.load %arg9[%c0_23, %c29] : memref<4x1280xf32, #tpu.memory_space<vmem>>, vector<4x1024xf32>
    %c20 = arith.constant 20 : index
    %c0_24 = arith.constant 0 : index
    %23 = vector.load %arg10[%c20, %c0_24] : memref<108x1024xf32, #tpu.memory_space<vmem>>, vector<4x1024xf32>
    tpu.vector_store %arg10[%c20, %c0_24], %22 {strides = array<i32>} : memref<108x1024xf32, #tpu.memory_space<vmem>>, vector<4x1024xf32>,
    %c0_25 = arith.constant 0 : index
    %c37 = arith.constant 37 : index
    %24 = vector.load %arg9[%c0_25, %c37] : memref<4x1280xf32, #tpu.memory_space<vmem>>, vector<4x1024xf32>
    %c24 = arith.constant 24 : index
    %c0_26 = arith.constant 0 : index
    %25 = vector.load %arg10[%c24, %c0_26] : memref<108x1024xf32, #tpu.memory_space<vmem>>, vector<4x1024xf32>
    tpu.vector_store %arg10[%c24, %c0_26], %24 {strides = array<i32>} : memref<108x1024xf32, #tpu.memory_space<vmem>>, vector<4x1024xf32>,
    %c0_27 = arith.constant 0 : index
    %c38 = arith.constant 38 : index
    %26 = vector.load %arg9[%c0_27, %c38] : memref<4x1280xf32, #tpu.memory_space<vmem>>, vector<4x1024xf32>
    %c28_28 = arith.constant 28 : index
    %c0_29 = arith.constant 0 : index
    %27 = vector.load %arg10[%c28_28, %c0_29] : memref<108x1024xf32, #tpu.memory_space<vmem>>, vector<4x1024xf32>
    tpu.vector_store %arg10[%c28_28, %c0_29], %26 {strides = array<i32>} : memref<108x1024xf32, #tpu.memory_space<vmem>>, vector<4x1024xf32>,
    %c0_30 = arith.constant 0 : index
    %c39 = arith.constant 39 : index
    %28 = vector.load %arg9[%c0_30, %c39] : memref<4x1280xf32, #tpu.memory_space<vmem>>, vector<4x1024xf32>
    %c32 = arith.constant 32 : index
    %c0_31 = arith.constant 0 : index
    %29 = vector.load %arg10[%c32, %c0_31] : memref<108x1024xf32, #tpu.memory_space<vmem>>, vector<4x1024xf32>
    tpu.vector_store %arg10[%c32, %c0_31], %28 {strides = array<i32>} : memref<108x1024xf32, #tpu.memory_space<vmem>>, vector<4x1024xf32>,
    %c0_32 = arith.constant 0 : index
    %c117 = arith.constant 117 : index
    %30 = vector.load %arg9[%c0_32, %c117] : memref<4x1280xf32, #tpu.memory_space<vmem>>, vector<4x1024xf32>
    %c36 = arith.constant 36 : index
    %c0_33 = arith.constant 0 : index
    %31 = vector.load %arg10[%c36, %c0_33] : memref<108x1024xf32, #tpu.memory_space<vmem>>, vector<4x1024xf32>
    tpu.vector_store %arg10[%c36, %c0_33], %30 {strides = array<i32>} : memref<108x1024xf32, #tpu.memory_space<vmem>>, vector<4x1024xf32>,
    %c0_34 = arith.constant 0 : index
    %c118 = arith.constant 118 : index
    %32 = vector.load %arg9[%c0_34, %c118] : memref<4x1280xf32, #tpu.memory_space<vmem>>, vector<4x1024xf32>
    %c40 = arith.constant 40 : index
    %c0_35 = arith.constant 0 : index
    %33 = vector.load %arg10[%c40, %c0_35] : memref<108x1024xf32, #tpu.memory_space<vmem>>, vector<4x1024xf32>
    tpu.vector_store %arg10[%c40, %c0_35], %32 {strides = array<i32>} : memref<108x1024xf32, #tpu.memory_space<vmem>>, vector<4x1024xf32>,
    %c0_36 = arith.constant 0 : index
    %c119 = arith.constant 119 : index
    %34 = vector.load %arg9[%c0_36, %c119] : memref<4x1280xf32, #tpu.memory_space<vmem>>, vector<4x1024xf32>
    %c44 = arith.constant 44 : index
    %c0_37 = arith.constant 0 : index
    %35 = vector.load %arg10[%c44, %c0_37] : memref<108x1024xf32, #tpu.memory_space<vmem>>, vector<4x1024xf32>
    tpu.vector_store %arg10[%c44, %c0_37], %34 {strides = array<i32>} : memref<108x1024xf32, #tpu.memory_space<vmem>>, vector<4x1024xf32>,
    %c0_38 = arith.constant 0 : index
    %c127 = arith.constant 127 : index
    %36 = vector.load %arg9[%c0_38, %c127] : memref<4x1280xf32, #tpu.memory_space<vmem>>, vector<4x1024xf32>
    %c48 = arith.constant 48 : index
    %c0_39 = arith.constant 0 : index
    %37 = vector.load %arg10[%c48, %c0_39] : memref<108x1024xf32, #tpu.memory_space<vmem>>, vector<4x1024xf32>
    tpu.vector_store %arg10[%c48, %c0_39], %36 {strides = array<i32>} : memref<108x1024xf32, #tpu.memory_space<vmem>>, vector<4x1024xf32>,
    %c0_40 = arith.constant 0 : index
    %c128_41 = arith.constant 128 : index
    %38 = vector.load %arg9[%c0_40, %c128_41] : memref<4x1280xf32, #tpu.memory_space<vmem>>, vector<4x1024xf32>
    %c52 = arith.constant 52 : index
    %c0_42 = arith.constant 0 : index
    %39 = vector.load %arg10[%c52, %c0_42] : memref<108x1024xf32, #tpu.memory_space<vmem>>, vector<4x1024xf32>
    tpu.vector_store %arg10[%c52, %c0_42], %38 {strides = array<i32>} : memref<108x1024xf32, #tpu.memory_space<vmem>>, vector<4x1024xf32>,
    %c0_43 = arith.constant 0 : index
    %c129 = arith.constant 129 : index
    %40 = vector.load %arg9[%c0_43, %c129] : memref<4x1280xf32, #tpu.memory_space<vmem>>, vector<4x1024xf32>
    %c56 = arith.constant 56 : index
    %c0_44 = arith.constant 0 : index
    %41 = vector.load %arg10[%c56, %c0_44] : memref<108x1024xf32, #tpu.memory_space<vmem>>, vector<4x1024xf32>
    tpu.vector_store %arg10[%c56, %c0_44], %40 {strides = array<i32>} : memref<108x1024xf32, #tpu.memory_space<vmem>>, vector<4x1024xf32>,
    %c0_45 = arith.constant 0 : index
    %c137 = arith.constant 137 : index
    %42 = vector.load %arg9[%c0_45, %c137] : memref<4x1280xf32, #tpu.memory_space<vmem>>, vector<4x1024xf32>
    %c60 = arith.constant 60 : index
    %c0_46 = arith.constant 0 : index
    %43 = vector.load %arg10[%c60, %c0_46] : memref<108x1024xf32, #tpu.memory_space<vmem>>, vector<4x1024xf32>
    tpu.vector_store %arg10[%c60, %c0_46], %42 {strides = array<i32>} : memref<108x1024xf32, #tpu.memory_space<vmem>>, vector<4x1024xf32>,
    %c0_47 = arith.constant 0 : index
    %c138 = arith.constant 138 : index
    %44 = vector.load %arg9[%c0_47, %c138] : memref<4x1280xf32, #tpu.memory_space<vmem>>, vector<4x1024xf32>
    %c64 = arith.constant 64 : index
    %c0_48 = arith.constant 0 : index
    %45 = vector.load %arg10[%c64, %c0_48] : memref<108x1024xf32, #tpu.memory_space<vmem>>, vector<4x1024xf32>
    tpu.vector_store %arg10[%c64, %c0_48], %44 {strides = array<i32>} : memref<108x1024xf32, #tpu.memory_space<vmem>>, vector<4x1024xf32>,
    %c0_49 = arith.constant 0 : index
    %c139 = arith.constant 139 : index
    %46 = vector.load %arg9[%c0_49, %c139] : memref<4x1280xf32, #tpu.memory_space<vmem>>, vector<4x1024xf32>
    %c68 = arith.constant 68 : index
    %c0_50 = arith.constant 0 : index
    %47 = vector.load %arg10[%c68, %c0_50] : memref<108x1024xf32, #tpu.memory_space<vmem>>, vector<4x1024xf32>
    tpu.vector_store %arg10[%c68, %c0_50], %46 {strides = array<i32>} : memref<108x1024xf32, #tpu.memory_space<vmem>>, vector<4x1024xf32>,
    %c0_51 = arith.constant 0 : index
    %c217 = arith.constant 217 : index
    %48 = vector.load %arg9[%c0_51, %c217] : memref<4x1280xf32, #tpu.memory_space<vmem>>, vector<4x1024xf32>
    %c72 = arith.constant 72 : index
    %c0_52 = arith.constant 0 : index
    %49 = vector.load %arg10[%c72, %c0_52] : memref<108x1024xf32, #tpu.memory_space<vmem>>, vector<4x1024xf32>
    tpu.vector_store %arg10[%c72, %c0_52], %48 {strides = array<i32>} : memref<108x1024xf32, #tpu.memory_space<vmem>>, vector<4x1024xf32>,
    %c0_53 = arith.constant 0 : index
    %c218 = arith.constant 218 : index
    %50 = vector.load %arg9[%c0_53, %c218] : memref<4x1280xf32, #tpu.memory_space<vmem>>, vector<4x1024xf32>
    %c76 = arith.constant 76 : index
    %c0_54 = arith.constant 0 : index
    %51 = vector.load %arg10[%c76, %c0_54] : memref<108x1024xf32, #tpu.memory_space<vmem>>, vector<4x1024xf32>
    tpu.vector_store %arg10[%c76, %c0_54], %50 {strides = array<i32>} : memref<108x1024xf32, #tpu.memory_space<vmem>>, vector<4x1024xf32>,
    %c0_55 = arith.constant 0 : index
    %c219 = arith.constant 219 : index
    %52 = vector.load %arg9[%c0_55, %c219] : memref<4x1280xf32, #tpu.memory_space<vmem>>, vector<4x1024xf32>
    %c80 = arith.constant 80 : index
    %c0_56 = arith.constant 0 : index
    %53 = vector.load %arg10[%c80, %c0_56] : memref<108x1024xf32, #tpu.memory_space<vmem>>, vector<4x1024xf32>
    tpu.vector_store %arg10[%c80, %c0_56], %52 {strides = array<i32>} : memref<108x1024xf32, #tpu.memory_space<vmem>>, vector<4x1024xf32>,
    %c0_57 = arith.constant 0 : index
    %c227 = arith.constant 227 : index
    %54 = vector.load %arg9[%c0_57, %c227] : memref<4x1280xf32, #tpu.memory_space<vmem>>, vector<4x1024xf32>
    %c84 = arith.constant 84 : index
    %c0_58 = arith.constant 0 : index
    %55 = vector.load %arg10[%c84, %c0_58] : memref<108x1024xf32, #tpu.memory_space<vmem>>, vector<4x1024xf32>
    tpu.vector_store %arg10[%c84, %c0_58], %54 {strides = array<i32>} : memref<108x1024xf32, #tpu.memory_space<vmem>>, vector<4x1024xf32>,
    %c0_59 = arith.constant 0 : index
    %c228 = arith.constant 228 : index
    %56 = vector.load %arg9[%c0_59, %c228] : memref<4x1280xf32, #tpu.memory_space<vmem>>, vector<4x1024xf32>
    %c88 = arith.constant 88 : index
    %c0_60 = arith.constant 0 : index
    %57 = vector.load %arg10[%c88, %c0_60] : memref<108x1024xf32, #tpu.memory_space<vmem>>, vector<4x1024xf32>
    tpu.vector_store %arg10[%c88, %c0_60], %56 {strides = array<i32>} : memref<108x1024xf32, #tpu.memory_space<vmem>>, vector<4x1024xf32>,
    %c0_61 = arith.constant 0 : index
    %c229 = arith.constant 229 : index
    %58 = vector.load %arg9[%c0_61, %c229] : memref<4x1280xf32, #tpu.memory_space<vmem>>, vector<4x1024xf32>
    %c92 = arith.constant 92 : index
    %c0_62 = arith.constant 0 : index
    %59 = vector.load %arg10[%c92, %c0_62] : memref<108x1024xf32, #tpu.memory_space<vmem>>, vector<4x1024xf32>
    tpu.vector_store %arg10[%c92, %c0_62], %58 {strides = array<i32>} : memref<108x1024xf32, #tpu.memory_space<vmem>>, vector<4x1024xf32>,
    %c0_63 = arith.constant 0 : index
    %c237 = arith.constant 237 : index
    %60 = vector.load %arg9[%c0_63, %c237] : memref<4x1280xf32, #tpu.memory_space<vmem>>, vector<4x1024xf32>
    %c96 = arith.constant 96 : index
    %c0_64 = arith.constant 0 : index
    %61 = vector.load %arg10[%c96, %c0_64] : memref<108x1024xf32, #tpu.memory_space<vmem>>, vector<4x1024xf32>
    tpu.vector_store %arg10[%c96, %c0_64], %60 {strides = array<i32>} : memref<108x1024xf32, #tpu.memory_space<vmem>>, vector<4x1024xf32>,
    %c0_65 = arith.constant 0 : index
    %c238 = arith.constant 238 : index
    %62 = vector.load %arg9[%c0_65, %c238] : memref<4x1280xf32, #tpu.memory_space<vmem>>, vector<4x1024xf32>
    %c100 = arith.constant 100 : index
    %c0_66 = arith.constant 0 : index
    %63 = vector.load %arg10[%c100, %c0_66] : memref<108x1024xf32, #tpu.memory_space<vmem>>, vector<4x1024xf32>
    tpu.vector_store %arg10[%c100, %c0_66], %62 {strides = array<i32>} : memref<108x1024xf32, #tpu.memory_space<vmem>>, vector<4x1024xf32>,
    %c0_67 = arith.constant 0 : index
    %c239 = arith.constant 239 : index
    %64 = vector.load %arg9[%c0_67, %c239] : memref<4x1280xf32, #tpu.memory_space<vmem>>, vector<4x1024xf32>
    %c104 = arith.constant 104 : index
    %c0_68 = arith.constant 0 : index
    %65 = vector.load %arg10[%c104, %c0_68] : memref<108x1024xf32, #tpu.memory_space<vmem>>, vector<4x1024xf32>
    tpu.vector_store %arg10[%c104, %c0_68], %64 {strides = array<i32>} : memref<108x1024xf32, #tpu.memory_space<vmem>>, vector<4x1024xf32>,
    %c0_69 = arith.constant 0 : index
    %c0_70 = arith.constant 0 : index
    %66 = vector.load %arg6[%c0_69, %c0_70] : memref<4x108xf32, #tpu.memory_space<vmem>>, vector<4x108xf32>
    %c0_71 = arith.constant 0 : index
    %c0_72 = arith.constant 0 : index
    %67 = vector.load %arg10[%c0_71, %c0_72] : memref<108x1024xf32, #tpu.memory_space<vmem>>, vector<108x1024xf32>
    %cst = arith.constant dense<0.000000e+00> : vector<4x1024xf32>
    %68 = tpu.matmul %66, %67, %cst {dimension_numbers = #tpu.dot_dimension_numbers<[1], [0], [0], [1], [0, 0, 1, 1], [], []>} : vector<4x108xf32>, vector<108x1024xf32>, vector<4x1024xf32> -> vector<4x1024xf32>
    %c0_73 = arith.constant 0 : index
    %c0_74 = arith.constant 0 : index
    %69 = vector.load %arg7[%c0_73, %c0_74] : memref<4x1xf32, #tpu.memory_space<vmem>>, vector<4x1xf32>
    %70 = vector.broadcast %69 : vector<4x1xf32> to vector<4x1024xf32>
    %71 = arith.addf %68, %70 : vector<4x1024xf32>
    %c0_75 = arith.constant 0 : index
    %c0_76 = arith.constant 0 : index
    %c0_77 = arith.constant 0 : index
    %72 = vector.load %arg5[%c0_75, %c0_76, %c0_77] : memref<1x4x1024xbf16, #tpu.memory_space<vmem>>, vector<1x4x1024xbf16>
    %73 = vector.shape_cast %72 : vector<1x4x1024xbf16> to vector<4x1024xbf16>
    %74 = arith.extf %73 : vector<4x1024xbf16> to vector<4x1024xf32>
    %75 = arith.addf %71, %74 : vector<4x1024xf32>
    %cst_78 = arith.constant 0.000000e+00 : f32
    %76 = vector.broadcast %cst_78 : f32 to vector<4x1024xf32>
    %77 = arith.maximumf %75, %76 : vector<4x1024xf32>
    %c0_79 = arith.constant 0 : index
    %c0_80 = arith.constant 0 : index
    %c0_81 = arith.constant 0 : index
    %78 = vector.load %arg8[%c0_79, %c0_80, %c0_81] : memref<1x4x1024xf32, #tpu.memory_space<vmem>>, vector<1x4x1024xf32>
    %79 = vector.shape_cast %78 : vector<1x4x1024xf32> to vector<4x1024xf32>
    %80 = vector.shape_cast %77 : vector<4x1024xf32> to vector<1x4x1024xf32>
    tpu.vector_store %arg8[%c0_79, %c0_80, %c0_81], %80 {strides = array<i32>} : memref<1x4x1024xf32, #tpu.memory_space<vmem>>, vector<1x4x1024xf32>,
    return
  }
  func.func @transform_0(%arg0: i32, %arg1: i32) -> (i32, i32, i32) {
    %c1_i32 = arith.constant 1 : i32
    %0 = arith.addi %arg1, %c1_i32 : i32
    %c8_i32 = arith.constant 8 : i32
    %1 = arith.muli %0, %c8_i32 : i32
    %c1_i32_0 = arith.constant 1 : i32
    %2 = arith.subi %1, %c1_i32_0 : i32
    %c0_i32 = arith.constant 0 : i32
    %c0_i32_1 = arith.constant 0 : i32
    return %arg0, %c0_i32, %2 : i32, i32, i32
  }
  func.func @transform_1(%arg0: i32, %arg1: i32) -> (i32, i32, i32) {
    %c1_i32 = arith.constant 1 : i32
    %0 = arith.addi %arg1, %c1_i32 : i32
    %c0_i32 = arith.constant 0 : i32
    %c0_i32_0 = arith.constant 0 : i32
    return %arg0, %c0_i32, %0 : i32, i32, i32
  }
  func.func @transform_2(%arg0: i32, %arg1: i32) -> (i32, i32, i32) {
    %c2_i32 = arith.constant 2 : i32
    %0 = arith.addi %arg1, %c2_i32 : i32
    %c8_i32 = arith.constant 8 : i32
    %1 = arith.muli %0, %c8_i32 : i32
    %c0_i32 = arith.constant 0 : i32
    %c0_i32_0 = arith.constant 0 : i32
    return %arg0, %c0_i32, %1 : i32, i32, i32
  }
  func.func @transform_3(%arg0: i32, %arg1: i32) -> (i32, i32, i32) {
    %c1_i32 = arith.constant 1 : i32
    %0 = arith.addi %arg1, %c1_i32 : i32
    %c0_i32 = arith.constant 0 : i32
    %c0_i32_0 = arith.constant 0 : i32
    return %arg0, %c0_i32, %0 : i32, i32, i32
  }
  func.func @transform_4(%arg0: i32, %arg1: i32) -> (i32, i32) {
    %c0_i32 = arith.constant 0 : i32
    %c0_i32_0 = arith.constant 0 : i32
    %c0_i32_1 = arith.constant 0 : i32
    return %c0_i32, %c0_i32_0 : i32, i32
  }
  func.func @transform_5(%arg0: i32, %arg1: i32) -> (i32, i32) {
    %c0_i32 = arith.constant 0 : i32
    %c0_i32_0 = arith.constant 0 : i32
    %c0_i32_1 = arith.constant 0 : i32
    return %c0_i32, %c0_i32_0 : i32, i32
  }
  func.func @transform_6(%arg0: i32, %arg1: i32) -> (i32, i32, i32) {
    %c1_i32 = arith.constant 1 : i32
    %0 = arith.addi %arg1, %c1_i32 : i32
    %c0_i32 = arith.constant 0 : i32
    %c0_i32_0 = arith.constant 0 : i32
    return %arg0, %c0_i32, %0 : i32, i32, i32
  }
}

</mosaic_0001>

<llo_original>
// kernel: simple_rb_forward.2
$region0: #{simple_rb_forward.2}
  #allocation0 [shape = 'u32[]', space=smem, size = 0x4, offset = 0x4, fixed_abs, tag = 'smem constant byte address 0x4 - core index']
  #allocation1 [shape = 'u32[144,128]{1,0:T(1,128)}', space=vmem, size = 0x12000, scoped, tag = 'internal scratch']
  #allocation2 [shape = 'f32[4,1280]{1,0:T(4,128)}', space=vmem, size = 0x5000, scoped, tag = 'scratch operand']
  #allocation3 [shape = 'f32[108,1024]{1,0:T(8,128)}', space=vmem, size = 0x70000, scoped, tag = 'scratch operand']
  %s0 = inlined_call_operand.vmem [shape: bf16[2,4,3072], index: 0, kind: input, shape index: {}, may-alias: {0,1,2}]
  %s1 = inlined_call_operand.vmem [shape: bf16[2,4,3072], index: 1, kind: input, shape index: {}, may-alias: {0,1,2}]
  %s2 = inlined_call_operand.vmem [shape: bf16[2,4,3072], index: 2, kind: input, shape index: {}, may-alias: {0,1,2}]
  %s3 = inlined_call_operand.vmem [shape: f32[1,1024], index: 3, kind: input, shape index: {}]
  %s4 = inlined_call_operand.vmem [shape: f32[4,108], index: 4, kind: input, shape index: {}]
  %s5 = inlined_call_operand.vmem [shape: f32[4,1], index: 5, kind: input, shape index: {}]
  %s6 = inlined_call_operand.vmem [shape: bf16[2,4,3072], index: 6, kind: output, shape index: {}]
  %s7 = sld [smem:[#allocation0]]
  $region57: #{simple_rb_forward.2} parent=0
    _
  %s9 = ssub.s32 1, %s7
  %s10 = scalar_select 0, %s9, %s7
  loop: start=0, step=1, limit=4
  $region2: #{simple_rb_forward.2} parent=0 // loop_pre_header
    _
  $region3: #{simple_rb_forward.2} parent=0 // loop_header
    %s12 = sphi 0, %s16
    %p13 = scmp.ge.s32.totalorder %s12, 4
    %s19 = sphi 0, %s31
    %s20 = sphi 0, %s27
    %s21 = sphi 0, %s19
    %s22 = sphi 0, %s20
    %s23 = sphi 0, %s21
    %s24 = sphi 0, %s22
    %s42 = sphi 0, %s44
    %s45 = sphi 0, %s42
    %s46 = sphi 0, %s45
    %s62 = sphi 0, %s46
    %s72 = sphi 0, %s74
    %s75 = sphi 0, %s72
    %s76 = sphi 0, %s75
    %s92 = sphi 0, %s76
    %s104 = sphi 0, %s106
    %s107 = sphi 0, %s104
    %s108 = sphi 0, %s107
    %s124 = sphi 0, %s108
    %s130 = sphi 0, %s132
    %s133 = sphi 0, %s130
    %s134 = sphi 0, %s133
    %s150 = sphi 0, %s134
    %s154 = sphi 0, %s154
    %s156 = sphi 0, %s154
    %s157 = sphi 0, %s156
    %s171 = sphi 0, %s157
    %s175 = sphi 0, %s175
    %s177 = sphi 0, %s175
    %s178 = sphi 0, %s177
    %s192 = sphi 0, %s178
    %s202 = sphi 0, %s204
    %s205 = sphi 0, %s202
    %s206 = sphi 0, %s205
    %s222 = sphi 0, %s206
  $region4: #{simple_rb_forward.2} parent=0 // loop_header_branch
    %15 = sbr.rel (%p13) target = $region8
  $region5: #{simple_rb_forward.2} parent=0 // loop_body
    %s17 = ssub.s32 %s12, 1
    %s18 = ssub.s32 %s12, 2
    %s25 = sadd.s32 1, %s20
    %p26 = scmp.ge.s32.totalorder %s25, 1
    %s27 = scalar_select %p26, 0, %s25
    %s28 = sadd.s32 1, %s19
    %s29 = scalar_select %p26, %s28, %s19
    %p30 = scmp.ge.s32.totalorder %s29, 2
    %s31 = scalar_select %p30, 0, %s29
    %s32 = sadd.s32 %s20, 1
    %s33 = smul.u32 %s32, 8
    %s34 = ssub.s32 %s33, 1
    %s35 = sadd.s32 %s27, 1
    %s36 = smul.u32 %s35, 8
    %s37 = ssub.s32 %s36, 1
    %s38 = ssub.s32 %s19, %s31
    %s39 = ssub.s32 %s34, %s37
    %s40 = sor.u32 %s38, %s39
    %p41 = scmp.eq.s32.totalorder %s40, 0
    %s43 = sadd.s32 %s42, 1
    %s44 = scalar_select %p41, %s42, %s43
    %p47 = pneg %p41
    %p48 = scmp.eq.s32.totalorder %s12, 1
    %p49 = por %p47, %p48
    %p50 = scmp.ne.s32.totalorder %s42, %s45
    %p51 = scmp.eq.s32.totalorder %s12, 0
    %p52 = por %p50, %p51
    %p53 = scmp.ne.s32.totalorder %s42, %s45
    %p54 = scmp.eq.s32.totalorder %s17, 1
    %p55 = por %p53, %p54
    %p56 = scmp.ne.s32.totalorder %s45, %s46
    %p57 = scmp.eq.s32.totalorder %s17, 0
    %p58 = por %p56, %p57
    %p59 = scmp.ne.s32.totalorder %s45, %s46
    %p60 = scmp.eq.s32.totalorder %s18, 1
    %p61 = por %p59, %p60
    %p63 = scmp.ne.s32.totalorder %s46, %s62
    %p64 = scmp.eq.s32.totalorder %s18, 0
    %p65 = por %p63, %p64
    %s66 = sadd.s32 %s20, 1
    %s67 = sadd.s32 %s27, 1
    %s68 = ssub.s32 %s19, %s31
    %s69 = ssub.s32 %s66, %s67
    %s70 = sor.u32 %s68, %s69
    %p71 = scmp.eq.s32.totalorder %s70, 0
    %s73 = sadd.s32 %s72, 1
    %s74 = scalar_select %p71, %s72, %s73
    %p77 = pneg %p71
    %p78 = scmp.eq.s32.totalorder %s12, 1
    %p79 = por %p77, %p78
    %p80 = scmp.ne.s32.totalorder %s72, %s75
    %p81 = scmp.eq.s32.totalorder %s12, 0
    %p82 = por %p80, %p81
    %p83 = scmp.ne.s32.totalorder %s72, %s75
    %p84 = scmp.eq.s32.totalorder %s17, 1
    %p85 = por %p83, %p84
    %p86 = scmp.ne.s32.totalorder %s75, %s76
    %p87 = scmp.eq.s32.totalorder %s17, 0
    %p88 = por %p86, %p87
    %p89 = scmp.ne.s32.totalorder %s75, %s76
    %p90 = scmp.eq.s32.totalorder %s18, 1
    %p91 = por %p89, %p90
    %p93 = scmp.ne.s32.totalorder %s76, %s92
    %p94 = scmp.eq.s32.totalorder %s18, 0
    %p95 = por %p93, %p94
    %s96 = sadd.s32 %s20, 2
    %s97 = smul.u32 %s96, 8
    %s98 = sadd.s32 %s27, 2
    %s99 = smul.u32 %s98, 8
    %s100 = ssub.s32 %s19, %s31
    %s101 = ssub.s32 %s97, %s99
    %s102 = sor.u32 %s100, %s101
    %p103 = scmp.eq.s32.totalorder %s102, 0
    %s105 = sadd.s32 %s104, 1
    %s106 = scalar_select %p103, %s104, %s105
    %p109 = pneg %p103
    %p110 = scmp.eq.s32.totalorder %s12, 1
    %p111 = por %p109, %p110
    %p112 = scmp.ne.s32.totalorder %s104, %s107
    %p113 = scmp.eq.s32.totalorder %s12, 0
    %p114 = por %p112, %p113
    %p115 = scmp.ne.s32.totalorder %s104, %s107
    %p116 = scmp.eq.s32.totalorder %s17, 1
    %p117 = por %p115, %p116
    %p118 = scmp.ne.s32.totalorder %s107, %s108
    %p119 = scmp.eq.s32.totalorder %s17, 0
    %p120 = por %p118, %p119
    %p121 = scmp.ne.s32.totalorder %s107, %s108
    %p122 = scmp.eq.s32.totalorder %s18, 1
    %p123 = por %p121, %p122
    %p125 = scmp.ne.s32.totalorder %s108, %s124
    %p126 = scmp.eq.s32.totalorder %s18, 0
    %p127 = por %p125, %p126
    %s128 = ssub.s32 %s20, %s27
    %p129 = scmp.eq.s32.totalorder %s128, 0
    %s131 = sadd.s32 %s130, 1
    %s132 = scalar_select %p129, %s130, %s131
    %p135 = pneg %p129
    %p136 = scmp.eq.s32.totalorder %s12, 1
    %p137 = por %p135, %p136
    %p138 = scmp.ne.s32.totalorder %s130, %s133
    %p139 = scmp.eq.s32.totalorder %s12, 0
    %p140 = por %p138, %p139
    %p141 = scmp.ne.s32.totalorder %s130, %s133
    %p142 = scmp.eq.s32.totalorder %s17, 1
    %p143 = por %p141, %p142
    %p144 = scmp.ne.s32.totalorder %s133, %s134
    %p145 = scmp.eq.s32.totalorder %s17, 0
    %p146 = por %p144, %p145
    %p147 = scmp.ne.s32.totalorder %s133, %s134
    %p148 = scmp.eq.s32.totalorder %s18, 1
    %p149 = por %p147, %p148
    %p151 = scmp.ne.s32.totalorder %s134, %s150
    %p152 = scmp.eq.s32.totalorder %s18, 0
    %p153 = por %p151, %p152
    %s155 = sadd.s32 %s154, 1
    %p158 = scmp.eq.s32.totalorder %s12, 1
    %p159 = scmp.ne.s32.totalorder %s154, %s156
    %p160 = scmp.eq.s32.totalorder %s12, 0
    %p161 = por %p159, %p160
    %p162 = scmp.ne.s32.totalorder %s154, %s156
    %p163 = scmp.eq.s32.totalorder %s17, 1
    %p164 = por %p162, %p163
    %p165 = scmp.ne.s32.totalorder %s156, %s157
    %p166 = scmp.eq.s32.totalorder %s17, 0
    %p167 = por %p165, %p166
    %p168 = scmp.ne.s32.totalorder %s156, %s157
    %p169 = scmp.eq.s32.totalorder %s18, 1
    %p170 = por %p168, %p169
    %p172 = scmp.ne.s32.totalorder %s157, %s171
    %p173 = scmp.eq.s32.totalorder %s18, 0
    %p174 = por %p172, %p173
    %s176 = sadd.s32 %s175, 1
    %p179 = scmp.eq.s32.totalorder %s12, 1
    %p180 = scmp.ne.s32.totalorder %s175, %s177
    %p181 = scmp.eq.s32.totalorder %s12, 0
    %p182 = por %p180, %p181
    %p183 = scmp.ne.s32.totalorder %s175, %s177
    %p184 = scmp.eq.s32.totalorder %s17, 1
    %p185 = por %p183, %p184
    %p186 = scmp.ne.s32.totalorder %s177, %s178
    %p187 = scmp.eq.s32.totalorder %s17, 0
    %p188 = por %p186, %p187
    %p189 = scmp.ne.s32.totalorder %s177, %s178
    %p190 = scmp.eq.s32.totalorder %s18, 1
    %p191 = por %p189, %p190
    %p193 = scmp.ne.s32.totalorder %s178, %s192
    %p194 = scmp.eq.s32.totalorder %s18, 0
    %p195 = por %p193, %p194
    %s196 = sadd.s32 %s20, 1
    %s197 = sadd.s32 %s27, 1
    %s198 = ssub.s32 %s19, %s31
    %s199 = ssub.s32 %s196, %s197
    %s200 = sor.u32 %s198, %s199
    %p201 = scmp.eq.s32.totalorder %s200, 0
    %s203 = sadd.s32 %s202, 1
    %s204 = scalar_select %p201, %s202, %s203
    %p207 = pneg %p201
    %p208 = scmp.eq.s32.totalorder %s12, 1
    %p209 = por %p207, %p208
    %p210 = scmp.ne.s32.totalorder %s202, %s205
    %p211 = scmp.eq.s32.totalorder %s12, 0
    %p212 = por %p210, %p211
    %p213 = scmp.ne.s32.totalorder %s202, %s205
    %p214 = scmp.eq.s32.totalorder %s17, 1
    %p215 = por %p213, %p214
    %p216 = scmp.ne.s32.totalorder %s205, %s206
    %p217 = scmp.eq.s32.totalorder %s17, 0
    %p218 = por %p216, %p217
    %p219 = scmp.ne.s32.totalorder %s205, %s206
    %p220 = scmp.eq.s32.totalorder %s18, 1
    %p221 = por %p219, %p220
    %p223 = scmp.ne.s32.totalorder %s206, %s222
    %p224 = scmp.eq.s32.totalorder %s18, 0
    %p225 = por %p223, %p224
    %p226 = scmp.le.s32.totalorder 1, %s12
    %p227 = scmp.lt.s32.totalorder %s12, 3
    %p228 = pnand %p226, %p227
    %p229 = pneg %p228
    // Predicated region
    $region9: #{simple_rb_forward.2} parent=5 // pred_check
      _
    $region10: #{simple_rb_forward.2} parent=5 // pred_check_branch
      %231 = sbr.rel (%p228) target = $region12
    $region11: #{simple_rb_forward.2} parent=5 // pred_region
      %s232 = ssub.s32 %s12, 1
      // Predicated region
      $region13: #{simple_rb_forward.2} parent=11 // pred_check
        %p233 = pneg %p146
      $region14: #{simple_rb_forward.2} parent=11 // pred_check_branch
        %235 = sbr.rel (%p233) target = $region16
      $region15: #{simple_rb_forward.2} parent=11 // pred_region
        %s236 = smul.u32 8, %s22
        %p237 = scmp.lt.s32.totalorder %s236, 7
        %s238 = scalar_select %p237, %s236, 7
        %s239 = scalar_lea.vmem %s3, %s238
        %s240 = smul.u32 8, %s22
      $region16: #{simple_rb_forward.2} parent=11 // pred_fallthru
        _
      // Predicated region
      $region17: #{simple_rb_forward.2} parent=11 // pred_check
        %p241 = pneg %p167
      $region18: #{simple_rb_forward.2} parent=11 // pred_check_branch
        %243 = sbr.rel (%p241) target = $region20
      $region19: #{simple_rb_forward.2} parent=11 // pred_region
        _
      $region20: #{simple_rb_forward.2} parent=11 // pred_fallthru
        _
      // Predicated region
      $region21: #{simple_rb_forward.2} parent=11 // pred_check
        %p244 = pneg %p188
      $region22: #{simple_rb_forward.2} parent=11 // pred_check_branch
        %246 = sbr.rel (%p244) target = $region24
      $region23: #{simple_rb_forward.2} parent=11 // pred_region
        _
      $region24: #{simple_rb_forward.2} parent=11 // pred_fallthru
        _
    $region12: #{simple_rb_forward.2} parent=5 // pred_fallthru
      _
    %p247 = scmp.lt.s32.totalorder %s12, 2
    // Predicated region
    $region25: #{simple_rb_forward.2} parent=5 // pred_check
      %p248 = pneg %p247
    $region26: #{simple_rb_forward.2} parent=5 // pred_check_branch
      %250 = sbr.rel (%p248) target = $region28
    $region27: #{simple_rb_forward.2} parent=5 // pred_region
      // Predicated region
      $region29: #{simple_rb_forward.2} parent=27 // pred_check
        %p251 = pneg %p52
      $region30: #{simple_rb_forward.2} parent=27 // pred_check_branch
        %253 = sbr.rel (%p251) target = $region32
      $region31: #{simple_rb_forward.2} parent=27 // pred_region
        %s254 = sadd.s32 %s20, 1
        %s255 = smul.u32 %s254, 8
        %s256 = ssub.s32 %s255, 1
        %p257 = scmp.lt.s32.totalorder %s19, 1
        %s258 = scalar_select %p257, %s19, 1
        %p259 = scmp.lt.s32.totalorder %s256, 23
        %s260 = scalar_select %p259, %s256, 23
        %s261 = smul.addr %s258, 24
        %s262 = sadd.s32 %s260, %s261
        %s263 = smul.addr %s262, 2
        %s264 = scalar_lea.vmem %s0, %s263
        %s265 = sadd.s32 %s20, 1
        %s266 = smul.u32 %s265, 8
        %s267 = ssub.s32 %s266, 1
      $region32: #{simple_rb_forward.2} parent=27 // pred_fallthru
        _
      // Predicated region
      $region33: #{simple_rb_forward.2} parent=27 // pred_check
        %p268 = pneg %p82
      $region34: #{simple_rb_forward.2} parent=27 // pred_check_branch
        %270 = sbr.rel (%p268) target = $region36
      $region35: #{simple_rb_forward.2} parent=27 // pred_region
        %s271 = sadd.s32 %s20, 1
        %s272 = smul.u32 8, %s271
        %p273 = scmp.lt.s32.totalorder %s19, 1
        %s274 = scalar_select %p273, %s19, 1
        %p275 = scmp.lt.s32.totalorder %s272, 23
        %s276 = scalar_select %p275, %s272, 23
        %s277 = smul.addr %s274, 24
        %s278 = sadd.s32 %s276, %s277
        %s279 = smul.addr %s278, 2
        %s280 = scalar_lea.vmem %s1, %s279
        %s281 = sadd.s32 %s20, 1
        %s282 = smul.u32 8, %s281
      $region36: #{simple_rb_forward.2} parent=27 // pred_fallthru
        _
      // Predicated region
      $region37: #{simple_rb_forward.2} parent=27 // pred_check
        %p283 = pneg %p114
      $region38: #{simple_rb_forward.2} parent=27 // pred_check_branch
        %285 = sbr.rel (%p283) target = $region40
      $region39: #{simple_rb_forward.2} parent=27 // pred_region
        %s286 = sadd.s32 %s20, 2
        %s287 = smul.u32 %s286, 8
        %p288 = scmp.lt.s32.totalorder %s19, 1
        %s289 = scalar_select %p288, %s19, 1
        %p290 = scmp.lt.s32.totalorder %s287, 23
        %s291 = scalar_select %p290, %s287, 23
        %s292 = smul.addr %s289, 24
        %s293 = sadd.s32 %s291, %s292
        %s294 = smul.addr %s293, 2
        %s295 = scalar_lea.vmem %s2, %s294
        %s296 = sadd.s32 %s20, 2
        %s297 = smul.u32 %s296, 8
      $region40: #{simple_rb_forward.2} parent=27 // pred_fallthru
        _
    $region28: #{simple_rb_forward.2} parent=5 // pred_fallthru
      _
    %p298 = scmp.le.s32.totalorder 1, %s12
    %p299 = scmp.lt.s32.totalorder %s12, 3
    %p300 = pnand %p298, %p299
    %p301 = pneg %p300
    // Predicated region
    $region41: #{simple_rb_forward.2} parent=5 // pred_check
      _
    $region42: #{simple_rb_forward.2} parent=5 // pred_check_branch
      %303 = sbr.rel (%p300) target = $region44
    $region43: #{simple_rb_forward.2} parent=5 // pred_region
      %s304 = ssub.s32 %s12, 1
      %s305 = sadd.s32 %s22, 1
      %s306 = smul.u32 %s305, 8
      %s307 = ssub.s32 %s306, 1
      %p308 = scmp.lt.s32.totalorder %s21, 1
      %s309 = scalar_select %p308, %s21, 1
      %p310 = scmp.lt.s32.totalorder %s307, 23
      %s311 = scalar_select %p310, %s307, 23
      %s312 = smul.addr %s309, 24
      %s313 = sadd.s32 %s311, %s312
      %s314 = smul.addr %s313, 2
      %s315 = scalar_lea.vmem %s0, %s314
      %p316 = pneg %p58
      %p317 = pneg %p55
      %s318 = sadd.s32 %s22, 1
      %s319 = smul.u32 8, %s318
      %p320 = scmp.lt.s32.totalorder %s21, 1
      %s321 = scalar_select %p320, %s21, 1
      %p322 = scmp.lt.s32.totalorder %s319, 23
      %s323 = scalar_select %p322, %s319, 23
      %s324 = smul.addr %s321, 24
      %s325 = sadd.s32 %s323, %s324
      %s326 = smul.addr %s325, 2
      %s327 = scalar_lea.vmem %s1, %s326
      %p328 = pneg %p88
      %p329 = pneg %p85
      %s330 = sadd.s32 %s22, 2
      %s331 = smul.u32 %s330, 8
      %p332 = scmp.lt.s32.totalorder %s21, 1
      %s333 = scalar_select %p332, %s21, 1
      %p334 = scmp.lt.s32.totalorder %s331, 23
      %s335 = scalar_select %p334, %s331, 23
      %s336 = smul.addr %s333, 24
      %s337 = sadd.s32 %s335, %s336
      %s338 = smul.addr %s337, 2
      %s339 = scalar_lea.vmem %s2, %s338
      %p340 = pneg %p120
      %p341 = pneg %p117
      %s342 = smul.u32 8, %s22
      %p343 = scmp.lt.s32.totalorder %s342, 7
      %s344 = scalar_select %p343, %s342, 7
      %s345 = scalar_lea.vmem %s3, %s344
      %p346 = pneg %p146
      %p347 = pneg %p143
      %p348 = pneg %p167
      %p349 = pneg %p164
      %p350 = pneg %p188
      %p351 = pneg %p185
      %p352 = pneg %p218
      %p353 = pneg %p215
      %s354 = sadd.s32 %s22, 1
      %s355 = smul.u32 8, %s354
      %p356 = scmp.lt.s32.totalorder %s21, 1
      %s357 = scalar_select %p356, %s21, 1
      %p358 = scmp.lt.s32.totalorder %s355, 23
      %s359 = scalar_select %p358, %s355, 23
      %s360 = smul.addr %s357, 24
      %s361 = sadd.s32 %s359, %s360
      %s362 = smul.addr %s361, 2
      %s363 = scalar_lea.vmem %s6, %s362
      %s364 = sadd.s32 %s22, 1
      %s365 = smul.u32 %s364, 8
      %s366 = ssub.s32 %s365, 1
      %p367 = scmp.lt.s32.totalorder %s21, 1
      %s368 = scalar_select %p367, %s21, 1
      %p369 = scmp.lt.s32.totalorder %s366, 23
      %s370 = scalar_select %p369, %s366, 23
      %s371 = smul.addr %s368, 24
      %s372 = sadd.s32 %s370, %s371
      %s373 = smul.addr %s372, 2
      %s374 = scalar_lea.vmem %s0, %s373
      %s375 = sadd.s32 %s22, 1
      %s376 = smul.u32 %s375, 8
      %s377 = ssub.s32 %s376, 1
      %s378 = sadd.s32 %s22, 1
      %s379 = smul.u32 8, %s378
      %p380 = scmp.lt.s32.totalorder %s21, 1
      %s381 = scalar_select %p380, %s21, 1
      %p382 = scmp.lt.s32.totalorder %s379, 23
      %s383 = scalar_select %p382, %s379, 23
      %s384 = smul.addr %s381, 24
      %s385 = sadd.s32 %s383, %s384
      %s386 = smul.addr %s385, 2
      %s387 = scalar_lea.vmem %s1, %s386
      %s388 = sadd.s32 %s22, 1
      %s389 = smul.u32 8, %s388
      %s390 = sadd.s32 %s22, 2
      %s391 = smul.u32 %s390, 8
      %p392 = scmp.lt.s32.totalorder %s21, 1
      %s393 = scalar_select %p392, %s21, 1
      %p394 = scmp.lt.s32.totalorder %s391, 23
      %s395 = scalar_select %p394, %s391, 23
      %s396 = smul.addr %s393, 24
      %s397 = sadd.s32 %s395, %s396
      %s398 = smul.addr %s397, 2
      %s399 = scalar_lea.vmem %s2, %s398
      %s400 = sadd.s32 %s22, 2
      %s401 = smul.u32 %s400, 8
      %s402 = smul.u32 8, %s22
      %p403 = scmp.lt.s32.totalorder %s402, 7
      %s404 = scalar_select %p403, %s402, 7
      %s405 = scalar_lea.vmem %s3, %s404
      %s406 = smul.u32 8, %s22
      %s407 = sadd.s32 %s22, 1
      %s408 = smul.u32 8, %s407
      %p409 = scmp.lt.s32.totalorder %s21, 1
      %s410 = scalar_select %p409, %s21, 1
      %p411 = scmp.lt.s32.totalorder %s408, 23
      %s412 = scalar_select %p411, %s408, 23
      %s413 = smul.addr %s410, 24
      %s414 = sadd.s32 %s412, %s413
      %s415 = smul.addr %s414, 2
      %s416 = scalar_lea.vmem %s6, %s415
      %s417 = sadd.s32 %s22, 1
      %s418 = smul.u32 8, %s417
      %v419 = vld [vmem:[%s374] sm:$0x3]
      %v420 = vunpack.c.l.bf16 %v419
      %421 = vst [vmem:[#allocation2] sm:$0xf] %v420
      %v422 = vld [vmem:[%s387] sm:$0xff]
      %v423 = vld [vmem:[%s387 + $0x8] sm:$0xff]
      %v424 = vunpack.c.l.bf16 %v422
      %v425 = vunpack.c.h.bf16 %v422
      %v426 = vunpack.c.l.bf16 %v423
      %v427 = vunpack.c.h.bf16 %v423
      %428 = vst [vmem:[#allocation2 + $0x4] sm:$0xff] %v424
      %429 = vst [vmem:[#allocation2 + $0xc] sm:$0xff] %v425
      %430 = vst [vmem:[#allocation2 + $0x14] sm:$0xff] %v426
      %431 = vst [vmem:[#allocation2 + $0x1c] sm:$0xff] %v427
      %v432 = vld [vmem:[%s399] sm:$0x3]
      %v433 = vunpack.c.l.bf16 %v432
      %434 = vst [vmem:[#allocation2 + $0x24] sm:$0xf] %v433
      %v435 = vld [vmem:[#allocation2] sm:$0xff]
      %v436 = vld [vmem:[#allocation2 + $0x8] sm:$0xff]
      %v437 = vld [vmem:[#allocation2 + $0x10] sm:$0xff]
      %v438 = vld [vmem:[#allocation2 + $0x18] sm:$0xff]
      %v439 = vld [vmem:[#allocation2 + $0x20] sm:$0xf]
      %v445 = vcombine.high %v435, %v435
      %v446 = vcombine.high %v436, %v436
      %v447 = vcombine.high %v437, %v437
      %v448 = vcombine.high %v438, %v438
      %449 = vrot.lane.b32.xlu0 %v435, 111
      %v450 = vpop.permute.xlu0 %449
      %451 = vrot.lane.b32.xlu0 %v445, 111
      %v452 = vpop.permute.xlu0 %451
      %453 = vrot.lane.b32.xlu0 %v436, 111
      %v454 = vpop.permute.xlu0 %453
      %455 = vrot.lane.b32.xlu0 %v446, 111
      %v456 = vpop.permute.xlu0 %455
      %457 = vrot.lane.b32.xlu0 %v437, 111
      %v458 = vpop.permute.xlu0 %457
      %459 = vrot.lane.b32.xlu0 %v447, 111
      %v460 = vpop.permute.xlu0 %459
      %461 = vrot.lane.b32.xlu0 %v438, 111
      %v462 = vpop.permute.xlu0 %461
      %463 = vrot.lane.b32.xlu0 %v448, 111
      %v464 = vpop.permute.xlu0 %463
      %465 = vrot.lane.b32.xlu0 %v439, 111
      %v466 = vpop.permute.xlu0 %465
      %vm467 = vcmask 908288
      %v468 = vsel %vm467, %v450, %v452
      %v469 = vsel %vm467, %v452, %v454
      %v470 = vsel %vm467, %v454, %v456
      %v471 = vsel %vm467, %v456, %v458
      %v472 = vsel %vm467, %v458, %v460
      %v473 = vsel %vm467, %v460, %v462
      %v474 = vsel %vm467, %v462, %v464
      %v475 = vsel %vm467, %v464, %v466
      %484 = vst [vmem:[#allocation3] sm:$0xf] %v468
      %485 = vst [vmem:[#allocation3 + $0x8] sm:$0xf] %v469
      %486 = vst [vmem:[#allocation3 + $0x10] sm:$0xf] %v470
      %487 = vst [vmem:[#allocation3 + $0x18] sm:$0xf] %v471
      %488 = vst [vmem:[#allocation3 + $0x20] sm:$0xf] %v472
      %489 = vst [vmem:[#allocation3 + $0x28] sm:$0xf] %v473
      %490 = vst [vmem:[#allocation3 + $0x30] sm:$0xf] %v474
      %491 = vst [vmem:[#allocation3 + $0x38] sm:$0xf] %v475
      %v492 = vld [vmem:[#allocation2] sm:$0xff]
      %v493 = vld [vmem:[#allocation2 + $0x8] sm:$0xff]
      %v494 = vld [vmem:[#allocation2 + $0x10] sm:$0xff]
      %v495 = vld [vmem:[#allocation2 + $0x18] sm:$0xff]
      %v496 = vld [vmem:[#allocation2 + $0x20] sm:$0xf]
      %v502 = vcombine.low %v492, %v492
      %v503 = vcombine.low %v493, %v493
      %v504 = vcombine.low %v494, %v494
      %v505 = vcombine.low %v495, %v495
      %v506 = vcombine.low %v496, %v496
      %507 = vrot.lane.b32.xlu0 %v502, 110
      %v508 = vpop.permute.xlu0 %507
      %509 = vrot.lane.b32.xlu0 %v492, 110
      %v510 = vpop.permute.xlu0 %509
      %511 = vrot.lane.b32.xlu0 %v503, 110
      %v512 = vpop.permute.xlu0 %511
      %513 = vrot.lane.b32.xlu0 %v493, 110
      %v514 = vpop.permute.xlu0 %513
      %515 = vrot.lane.b32.xlu0 %v504, 110
      %v516 = vpop.permute.xlu0 %515
      %517 = vrot.lane.b32.xlu0 %v494, 110
      %v518 = vpop.permute.xlu0 %517
      %519 = vrot.lane.b32.xlu0 %v505, 110
      %v520 = vpop.permute.xlu0 %519
      %521 = vrot.lane.b32.xlu0 %v495, 110
      %v522 = vpop.permute.xlu0 %521
      %523 = vrot.lane.b32.xlu0 %v506, 110
      %v524 = vpop.permute.xlu0 %523
      %vm525 = vcmask 900096
      %v526 = vsel %vm525, %v508, %v510
      %v527 = vsel %vm525, %v510, %v512
      %v528 = vsel %vm525, %v512, %v514
      %v529 = vsel %vm525, %v514, %v516
      %v530 = vsel %vm525, %v516, %v518
      %v531 = vsel %vm525, %v518, %v520
      %v532 = vsel %vm525, %v520, %v522
      %v533 = vsel %vm525, %v522, %v524
      %542 = vst [vmem:[#allocation3] sm:$0xf0] %v526
      %543 = vst [vmem:[#allocation3 + $0x8] sm:$0xf0] %v527
      %544 = vst [vmem:[#allocation3 + $0x10] sm:$0xf0] %v528
      %545 = vst [vmem:[#allocation3 + $0x18] sm:$0xf0] %v529
      %546 = vst [vmem:[#allocation3 + $0x20] sm:$0xf0] %v530
      %547 = vst [vmem:[#allocation3 + $0x28] sm:$0xf0] %v531
      %548 = vst [vmem:[#allocation3 + $0x30] sm:$0xf0] %v532
      %549 = vst [vmem:[#allocation3 + $0x38] sm:$0xf0] %v533
      %v550 = vld [vmem:[#allocation2] sm:$0xff]
      %v551 = vld [vmem:[#allocation2 + $0x8] sm:$0xff]
      %v552 = vld [vmem:[#allocation2 + $0x10] sm:$0xff]
      %v553 = vld [vmem:[#allocation2 + $0x18] sm:$0xff]
      %v554 = vld [vmem:[#allocation2 + $0x20] sm:$0xf]
      %v560 = vcombine.high %v550, %v550
      %v561 = vcombine.high %v551, %v551
      %v562 = vcombine.high %v552, %v552
      %v563 = vcombine.high %v553, %v553
      %564 = vrot.lane.b32.xlu0 %v550, 109
      %v565 = vpop.permute.xlu0 %564
      %566 = vrot.lane.b32.xlu0 %v560, 109
      %v567 = vpop.permute.xlu0 %566
      %568 = vrot.lane.b32.xlu0 %v551, 109
      %v569 = vpop.permute.xlu0 %568
      %570 = vrot.lane.b32.xlu0 %v561, 109
      %v571 = vpop.permute.xlu0 %570
      %572 = vrot.lane.b32.xlu0 %v552, 109
      %v573 = vpop.permute.xlu0 %572
      %574 = vrot.lane.b32.xlu0 %v562, 109
      %v575 = vpop.permute.xlu0 %574
      %576 = vrot.lane.b32.xlu0 %v553, 109
      %v577 = vpop.permute.xlu0 %576
      %578 = vrot.lane.b32.xlu0 %v563, 109
      %v579 = vpop.permute.xlu0 %578
      %580 = vrot.lane.b32.xlu0 %v554, 109
      %v581 = vpop.permute.xlu0 %580
      %vm582 = vcmask 891904
      %v583 = vsel %vm582, %v565, %v567
      %v584 = vsel %vm582, %v567, %v569
      %v585 = vsel %vm582, %v569, %v571
      %v586 = vsel %vm582, %v571, %v573
      %v587 = vsel %vm582, %v573, %v575
      %v588 = vsel %vm582, %v575, %v577
      %v589 = vsel %vm582, %v577, %v579
      %v590 = vsel %vm582, %v579, %v581
      %599 = vst [vmem:[#allocation3 + $0x40] sm:$0xf] %v583
      %600 = vst [vmem:[#allocation3 + $0x48] sm:$0xf] %v584
      %601 = vst [vmem:[#allocation3 + $0x50] sm:$0xf] %v585
      %602 = vst [vmem:[#allocation3 + $0x58] sm:$0xf] %v586
      %603 = vst [vmem:[#allocation3 + $0x60] sm:$0xf] %v587
      %604 = vst [vmem:[#allocation3 + $0x68] sm:$0xf] %v588
      %605 = vst [vmem:[#allocation3 + $0x70] sm:$0xf] %v589
      %606 = vst [vmem:[#allocation3 + $0x78] sm:$0xf] %v590
      %v607 = vld [vmem:[#allocation2] sm:$0xff]
      %v608 = vld [vmem:[#allocation2 + $0x8] sm:$0xff]
      %v609 = vld [vmem:[#allocation2 + $0x10] sm:$0xff]
      %v610 = vld [vmem:[#allocation2 + $0x18] sm:$0xff]
      %v611 = vld [vmem:[#allocation2 + $0x20] sm:$0xf]
      %v617 = vcombine.low %v607, %v607
      %v618 = vcombine.low %v608, %v608
      %v619 = vcombine.low %v609, %v609
      %v620 = vcombine.low %v610, %v610
      %v621 = vcombine.low %v611, %v611
      %622 = vrot.lane.b32.xlu0 %v617, 101
      %v623 = vpop.permute.xlu0 %622
      %624 = vrot.lane.b32.xlu0 %v607, 101
      %v625 = vpop.permute.xlu0 %624
      %626 = vrot.lane.b32.xlu0 %v618, 101
      %v627 = vpop.permute.xlu0 %626
      %628 = vrot.lane.b32.xlu0 %v608, 101
      %v629 = vpop.permute.xlu0 %628
      %630 = vrot.lane.b32.xlu0 %v619, 101
      %v631 = vpop.permute.xlu0 %630
      %632 = vrot.lane.b32.xlu0 %v609, 101
      %v633 = vpop.permute.xlu0 %632
      %634 = vrot.lane.b32.xlu0 %v620, 101
      %v635 = vpop.permute.xlu0 %634
      %636 = vrot.lane.b32.xlu0 %v610, 101
      %v637 = vpop.permute.xlu0 %636
      %638 = vrot.lane.b32.xlu0 %v621, 101
      %v639 = vpop.permute.xlu0 %638
      %vm640 = vcmask 826368
      %v641 = vsel %vm640, %v623, %v625
      %v642 = vsel %vm640, %v625, %v627
      %v643 = vsel %vm640, %v627, %v629
      %v644 = vsel %vm640, %v629, %v631
      %v645 = vsel %vm640, %v631, %v633
      %v646 = vsel %vm640, %v633, %v635
      %v647 = vsel %vm640, %v635, %v637
      %v648 = vsel %vm640, %v637, %v639
      %657 = vst [vmem:[#allocation3 + $0x40] sm:$0xf0] %v641
      %658 = vst [vmem:[#allocation3 + $0x48] sm:$0xf0] %v642
      %659 = vst [vmem:[#allocation3 + $0x50] sm:$0xf0] %v643
      %660 = vst [vmem:[#allocation3 + $0x58] sm:$0xf0] %v644
      %661 = vst [vmem:[#allocation3 + $0x60] sm:$0xf0] %v645
      %662 = vst [vmem:[#allocation3 + $0x68] sm:$0xf0] %v646
      %663 = vst [vmem:[#allocation3 + $0x70] sm:$0xf0] %v647
      %664 = vst [vmem:[#allocation3 + $0x78] sm:$0xf0] %v648
      %v665 = vld [vmem:[#allocation2] sm:$0xff]
      %v666 = vld [vmem:[#allocation2 + $0x8] sm:$0xff]
      %v667 = vld [vmem:[#allocation2 + $0x10] sm:$0xff]
      %v668 = vld [vmem:[#allocation2 + $0x18] sm:$0xff]
      %v669 = vld [vmem:[#allocation2 + $0x20] sm:$0xf]
      %v675 = vcombine.high %v665, %v665
      %v676 = vcombine.high %v666, %v666
      %v677 = vcombine.high %v667, %v667
      %v678 = vcombine.high %v668, %v668
      %679 = vrot.lane.b32.xlu0 %v665, 100
      %v680 = vpop.permute.xlu0 %679
      %681 = vrot.lane.b32.xlu0 %v675, 100
      %v682 = vpop.permute.xlu0 %681
      %683 = vrot.lane.b32.xlu0 %v666, 100
      %v684 = vpop.permute.xlu0 %683
      %685 = vrot.lane.b32.xlu0 %v676, 100
      %v686 = vpop.permute.xlu0 %685
      %687 = vrot.lane.b32.xlu0 %v667, 100
      %v688 = vpop.permute.xlu0 %687
      %689 = vrot.lane.b32.xlu0 %v677, 100
      %v690 = vpop.permute.xlu0 %689
      %691 = vrot.lane.b32.xlu0 %v668, 100
      %v692 = vpop.permute.xlu0 %691
      %693 = vrot.lane.b32.xlu0 %v678, 100
      %v694 = vpop.permute.xlu0 %693
      %695 = vrot.lane.b32.xlu0 %v669, 100
      %v696 = vpop.permute.xlu0 %695
      %vm697 = vcmask 818176
      %v698 = vsel %vm697, %v680, %v682
      %v699 = vsel %vm697, %v682, %v684
      %v700 = vsel %vm697, %v684, %v686
      %v701 = vsel %vm697, %v686, %v688
      %v702 = vsel %vm697, %v688, %v690
      %v703 = vsel %vm697, %v690, %v692
      %v704 = vsel %vm697, %v692, %v694
      %v705 = vsel %vm697, %v694, %v696
      %714 = vst [vmem:[#allocation3 + $0x80] sm:$0xf] %v698
      %715 = vst [vmem:[#allocation3 + $0x88] sm:$0xf] %v699
      %716 = vst [vmem:[#allocation3 + $0x90] sm:$0xf] %v700
      %717 = vst [vmem:[#allocation3 + $0x98] sm:$0xf] %v701
      %718 = vst [vmem:[#allocation3 + $0xa0] sm:$0xf] %v702
      %719 = vst [vmem:[#allocation3 + $0xa8] sm:$0xf] %v703
      %720 = vst [vmem:[#allocation3 + $0xb0] sm:$0xf] %v704
      %721 = vst [vmem:[#allocation3 + $0xb8] sm:$0xf] %v705
      %v722 = vld [vmem:[#allocation2] sm:$0xff]
      %v723 = vld [vmem:[#allocation2 + $0x8] sm:$0xff]
      %v724 = vld [vmem:[#allocation2 + $0x10] sm:$0xff]
      %v725 = vld [vmem:[#allocation2 + $0x18] sm:$0xff]
      %v726 = vld [vmem:[#allocation2 + $0x20] sm:$0xf]
      %v732 = vcombine.low %v722, %v722
      %v733 = vcombine.low %v723, %v723
      %v734 = vcombine.low %v724, %v724
      %v735 = vcombine.low %v725, %v725
      %v736 = vcombine.low %v726, %v726
      %737 = vrot.lane.b32.xlu0 %v732, 99
      %v738 = vpop.permute.xlu0 %737
      %739 = vrot.lane.b32.xlu0 %v722, 99
      %v740 = vpop.permute.xlu0 %739
      %741 = vrot.lane.b32.xlu0 %v733, 99
      %v742 = vpop.permute.xlu0 %741
      %743 = vrot.lane.b32.xlu0 %v723, 99
      %v744 = vpop.permute.xlu0 %743
      %745 = vrot.lane.b32.xlu0 %v734, 99
      %v746 = vpop.permute.xlu0 %745
      %747 = vrot.lane.b32.xlu0 %v724, 99
      %v748 = vpop.permute.xlu0 %747
      %749 = vrot.lane.b32.xlu0 %v735, 99
      %v750 = vpop.permute.xlu0 %749
      %751 = vrot.lane.b32.xlu0 %v725, 99
      %v752 = vpop.permute.xlu0 %751
      %753 = vrot.lane.b32.xlu0 %v736, 99
      %v754 = vpop.permute.xlu0 %753
      %vm755 = vcmask 809984
      %v756 = vsel %vm755, %v738, %v740
      %v757 = vsel %vm755, %v740, %v742
      %v758 = vsel %vm755, %v742, %v744
      %v759 = vsel %vm755, %v744, %v746
      %v760 = vsel %vm755, %v746, %v748
      %v761 = vsel %vm755, %v748, %v750
      %v762 = vsel %vm755, %v750, %v752
      %v763 = vsel %vm755, %v752, %v754
      %772 = vst [vmem:[#allocation3 + $0x80] sm:$0xf0] %v756
      %773 = vst [vmem:[#allocation3 + $0x88] sm:$0xf0] %v757
      %774 = vst [vmem:[#allocation3 + $0x90] sm:$0xf0] %v758
      %775 = vst [vmem:[#allocation3 + $0x98] sm:$0xf0] %v759
      %776 = vst [vmem:[#allocation3 + $0xa0] sm:$0xf0] %v760
      %777 = vst [vmem:[#allocation3 + $0xa8] sm:$0xf0] %v761
      %778 = vst [vmem:[#allocation3 + $0xb0] sm:$0xf0] %v762
      %779 = vst [vmem:[#allocation3 + $0xb8] sm:$0xf0] %v763
      %v780 = vld [vmem:[#allocation2] sm:$0xff]
      %v781 = vld [vmem:[#allocation2 + $0x8] sm:$0xff]
      %v782 = vld [vmem:[#allocation2 + $0x10] sm:$0xff]
      %v783 = vld [vmem:[#allocation2 + $0x18] sm:$0xff]
      %v784 = vld [vmem:[#allocation2 + $0x20] sm:$0xf]
      %v790 = vcombine.high %v780, %v780
      %v791 = vcombine.high %v781, %v781
      %v792 = vcombine.high %v782, %v782
      %v793 = vcombine.high %v783, %v783
      %794 = vrot.lane.b32.xlu0 %v780, 91
      %v795 = vpop.permute.xlu0 %794
      %796 = vrot.lane.b32.xlu0 %v790, 91
      %v797 = vpop.permute.xlu0 %796
      %798 = vrot.lane.b32.xlu0 %v781, 91
      %v799 = vpop.permute.xlu0 %798
      %800 = vrot.lane.b32.xlu0 %v791, 91
      %v801 = vpop.permute.xlu0 %800
      %802 = vrot.lane.b32.xlu0 %v782, 91
      %v803 = vpop.permute.xlu0 %802
      %804 = vrot.lane.b32.xlu0 %v792, 91
      %v805 = vpop.permute.xlu0 %804
      %806 = vrot.lane.b32.xlu0 %v783, 91
      %v807 = vpop.permute.xlu0 %806
      %808 = vrot.lane.b32.xlu0 %v793, 91
      %v809 = vpop.permute.xlu0 %808
      %810 = vrot.lane.b32.xlu0 %v784, 91
      %v811 = vpop.permute.xlu0 %810
      %vm812 = vcmask 744448
      %v813 = vsel %vm812, %v795, %v797
      %v814 = vsel %vm812, %v797, %v799
      %v815 = vsel %vm812, %v799, %v801
      %v816 = vsel %vm812, %v801, %v803
      %v817 = vsel %vm812, %v803, %v805
      %v818 = vsel %vm812, %v805, %v807
      %v819 = vsel %vm812, %v807, %v809
      %v820 = vsel %vm812, %v809, %v811
      %829 = vst [vmem:[#allocation3 + $0xc0] sm:$0xf] %v813
      %830 = vst [vmem:[#allocation3 + $0xc8] sm:$0xf] %v814
      %831 = vst [vmem:[#allocation3 + $0xd0] sm:$0xf] %v815
      %832 = vst [vmem:[#allocation3 + $0xd8] sm:$0xf] %v816
      %833 = vst [vmem:[#allocation3 + $0xe0] sm:$0xf] %v817
      %834 = vst [vmem:[#allocation3 + $0xe8] sm:$0xf] %v818
      %835 = vst [vmem:[#allocation3 + $0xf0] sm:$0xf] %v819
      %836 = vst [vmem:[#allocation3 + $0xf8] sm:$0xf] %v820
      %v837 = vld [vmem:[#allocation2] sm:$0xff]
      %v838 = vld [vmem:[#allocation2 + $0x8] sm:$0xff]
      %v839 = vld [vmem:[#allocation2 + $0x10] sm:$0xff]
      %v840 = vld [vmem:[#allocation2 + $0x18] sm:$0xff]
      %v841 = vld [vmem:[#allocation2 + $0x20] sm:$0xf]
      %v847 = vcombine.low %v837, %v837
      %v848 = vcombine.low %v838, %v838
      %v849 = vcombine.low %v839, %v839
      %v850 = vcombine.low %v840, %v840
      %v851 = vcombine.low %v841, %v841
      %852 = vrot.lane.b32.xlu0 %v847, 90
      %v853 = vpop.permute.xlu0 %852
      %854 = vrot.lane.b32.xlu0 %v837, 90
      %v855 = vpop.permute.xlu0 %854
      %856 = vrot.lane.b32.xlu0 %v848, 90
      %v857 = vpop.permute.xlu0 %856
      %858 = vrot.lane.b32.xlu0 %v838, 90
      %v859 = vpop.permute.xlu0 %858
      %860 = vrot.lane.b32.xlu0 %v849, 90
      %v861 = vpop.permute.xlu0 %860
      %862 = vrot.lane.b32.xlu0 %v839, 90
      %v863 = vpop.permute.xlu0 %862
      %864 = vrot.lane.b32.xlu0 %v850, 90
      %v865 = vpop.permute.xlu0 %864
      %866 = vrot.lane.b32.xlu0 %v840, 90
      %v867 = vpop.permute.xlu0 %866
      %868 = vrot.lane.b32.xlu0 %v851, 90
      %v869 = vpop.permute.xlu0 %868
      %vm870 = vcmask 736256
      %v871 = vsel %vm870, %v853, %v855
      %v872 = vsel %vm870, %v855, %v857
      %v873 = vsel %vm870, %v857, %v859
      %v874 = vsel %vm870, %v859, %v861
      %v875 = vsel %vm870, %v861, %v863
      %v876 = vsel %vm870, %v863, %v865
      %v877 = vsel %vm870, %v865, %v867
      %v878 = vsel %vm870, %v867, %v869
      %887 = vst [vmem:[#allocation3 + $0xc0] sm:$0xf0] %v871
      %888 = vst [vmem:[#allocation3 + $0xc8] sm:$0xf0] %v872
      %889 = vst [vmem:[#allocation3 + $0xd0] sm:$0xf0] %v873
      %890 = vst [vmem:[#allocation3 + $0xd8] sm:$0xf0] %v874
      %891 = vst [vmem:[#allocation3 + $0xe0] sm:$0xf0] %v875
      %892 = vst [vmem:[#allocation3 + $0xe8] sm:$0xf0] %v876
      %893 = vst [vmem:[#allocation3 + $0xf0] sm:$0xf0] %v877
      %894 = vst [vmem:[#allocation3 + $0xf8] sm:$0xf0] %v878
      %v895 = vld [vmem:[#allocation2] sm:$0xff]
      %v896 = vld [vmem:[#allocation2 + $0x8] sm:$0xff]
      %v897 = vld [vmem:[#allocation2 + $0x10] sm:$0xff]
      %v898 = vld [vmem:[#allocation2 + $0x18] sm:$0xff]
      %v899 = vld [vmem:[#allocation2 + $0x20] sm:$0xf]
      %v905 = vcombine.high %v895, %v895
      %v906 = vcombine.high %v896, %v896
      %v907 = vcombine.high %v897, %v897
      %v908 = vcombine.high %v898, %v898
      %909 = vrot.lane.b32.xlu0 %v895, 89
      %v910 = vpop.permute.xlu0 %909
      %911 = vrot.lane.b32.xlu0 %v905, 89
      %v912 = vpop.permute.xlu0 %911
      %913 = vrot.lane.b32.xlu0 %v896, 89
      %v914 = vpop.permute.xlu0 %913
      %915 = vrot.lane.b32.xlu0 %v906, 89
      %v916 = vpop.permute.xlu0 %915
      %917 = vrot.lane.b32.xlu0 %v897, 89
      %v918 = vpop.permute.xlu0 %917
      %919 = vrot.lane.b32.xlu0 %v907, 89
      %v920 = vpop.permute.xlu0 %919
      %921 = vrot.lane.b32.xlu0 %v898, 89
      %v922 = vpop.permute.xlu0 %921
      %923 = vrot.lane.b32.xlu0 %v908, 89
      %v924 = vpop.permute.xlu0 %923
      %925 = vrot.lane.b32.xlu0 %v899, 89
      %v926 = vpop.permute.xlu0 %925
      %vm927 = vcmask 728064
      %v928 = vsel %vm927, %v910, %v912
      %v929 = vsel %vm927, %v912, %v914
      %v930 = vsel %vm927, %v914, %v916
      %v931 = vsel %vm927, %v916, %v918
      %v932 = vsel %vm927, %v918, %v920
      %v933 = vsel %vm927, %v920, %v922
      %v934 = vsel %vm927, %v922, %v924
      %v935 = vsel %vm927, %v924, %v926
      %944 = vst [vmem:[#allocation3 + $0x100] sm:$0xf] %v928
      %945 = vst [vmem:[#allocation3 + $0x108] sm:$0xf] %v929
      %946 = vst [vmem:[#allocation3 + $0x110] sm:$0xf] %v930
      %947 = vst [vmem:[#allocation3 + $0x118] sm:$0xf] %v931
      %948 = vst [vmem:[#allocation3 + $0x120] sm:$0xf] %v932
      %949 = vst [vmem:[#allocation3 + $0x128] sm:$0xf] %v933
      %950 = vst [vmem:[#allocation3 + $0x130] sm:$0xf] %v934
      %951 = vst [vmem:[#allocation3 + $0x138] sm:$0xf] %v935
      %v952 = vld [vmem:[#allocation2] sm:$0xff]
      %v953 = vld [vmem:[#allocation2 + $0x8] sm:$0xff]
      %v954 = vld [vmem:[#allocation2 + $0x10] sm:$0xff]
      %v955 = vld [vmem:[#allocation2 + $0x18] sm:$0xff]
      %v956 = vld [vmem:[#allocation2 + $0x20] sm:$0xf]
      %v962 = vcombine.low %v952, %v952
      %v963 = vcombine.low %v953, %v953
      %v964 = vcombine.low %v954, %v954
      %v965 = vcombine.low %v955, %v955
      %v966 = vcombine.low %v956, %v956
      %967 = vrot.lane.b32.xlu0 %v962, 11
      %v968 = vpop.permute.xlu0 %967
      %969 = vrot.lane.b32.xlu0 %v952, 11
      %v970 = vpop.permute.xlu0 %969
      %971 = vrot.lane.b32.xlu0 %v963, 11
      %v972 = vpop.permute.xlu0 %971
      %973 = vrot.lane.b32.xlu0 %v953, 11
      %v974 = vpop.permute.xlu0 %973
      %975 = vrot.lane.b32.xlu0 %v964, 11
      %v976 = vpop.permute.xlu0 %975
      %977 = vrot.lane.b32.xlu0 %v954, 11
      %v978 = vpop.permute.xlu0 %977
      %979 = vrot.lane.b32.xlu0 %v965, 11
      %v980 = vpop.permute.xlu0 %979
      %981 = vrot.lane.b32.xlu0 %v955, 11
      %v982 = vpop.permute.xlu0 %981
      %983 = vrot.lane.b32.xlu0 %v966, 11
      %v984 = vpop.permute.xlu0 %983
      %vm985 = vcmask 89088
      %v986 = vsel %vm985, %v968, %v970
      %v987 = vsel %vm985, %v970, %v972
      %v988 = vsel %vm985, %v972, %v974
      %v989 = vsel %vm985, %v974, %v976
      %v990 = vsel %vm985, %v976, %v978
      %v991 = vsel %vm985, %v978, %v980
      %v992 = vsel %vm985, %v980, %v982
      %v993 = vsel %vm985, %v982, %v984
      %1002 = vst [vmem:[#allocation3 + $0x100] sm:$0xf0] %v986
      %1003 = vst [vmem:[#allocation3 + $0x108] sm:$0xf0] %v987
      %1004 = vst [vmem:[#allocation3 + $0x110] sm:$0xf0] %v988
      %1005 = vst [vmem:[#allocation3 + $0x118] sm:$0xf0] %v989
      %1006 = vst [vmem:[#allocation3 + $0x120] sm:$0xf0] %v990
      %1007 = vst [vmem:[#allocation3 + $0x128] sm:$0xf0] %v991
      %1008 = vst [vmem:[#allocation3 + $0x130] sm:$0xf0] %v992
      %1009 = vst [vmem:[#allocation3 + $0x138] sm:$0xf0] %v993
      %v1010 = vld [vmem:[#allocation2] sm:$0xff]
      %v1011 = vld [vmem:[#allocation2 + $0x8] sm:$0xff]
      %v1012 = vld [vmem:[#allocation2 + $0x10] sm:$0xff]
      %v1013 = vld [vmem:[#allocation2 + $0x18] sm:$0xff]
      %v1014 = vld [vmem:[#allocation2 + $0x20] sm:$0xf]
      %v1020 = vcombine.high %v1010, %v1010
      %v1021 = vcombine.high %v1011, %v1011
      %v1022 = vcombine.high %v1012, %v1012
      %v1023 = vcombine.high %v1013, %v1013
      %1024 = vrot.lane.b32.xlu0 %v1010, 10
      %v1025 = vpop.permute.xlu0 %1024
      %1026 = vrot.lane.b32.xlu0 %v1020, 10
      %v1027 = vpop.permute.xlu0 %1026
      %1028 = vrot.lane.b32.xlu0 %v1011, 10
      %v1029 = vpop.permute.xlu0 %1028
      %1030 = vrot.lane.b32.xlu0 %v1021, 10
      %v1031 = vpop.permute.xlu0 %1030
      %1032 = vrot.lane.b32.xlu0 %v1012, 10
      %v1033 = vpop.permute.xlu0 %1032
      %1034 = vrot.lane.b32.xlu0 %v1022, 10
      %v1035 = vpop.permute.xlu0 %1034
      %1036 = vrot.lane.b32.xlu0 %v1013, 10
      %v1037 = vpop.permute.xlu0 %1036
      %1038 = vrot.lane.b32.xlu0 %v1023, 10
      %v1039 = vpop.permute.xlu0 %1038
      %1040 = vrot.lane.b32.xlu0 %v1014, 10
      %v1041 = vpop.permute.xlu0 %1040
      %vm1042 = vcmask 80896
      %v1043 = vsel %vm1042, %v1025, %v1027
      %v1044 = vsel %vm1042, %v1027, %v1029
      %v1045 = vsel %vm1042, %v1029, %v1031
      %v1046 = vsel %vm1042, %v1031, %v1033
      %v1047 = vsel %vm1042, %v1033, %v1035
      %v1048 = vsel %vm1042, %v1035, %v1037
      %v1049 = vsel %vm1042, %v1037, %v1039
      %v1050 = vsel %vm1042, %v1039, %v1041
      %1059 = vst [vmem:[#allocation3 + $0x140] sm:$0xf] %v1043
      %1060 = vst [vmem:[#allocation3 + $0x148] sm:$0xf] %v1044
      %1061 = vst [vmem:[#allocation3 + $0x150] sm:$0xf] %v1045
      %1062 = vst [vmem:[#allocation3 + $0x158] sm:$0xf] %v1046
      %1063 = vst [vmem:[#allocation3 + $0x160] sm:$0xf] %v1047
      %1064 = vst [vmem:[#allocation3 + $0x168] sm:$0xf] %v1048
      %1065 = vst [vmem:[#allocation3 + $0x170] sm:$0xf] %v1049
      %1066 = vst [vmem:[#allocation3 + $0x178] sm:$0xf] %v1050
      %v1067 = vld [vmem:[#allocation2] sm:$0xff]
      %v1068 = vld [vmem:[#allocation2 + $0x8] sm:$0xff]
      %v1069 = vld [vmem:[#allocation2 + $0x10] sm:$0xff]
      %v1070 = vld [vmem:[#allocation2 + $0x18] sm:$0xff]
      %v1071 = vld [vmem:[#allocation2 + $0x20] sm:$0xf]
      %v1077 = vcombine.low %v1067, %v1067
      %v1078 = vcombine.low %v1068, %v1068
      %v1079 = vcombine.low %v1069, %v1069
      %v1080 = vcombine.low %v1070, %v1070
      %v1081 = vcombine.low %v1071, %v1071
      %1082 = vrot.lane.b32.xlu0 %v1077, 9
      %v1083 = vpop.permute.xlu0 %1082
      %1084 = vrot.lane.b32.xlu0 %v1067, 9
      %v1085 = vpop.permute.xlu0 %1084
      %1086 = vrot.lane.b32.xlu0 %v1078, 9
      %v1087 = vpop.permute.xlu0 %1086
      %1088 = vrot.lane.b32.xlu0 %v1068, 9
      %v1089 = vpop.permute.xlu0 %1088
      %1090 = vrot.lane.b32.xlu0 %v1079, 9
      %v1091 = vpop.permute.xlu0 %1090
      %1092 = vrot.lane.b32.xlu0 %v1069, 9
      %v1093 = vpop.permute.xlu0 %1092
      %1094 = vrot.lane.b32.xlu0 %v1080, 9
      %v1095 = vpop.permute.xlu0 %1094
      %1096 = vrot.lane.b32.xlu0 %v1070, 9
      %v1097 = vpop.permute.xlu0 %1096
      %1098 = vrot.lane.b32.xlu0 %v1081, 9
      %v1099 = vpop.permute.xlu0 %1098
      %vm1100 = vcmask 72704
      %v1101 = vsel %vm1100, %v1083, %v1085
      %v1102 = vsel %vm1100, %v1085, %v1087
      %v1103 = vsel %vm1100, %v1087, %v1089
      %v1104 = vsel %vm1100, %v1089, %v1091
      %v1105 = vsel %vm1100, %v1091, %v1093
      %v1106 = vsel %vm1100, %v1093, %v1095
      %v1107 = vsel %vm1100, %v1095, %v1097
      %v1108 = vsel %vm1100, %v1097, %v1099
      %1117 = vst [vmem:[#allocation3 + $0x140] sm:$0xf0] %v1101
      %1118 = vst [vmem:[#allocation3 + $0x148] sm:$0xf0] %v1102
      %1119 = vst [vmem:[#allocation3 + $0x150] sm:$0xf0] %v1103
      %1120 = vst [vmem:[#allocation3 + $0x158] sm:$0xf0] %v1104
      %1121 = vst [vmem:[#allocation3 + $0x160] sm:$0xf0] %v1105
      %1122 = vst [vmem:[#allocation3 + $0x168] sm:$0xf0] %v1106
      %1123 = vst [vmem:[#allocation3 + $0x170] sm:$0xf0] %v1107
      %1124 = vst [vmem:[#allocation3 + $0x178] sm:$0xf0] %v1108
      %v1125 = vld [vmem:[#allocation2] sm:$0xff]
      %v1126 = vld [vmem:[#allocation2 + $0x8] sm:$0xff]
      %v1127 = vld [vmem:[#allocation2 + $0x10] sm:$0xff]
      %v1128 = vld [vmem:[#allocation2 + $0x18] sm:$0xff]
      %v1129 = vld [vmem:[#allocation2 + $0x20] sm:$0xf]
      %v1135 = vcombine.high %v1125, %v1125
      %v1136 = vcombine.high %v1126, %v1126
      %v1137 = vcombine.high %v1127, %v1127
      %v1138 = vcombine.high %v1128, %v1128
      %1139 = vrot.lane.b32.xlu0 %v1125, 1
      %v1140 = vpop.permute.xlu0 %1139
      %1141 = vrot.lane.b32.xlu0 %v1135, 1
      %v1142 = vpop.permute.xlu0 %1141
      %1143 = vrot.lane.b32.xlu0 %v1126, 1
      %v1144 = vpop.permute.xlu0 %1143
      %1145 = vrot.lane.b32.xlu0 %v1136, 1
      %v1146 = vpop.permute.xlu0 %1145
      %1147 = vrot.lane.b32.xlu0 %v1127, 1
      %v1148 = vpop.permute.xlu0 %1147
      %1149 = vrot.lane.b32.xlu0 %v1137, 1
      %v1150 = vpop.permute.xlu0 %1149
      %1151 = vrot.lane.b32.xlu0 %v1128, 1
      %v1152 = vpop.permute.xlu0 %1151
      %1153 = vrot.lane.b32.xlu0 %v1138, 1
      %v1154 = vpop.permute.xlu0 %1153
      %1155 = vrot.lane.b32.xlu0 %v1129, 1
      %v1156 = vpop.permute.xlu0 %1155
      %vm1157 = vcmask 7168
      %v1158 = vsel %vm1157, %v1140, %v1142
      %v1159 = vsel %vm1157, %v1142, %v1144
      %v1160 = vsel %vm1157, %v1144, %v1146
      %v1161 = vsel %vm1157, %v1146, %v1148
      %v1162 = vsel %vm1157, %v1148, %v1150
      %v1163 = vsel %vm1157, %v1150, %v1152
      %v1164 = vsel %vm1157, %v1152, %v1154
      %v1165 = vsel %vm1157, %v1154, %v1156
      %1174 = vst [vmem:[#allocation3 + $0x180] sm:$0xf] %v1158
      %1175 = vst [vmem:[#allocation3 + $0x188] sm:$0xf] %v1159
      %1176 = vst [vmem:[#allocation3 + $0x190] sm:$0xf] %v1160
      %1177 = vst [vmem:[#allocation3 + $0x198] sm:$0xf] %v1161
      %1178 = vst [vmem:[#allocation3 + $0x1a0] sm:$0xf] %v1162
      %1179 = vst [vmem:[#allocation3 + $0x1a8] sm:$0xf] %v1163
      %1180 = vst [vmem:[#allocation3 + $0x1b0] sm:$0xf] %v1164
      %1181 = vst [vmem:[#allocation3 + $0x1b8] sm:$0xf] %v1165
      %v1182 = vld [vmem:[#allocation2 + $0x4] sm:$0xff]
      %v1183 = vld [vmem:[#allocation2 + $0xc] sm:$0xff]
      %v1184 = vld [vmem:[#allocation2 + $0x14] sm:$0xff]
      %v1185 = vld [vmem:[#allocation2 + $0x1c] sm:$0xff]
      %v1190 = vcombine.low %v1182, %v1182
      %v1191 = vcombine.low %v1183, %v1183
      %v1192 = vcombine.low %v1184, %v1184
      %v1193 = vcombine.low %v1185, %v1185
      %1198 = vst [vmem:[#allocation3 + $0x180] sm:$0xf0] %v1190
      %1199 = vst [vmem:[#allocation3 + $0x188] sm:$0xf0] %v1182
      %1200 = vst [vmem:[#allocation3 + $0x190] sm:$0xf0] %v1191
      %1201 = vst [vmem:[#allocation3 + $0x198] sm:$0xf0] %v1183
      %1202 = vst [vmem:[#allocation3 + $0x1a0] sm:$0xf0] %v1192
      %1203 = vst [vmem:[#allocation3 + $0x1a8] sm:$0xf0] %v1184
      %1204 = vst [vmem:[#allocation3 + $0x1b0] sm:$0xf0] %v1193
      %1205 = vst [vmem:[#allocation3 + $0x1b8] sm:$0xf0] %v1185
      %v1206 = vld [vmem:[#allocation2 + $0x4] sm:$0xff]
      %v1207 = vld [vmem:[#allocation2 + $0xc] sm:$0xff]
      %v1208 = vld [vmem:[#allocation2 + $0x14] sm:$0xff]
      %v1209 = vld [vmem:[#allocation2 + $0x1c] sm:$0xff]
      %v1210 = vld [vmem:[#allocation2 + $0x24] sm:$0xf]
      %v1216 = vcombine.high %v1206, %v1206
      %v1217 = vcombine.high %v1207, %v1207
      %v1218 = vcombine.high %v1208, %v1208
      %v1219 = vcombine.high %v1209, %v1209
      %1220 = vrot.lane.b32.xlu0 %v1206, 127
      %v1221 = vpop.permute.xlu0 %1220
      %1222 = vrot.lane.b32.xlu0 %v1216, 127
      %v1223 = vpop.permute.xlu0 %1222
      %1224 = vrot.lane.b32.xlu0 %v1207, 127
      %v1225 = vpop.permute.xlu0 %1224
      %1226 = vrot.lane.b32.xlu0 %v1217, 127
      %v1227 = vpop.permute.xlu0 %1226
      %1228 = vrot.lane.b32.xlu0 %v1208, 127
      %v1229 = vpop.permute.xlu0 %1228
      %1230 = vrot.lane.b32.xlu0 %v1218, 127
      %v1231 = vpop.permute.xlu0 %1230
      %1232 = vrot.lane.b32.xlu0 %v1209, 127
      %v1233 = vpop.permute.xlu0 %1232
      %1234 = vrot.lane.b32.xlu0 %v1219, 127
      %v1235 = vpop.permute.xlu0 %1234
      %1236 = vrot.lane.b32.xlu0 %v1210, 127
      %v1237 = vpop.permute.xlu0 %1236
      %vm1238 = vcmask 1039360
      %v1239 = vsel %vm1238, %v1221, %v1223
      %v1240 = vsel %vm1238, %v1223, %v1225
      %v1241 = vsel %vm1238, %v1225, %v1227
      %v1242 = vsel %vm1238, %v1227, %v1229
      %v1243 = vsel %vm1238, %v1229, %v1231
      %v1244 = vsel %vm1238, %v1231, %v1233
      %v1245 = vsel %vm1238, %v1233, %v1235
      %v1246 = vsel %vm1238, %v1235, %v1237
      %1255 = vst [vmem:[#allocation3 + $0x1c0] sm:$0xf] %v1239
      %1256 = vst [vmem:[#allocation3 + $0x1c8] sm:$0xf] %v1240
      %1257 = vst [vmem:[#allocation3 + $0x1d0] sm:$0xf] %v1241
      %1258 = vst [vmem:[#allocation3 + $0x1d8] sm:$0xf] %v1242
      %1259 = vst [vmem:[#allocation3 + $0x1e0] sm:$0xf] %v1243
      %1260 = vst [vmem:[#allocation3 + $0x1e8] sm:$0xf] %v1244
      %1261 = vst [vmem:[#allocation3 + $0x1f0] sm:$0xf] %v1245
      %1262 = vst [vmem:[#allocation3 + $0x1f8] sm:$0xf] %v1246
      %v1263 = vld [vmem:[#allocation2 + $0x4] sm:$0xff]
      %v1264 = vld [vmem:[#allocation2 + $0xc] sm:$0xff]
      %v1265 = vld [vmem:[#allocation2 + $0x14] sm:$0xff]
      %v1266 = vld [vmem:[#allocation2 + $0x1c] sm:$0xff]
      %v1267 = vld [vmem:[#allocation2 + $0x24] sm:$0xf]
      %v1273 = vcombine.low %v1263, %v1263
      %v1274 = vcombine.low %v1264, %v1264
      %v1275 = vcombine.low %v1265, %v1265
      %v1276 = vcombine.low %v1266, %v1266
      %v1277 = vcombine.low %v1267, %v1267
      %1278 = vrot.lane.b32.xlu0 %v1273, 119
      %v1279 = vpop.permute.xlu0 %1278
      %1280 = vrot.lane.b32.xlu0 %v1263, 119
      %v1281 = vpop.permute.xlu0 %1280
      %1282 = vrot.lane.b32.xlu0 %v1274, 119
      %v1283 = vpop.permute.xlu0 %1282
      %1284 = vrot.lane.b32.xlu0 %v1264, 119
      %v1285 = vpop.permute.xlu0 %1284
      %1286 = vrot.lane.b32.xlu0 %v1275, 119
      %v1287 = vpop.permute.xlu0 %1286
      %1288 = vrot.lane.b32.xlu0 %v1265, 119
      %v1289 = vpop.permute.xlu0 %1288
      %1290 = vrot.lane.b32.xlu0 %v1276, 119
      %v1291 = vpop.permute.xlu0 %1290
      %1292 = vrot.lane.b32.xlu0 %v1266, 119
      %v1293 = vpop.permute.xlu0 %1292
      %1294 = vrot.lane.b32.xlu0 %v1277, 119
      %v1295 = vpop.permute.xlu0 %1294
      %vm1296 = vcmask 973824
      %v1297 = vsel %vm1296, %v1279, %v1281
      %v1298 = vsel %vm1296, %v1281, %v1283
      %v1299 = vsel %vm1296, %v1283, %v1285
      %v1300 = vsel %vm1296, %v1285, %v1287
      %v1301 = vsel %vm1296, %v1287, %v1289
      %v1302 = vsel %vm1296, %v1289, %v1291
      %v1303 = vsel %vm1296, %v1291, %v1293
      %v1304 = vsel %vm1296, %v1293, %v1295
      %1313 = vst [vmem:[#allocation3 + $0x1c0] sm:$0xf0] %v1297
      %1314 = vst [vmem:[#allocation3 + $0x1c8] sm:$0xf0] %v1298
      %1315 = vst [vmem:[#allocation3 + $0x1d0] sm:$0xf0] %v1299
      %1316 = vst [vmem:[#allocation3 + $0x1d8] sm:$0xf0] %v1300
      %1317 = vst [vmem:[#allocation3 + $0x1e0] sm:$0xf0] %v1301
      %1318 = vst [vmem:[#allocation3 + $0x1e8] sm:$0xf0] %v1302
      %1319 = vst [vmem:[#allocation3 + $0x1f0] sm:$0xf0] %v1303
      %1320 = vst [vmem:[#allocation3 + $0x1f8] sm:$0xf0] %v1304
      %v1321 = vld [vmem:[#allocation2 + $0x4] sm:$0xff]
      %v1322 = vld [vmem:[#allocation2 + $0xc] sm:$0xff]
      %v1323 = vld [vmem:[#allocation2 + $0x14] sm:$0xff]
      %v1324 = vld [vmem:[#allocation2 + $0x1c] sm:$0xff]
      %v1325 = vld [vmem:[#allocation2 + $0x24] sm:$0xf]
      %v1331 = vcombine.high %v1321, %v1321
      %v1332 = vcombine.high %v1322, %v1322
      %v1333 = vcombine.high %v1323, %v1323
      %v1334 = vcombine.high %v1324, %v1324
      %1335 = vrot.lane.b32.xlu0 %v1321, 118
      %v1336 = vpop.permute.xlu0 %1335
      %1337 = vrot.lane.b32.xlu0 %v1331, 118
      %v1338 = vpop.permute.xlu0 %1337
      %1339 = vrot.lane.b32.xlu0 %v1322, 118
      %v1340 = vpop.permute.xlu0 %1339
      %1341 = vrot.lane.b32.xlu0 %v1332, 118
      %v1342 = vpop.permute.xlu0 %1341
      %1343 = vrot.lane.b32.xlu0 %v1323, 118
      %v1344 = vpop.permute.xlu0 %1343
      %1345 = vrot.lane.b32.xlu0 %v1333, 118
      %v1346 = vpop.permute.xlu0 %1345
      %1347 = vrot.lane.b32.xlu0 %v1324, 118
      %v1348 = vpop.permute.xlu0 %1347
      %1349 = vrot.lane.b32.xlu0 %v1334, 118
      %v1350 = vpop.permute.xlu0 %1349
      %1351 = vrot.lane.b32.xlu0 %v1325, 118
      %v1352 = vpop.permute.xlu0 %1351
      %vm1353 = vcmask 965632
      %v1354 = vsel %vm1353, %v1336, %v1338
      %v1355 = vsel %vm1353, %v1338, %v1340
      %v1356 = vsel %vm1353, %v1340, %v1342
      %v1357 = vsel %vm1353, %v1342, %v1344
      %v1358 = vsel %vm1353, %v1344, %v1346
      %v1359 = vsel %vm1353, %v1346, %v1348
      %v1360 = vsel %vm1353, %v1348, %v1350
      %v1361 = vsel %vm1353, %v1350, %v1352
      %1370 = vst [vmem:[#allocation3 + $0x200] sm:$0xf] %v1354
      %1371 = vst [vmem:[#allocation3 + $0x208] sm:$0xf] %v1355
      %1372 = vst [vmem:[#allocation3 + $0x210] sm:$0xf] %v1356
      %1373 = vst [vmem:[#allocation3 + $0x218] sm:$0xf] %v1357
      %1374 = vst [vmem:[#allocation3 + $0x220] sm:$0xf] %v1358
      %1375 = vst [vmem:[#allocation3 + $0x228] sm:$0xf] %v1359
      %1376 = vst [vmem:[#allocation3 + $0x230] sm:$0xf] %v1360
      %1377 = vst [vmem:[#allocation3 + $0x238] sm:$0xf] %v1361
      %v1378 = vld [vmem:[#allocation2 + $0x4] sm:$0xff]
      %v1379 = vld [vmem:[#allocation2 + $0xc] sm:$0xff]
      %v1380 = vld [vmem:[#allocation2 + $0x14] sm:$0xff]
      %v1381 = vld [vmem:[#allocation2 + $0x1c] sm:$0xff]
      %v1382 = vld [vmem:[#allocation2 + $0x24] sm:$0xf]
      %v1388 = vcombine.low %v1378, %v1378
      %v1389 = vcombine.low %v1379, %v1379
      %v1390 = vcombine.low %v1380, %v1380
      %v1391 = vcombine.low %v1381, %v1381
      %v1392 = vcombine.low %v1382, %v1382
      %1393 = vrot.lane.b32.xlu0 %v1388, 117
      %v1394 = vpop.permute.xlu0 %1393
      %1395 = vrot.lane.b32.xlu0 %v1378, 117
      %v1396 = vpop.permute.xlu0 %1395
      %1397 = vrot.lane.b32.xlu0 %v1389, 117
      %v1398 = vpop.permute.xlu0 %1397
      %1399 = vrot.lane.b32.xlu0 %v1379, 117
      %v1400 = vpop.permute.xlu0 %1399
      %1401 = vrot.lane.b32.xlu0 %v1390, 117
      %v1402 = vpop.permute.xlu0 %1401
      %1403 = vrot.lane.b32.xlu0 %v1380, 117
      %v1404 = vpop.permute.xlu0 %1403
      %1405 = vrot.lane.b32.xlu0 %v1391, 117
      %v1406 = vpop.permute.xlu0 %1405
      %1407 = vrot.lane.b32.xlu0 %v1381, 117
      %v1408 = vpop.permute.xlu0 %1407
      %1409 = vrot.lane.b32.xlu0 %v1392, 117
      %v1410 = vpop.permute.xlu0 %1409
      %vm1411 = vcmask 957440
      %v1412 = vsel %vm1411, %v1394, %v1396
      %v1413 = vsel %vm1411, %v1396, %v1398
      %v1414 = vsel %vm1411, %v1398, %v1400
      %v1415 = vsel %vm1411, %v1400, %v1402
      %v1416 = vsel %vm1411, %v1402, %v1404
      %v1417 = vsel %vm1411, %v1404, %v1406
      %v1418 = vsel %vm1411, %v1406, %v1408
      %v1419 = vsel %vm1411, %v1408, %v1410
      %1428 = vst [vmem:[#allocation3 + $0x200] sm:$0xf0] %v1412
      %1429 = vst [vmem:[#allocation3 + $0x208] sm:$0xf0] %v1413
      %1430 = vst [vmem:[#allocation3 + $0x210] sm:$0xf0] %v1414
      %1431 = vst [vmem:[#allocation3 + $0x218] sm:$0xf0] %v1415
      %1432 = vst [vmem:[#allocation3 + $0x220] sm:$0xf0] %v1416
      %1433 = vst [vmem:[#allocation3 + $0x228] sm:$0xf0] %v1417
      %1434 = vst [vmem:[#allocation3 + $0x230] sm:$0xf0] %v1418
      %1435 = vst [vmem:[#allocation3 + $0x238] sm:$0xf0] %v1419
      %v1436 = vld [vmem:[#allocation2 + $0x4] sm:$0xff]
      %v1437 = vld [vmem:[#allocation2 + $0xc] sm:$0xff]
      %v1438 = vld [vmem:[#allocation2 + $0x14] sm:$0xff]
      %v1439 = vld [vmem:[#allocation2 + $0x1c] sm:$0xff]
      %v1440 = vld [vmem:[#allocation2 + $0x24] sm:$0xf]
      %v1446 = vcombine.high %v1436, %v1436
      %v1447 = vcombine.high %v1437, %v1437
      %v1448 = vcombine.high %v1438, %v1438
      %v1449 = vcombine.high %v1439, %v1439
      %1450 = vrot.lane.b32.xlu0 %v1436, 39
      %v1451 = vpop.permute.xlu0 %1450
      %1452 = vrot.lane.b32.xlu0 %v1446, 39
      %v1453 = vpop.permute.xlu0 %1452
      %1454 = vrot.lane.b32.xlu0 %v1437, 39
      %v1455 = vpop.permute.xlu0 %1454
      %1456 = vrot.lane.b32.xlu0 %v1447, 39
      %v1457 = vpop.permute.xlu0 %1456
      %1458 = vrot.lane.b32.xlu0 %v1438, 39
      %v1459 = vpop.permute.xlu0 %1458
      %1460 = vrot.lane.b32.xlu0 %v1448, 39
      %v1461 = vpop.permute.xlu0 %1460
      %1462 = vrot.lane.b32.xlu0 %v1439, 39
      %v1463 = vpop.permute.xlu0 %1462
      %1464 = vrot.lane.b32.xlu0 %v1449, 39
      %v1465 = vpop.permute.xlu0 %1464
      %1466 = vrot.lane.b32.xlu0 %v1440, 39
      %v1467 = vpop.permute.xlu0 %1466
      %vm1468 = vcmask 318464
      %v1469 = vsel %vm1468, %v1451, %v1453
      %v1470 = vsel %vm1468, %v1453, %v1455
      %v1471 = vsel %vm1468, %v1455, %v1457
      %v1472 = vsel %vm1468, %v1457, %v1459
      %v1473 = vsel %vm1468, %v1459, %v1461
      %v1474 = vsel %vm1468, %v1461, %v1463
      %v1475 = vsel %vm1468, %v1463, %v1465
      %v1476 = vsel %vm1468, %v1465, %v1467
      %1485 = vst [vmem:[#allocation3 + $0x240] sm:$0xf] %v1469
      %1486 = vst [vmem:[#allocation3 + $0x248] sm:$0xf] %v1470
      %1487 = vst [vmem:[#allocation3 + $0x250] sm:$0xf] %v1471
      %1488 = vst [vmem:[#allocation3 + $0x258] sm:$0xf] %v1472
      %1489 = vst [vmem:[#allocation3 + $0x260] sm:$0xf] %v1473
      %1490 = vst [vmem:[#allocation3 + $0x268] sm:$0xf] %v1474
      %1491 = vst [vmem:[#allocation3 + $0x270] sm:$0xf] %v1475
      %1492 = vst [vmem:[#allocation3 + $0x278] sm:$0xf] %v1476
      %v1493 = vld [vmem:[#allocation2 + $0x4] sm:$0xff]
      %v1494 = vld [vmem:[#allocation2 + $0xc] sm:$0xff]
      %v1495 = vld [vmem:[#allocation2 + $0x14] sm:$0xff]
      %v1496 = vld [vmem:[#allocation2 + $0x1c] sm:$0xff]
      %v1497 = vld [vmem:[#allocation2 + $0x24] sm:$0xf]
      %v1503 = vcombine.low %v1493, %v1493
      %v1504 = vcombine.low %v1494, %v1494
      %v1505 = vcombine.low %v1495, %v1495
      %v1506 = vcombine.low %v1496, %v1496
      %v1507 = vcombine.low %v1497, %v1497
      %1508 = vrot.lane.b32.xlu0 %v1503, 38
      %v1509 = vpop.permute.xlu0 %1508
      %1510 = vrot.lane.b32.xlu0 %v1493, 38
      %v1511 = vpop.permute.xlu0 %1510
      %1512 = vrot.lane.b32.xlu0 %v1504, 38
      %v1513 = vpop.permute.xlu0 %1512
      %1514 = vrot.lane.b32.xlu0 %v1494, 38
      %v1515 = vpop.permute.xlu0 %1514
      %1516 = vrot.lane.b32.xlu0 %v1505, 38
      %v1517 = vpop.permute.xlu0 %1516
      %1518 = vrot.lane.b32.xlu0 %v1495, 38
      %v1519 = vpop.permute.xlu0 %1518
      %1520 = vrot.lane.b32.xlu0 %v1506, 38
      %v1521 = vpop.permute.xlu0 %1520
      %1522 = vrot.lane.b32.xlu0 %v1496, 38
      %v1523 = vpop.permute.xlu0 %1522
      %1524 = vrot.lane.b32.xlu0 %v1507, 38
      %v1525 = vpop.permute.xlu0 %1524
      %vm1526 = vcmask 310272
      %v1527 = vsel %vm1526, %v1509, %v1511
      %v1528 = vsel %vm1526, %v1511, %v1513
      %v1529 = vsel %vm1526, %v1513, %v1515
      %v1530 = vsel %vm1526, %v1515, %v1517
      %v1531 = vsel %vm1526, %v1517, %v1519
      %v1532 = vsel %vm1526, %v1519, %v1521
      %v1533 = vsel %vm1526, %v1521, %v1523
      %v1534 = vsel %vm1526, %v1523, %v1525
      %1543 = vst [vmem:[#allocation3 + $0x240] sm:$0xf0] %v1527
      %1544 = vst [vmem:[#allocation3 + $0x248] sm:$0xf0] %v1528
      %1545 = vst [vmem:[#allocation3 + $0x250] sm:$0xf0] %v1529
      %1546 = vst [vmem:[#allocation3 + $0x258] sm:$0xf0] %v1530
      %1547 = vst [vmem:[#allocation3 + $0x260] sm:$0xf0] %v1531
      %1548 = vst [vmem:[#allocation3 + $0x268] sm:$0xf0] %v1532
      %1549 = vst [vmem:[#allocation3 + $0x270] sm:$0xf0] %v1533
      %1550 = vst [vmem:[#allocation3 + $0x278] sm:$0xf0] %v1534
      %v1551 = vld [vmem:[#allocation2 + $0x4] sm:$0xff]
      %v1552 = vld [vmem:[#allocation2 + $0xc] sm:$0xff]
      %v1553 = vld [vmem:[#allocation2 + $0x14] sm:$0xff]
      %v1554 = vld [vmem:[#allocation2 + $0x1c] sm:$0xff]
      %v1555 = vld [vmem:[#allocation2 + $0x24] sm:$0xf]
      %v1561 = vcombine.high %v1551, %v1551
      %v1562 = vcombine.high %v1552, %v1552
      %v1563 = vcombine.high %v1553, %v1553
      %v1564 = vcombine.high %v1554, %v1554
      %1565 = vrot.lane.b32.xlu0 %v1551, 37
      %v1566 = vpop.permute.xlu0 %1565
      %1567 = vrot.lane.b32.xlu0 %v1561, 37
      %v1568 = vpop.permute.xlu0 %1567
      %1569 = vrot.lane.b32.xlu0 %v1552, 37
      %v1570 = vpop.permute.xlu0 %1569
      %1571 = vrot.lane.b32.xlu0 %v1562, 37
      %v1572 = vpop.permute.xlu0 %1571
      %1573 = vrot.lane.b32.xlu0 %v1553, 37
      %v1574 = vpop.permute.xlu0 %1573
      %1575 = vrot.lane.b32.xlu0 %v1563, 37
      %v1576 = vpop.permute.xlu0 %1575
      %1577 = vrot.lane.b32.xlu0 %v1554, 37
      %v1578 = vpop.permute.xlu0 %1577
      %1579 = vrot.lane.b32.xlu0 %v1564, 37
      %v1580 = vpop.permute.xlu0 %1579
      %1581 = vrot.lane.b32.xlu0 %v1555, 37
      %v1582 = vpop.permute.xlu0 %1581
      %vm1583 = vcmask 302080
      %v1584 = vsel %vm1583, %v1566, %v1568
      %v1585 = vsel %vm1583, %v1568, %v1570
      %v1586 = vsel %vm1583, %v1570, %v1572
      %v1587 = vsel %vm1583, %v1572, %v1574
      %v1588 = vsel %vm1583, %v1574, %v1576
      %v1589 = vsel %vm1583, %v1576, %v1578
      %v1590 = vsel %vm1583, %v1578, %v1580
      %v1591 = vsel %vm1583, %v1580, %v1582
      %1600 = vst [vmem:[#allocation3 + $0x280] sm:$0xf] %v1584
      %1601 = vst [vmem:[#allocation3 + $0x288] sm:$0xf] %v1585
      %1602 = vst [vmem:[#allocation3 + $0x290] sm:$0xf] %v1586
      %1603 = vst [vmem:[#allocation3 + $0x298] sm:$0xf] %v1587
      %1604 = vst [vmem:[#allocation3 + $0x2a0] sm:$0xf] %v1588
      %1605 = vst [vmem:[#allocation3 + $0x2a8] sm:$0xf] %v1589
      %1606 = vst [vmem:[#allocation3 + $0x2b0] sm:$0xf] %v1590
      %1607 = vst [vmem:[#allocation3 + $0x2b8] sm:$0xf] %v1591
      %v1608 = vld [vmem:[#allocation2 + $0x4] sm:$0xff]
      %v1609 = vld [vmem:[#allocation2 + $0xc] sm:$0xff]
      %v1610 = vld [vmem:[#allocation2 + $0x14] sm:$0xff]
      %v1611 = vld [vmem:[#allocation2 + $0x1c] sm:$0xff]
      %v1612 = vld [vmem:[#allocation2 + $0x24] sm:$0xf]
      %v1618 = vcombine.low %v1608, %v1608
      %v1619 = vcombine.low %v1609, %v1609
      %v1620 = vcombine.low %v1610, %v1610
      %v1621 = vcombine.low %v1611, %v1611
      %v1622 = vcombine.low %v1612, %v1612
      %1623 = vrot.lane.b32.xlu0 %v1618, 29
      %v1624 = vpop.permute.xlu0 %1623
      %1625 = vrot.lane.b32.xlu0 %v1608, 29
      %v1626 = vpop.permute.xlu0 %1625
      %1627 = vrot.lane.b32.xlu0 %v1619, 29
      %v1628 = vpop.permute.xlu0 %1627
      %1629 = vrot.lane.b32.xlu0 %v1609, 29
      %v1630 = vpop.permute.xlu0 %1629
      %1631 = vrot.lane.b32.xlu0 %v1620, 29
      %v1632 = vpop.permute.xlu0 %1631
      %1633 = vrot.lane.b32.xlu0 %v1610, 29
      %v1634 = vpop.permute.xlu0 %1633
      %1635 = vrot.lane.b32.xlu0 %v1621, 29
      %v1636 = vpop.permute.xlu0 %1635
      %1637 = vrot.lane.b32.xlu0 %v1611, 29
      %v1638 = vpop.permute.xlu0 %1637
      %1639 = vrot.lane.b32.xlu0 %v1622, 29
      %v1640 = vpop.permute.xlu0 %1639
      %vm1641 = vcmask 236544
      %v1642 = vsel %vm1641, %v1624, %v1626
      %v1643 = vsel %vm1641, %v1626, %v1628
      %v1644 = vsel %vm1641, %v1628, %v1630
      %v1645 = vsel %vm1641, %v1630, %v1632
      %v1646 = vsel %vm1641, %v1632, %v1634
      %v1647 = vsel %vm1641, %v1634, %v1636
      %v1648 = vsel %vm1641, %v1636, %v1638
      %v1649 = vsel %vm1641, %v1638, %v1640
      %1658 = vst [vmem:[#allocation3 + $0x280] sm:$0xf0] %v1642
      %1659 = vst [vmem:[#allocation3 + $0x288] sm:$0xf0] %v1643
      %1660 = vst [vmem:[#allocation3 + $0x290] sm:$0xf0] %v1644
      %1661 = vst [vmem:[#allocation3 + $0x298] sm:$0xf0] %v1645
      %1662 = vst [vmem:[#allocation3 + $0x2a0] sm:$0xf0] %v1646
      %1663 = vst [vmem:[#allocation3 + $0x2a8] sm:$0xf0] %v1647
      %1664 = vst [vmem:[#allocation3 + $0x2b0] sm:$0xf0] %v1648
      %1665 = vst [vmem:[#allocation3 + $0x2b8] sm:$0xf0] %v1649
      %v1666 = vld [vmem:[#allocation2 + $0x4] sm:$0xff]
      %v1667 = vld [vmem:[#allocation2 + $0xc] sm:$0xff]
      %v1668 = vld [vmem:[#allocation2 + $0x14] sm:$0xff]
      %v1669 = vld [vmem:[#allocation2 + $0x1c] sm:$0xff]
      %v1670 = vld [vmem:[#allocation2 + $0x24] sm:$0xf]
      %v1676 = vcombine.high %v1666, %v1666
      %v1677 = vcombine.high %v1667, %v1667
      %v1678 = vcombine.high %v1668, %v1668
      %v1679 = vcombine.high %v1669, %v1669
      %1680 = vrot.lane.b32.xlu0 %v1666, 28
      %v1681 = vpop.permute.xlu0 %1680
      %1682 = vrot.lane.b32.xlu0 %v1676, 28
      %v1683 = vpop.permute.xlu0 %1682
      %1684 = vrot.lane.b32.xlu0 %v1667, 28
      %v1685 = vpop.permute.xlu0 %1684
      %1686 = vrot.lane.b32.xlu0 %v1677, 28
      %v1687 = vpop.permute.xlu0 %1686
      %1688 = vrot.lane.b32.xlu0 %v1668, 28
      %v1689 = vpop.permute.xlu0 %1688
      %1690 = vrot.lane.b32.xlu0 %v1678, 28
      %v1691 = vpop.permute.xlu0 %1690
      %1692 = vrot.lane.b32.xlu0 %v1669, 28
      %v1693 = vpop.permute.xlu0 %1692
      %1694 = vrot.lane.b32.xlu0 %v1679, 28
      %v1695 = vpop.permute.xlu0 %1694
      %1696 = vrot.lane.b32.xlu0 %v1670, 28
      %v1697 = vpop.permute.xlu0 %1696
      %vm1698 = vcmask 228352
      %v1699 = vsel %vm1698, %v1681, %v1683
      %v1700 = vsel %vm1698, %v1683, %v1685
      %v1701 = vsel %vm1698, %v1685, %v1687
      %v1702 = vsel %vm1698, %v1687, %v1689
      %v1703 = vsel %vm1698, %v1689, %v1691
      %v1704 = vsel %vm1698, %v1691, %v1693
      %v1705 = vsel %vm1698, %v1693, %v1695
      %v1706 = vsel %vm1698, %v1695, %v1697
      %1715 = vst [vmem:[#allocation3 + $0x2c0] sm:$0xf] %v1699
      %1716 = vst [vmem:[#allocation3 + $0x2c8] sm:$0xf] %v1700
      %1717 = vst [vmem:[#allocation3 + $0x2d0] sm:$0xf] %v1701
      %1718 = vst [vmem:[#allocation3 + $0x2d8] sm:$0xf] %v1702
      %1719 = vst [vmem:[#allocation3 + $0x2e0] sm:$0xf] %v1703
      %1720 = vst [vmem:[#allocation3 + $0x2e8] sm:$0xf] %v1704
      %1721 = vst [vmem:[#allocation3 + $0x2f0] sm:$0xf] %v1705
      %1722 = vst [vmem:[#allocation3 + $0x2f8] sm:$0xf] %v1706
      %v1723 = vld [vmem:[#allocation2 + $0x4] sm:$0xff]
      %v1724 = vld [vmem:[#allocation2 + $0xc] sm:$0xff]
      %v1725 = vld [vmem:[#allocation2 + $0x14] sm:$0xff]
      %v1726 = vld [vmem:[#allocation2 + $0x1c] sm:$0xff]
      %v1727 = vld [vmem:[#allocation2 + $0x24] sm:$0xf]
      %v1733 = vcombine.low %v1723, %v1723
      %v1734 = vcombine.low %v1724, %v1724
      %v1735 = vcombine.low %v1725, %v1725
      %v1736 = vcombine.low %v1726, %v1726
      %v1737 = vcombine.low %v1727, %v1727
      %1738 = vrot.lane.b32.xlu0 %v1733, 27
      %v1739 = vpop.permute.xlu0 %1738
      %1740 = vrot.lane.b32.xlu0 %v1723, 27
      %v1741 = vpop.permute.xlu0 %1740
      %1742 = vrot.lane.b32.xlu0 %v1734, 27
      %v1743 = vpop.permute.xlu0 %1742
      %1744 = vrot.lane.b32.xlu0 %v1724, 27
      %v1745 = vpop.permute.xlu0 %1744
      %1746 = vrot.lane.b32.xlu0 %v1735, 27
      %v1747 = vpop.permute.xlu0 %1746
      %1748 = vrot.lane.b32.xlu0 %v1725, 27
      %v1749 = vpop.permute.xlu0 %1748
      %1750 = vrot.lane.b32.xlu0 %v1736, 27
      %v1751 = vpop.permute.xlu0 %1750
      %1752 = vrot.lane.b32.xlu0 %v1726, 27
      %v1753 = vpop.permute.xlu0 %1752
      %1754 = vrot.lane.b32.xlu0 %v1737, 27
      %v1755 = vpop.permute.xlu0 %1754
      %vm1756 = vcmask 220160
      %v1757 = vsel %vm1756, %v1739, %v1741
      %v1758 = vsel %vm1756, %v1741, %v1743
      %v1759 = vsel %vm1756, %v1743, %v1745
      %v1760 = vsel %vm1756, %v1745, %v1747
      %v1761 = vsel %vm1756, %v1747, %v1749
      %v1762 = vsel %vm1756, %v1749, %v1751
      %v1763 = vsel %vm1756, %v1751, %v1753
      %v1764 = vsel %vm1756, %v1753, %v1755
      %1773 = vst [vmem:[#allocation3 + $0x2c0] sm:$0xf0] %v1757
      %1774 = vst [vmem:[#allocation3 + $0x2c8] sm:$0xf0] %v1758
      %1775 = vst [vmem:[#allocation3 + $0x2d0] sm:$0xf0] %v1759
      %1776 = vst [vmem:[#allocation3 + $0x2d8] sm:$0xf0] %v1760
      %1777 = vst [vmem:[#allocation3 + $0x2e0] sm:$0xf0] %v1761
      %1778 = vst [vmem:[#allocation3 + $0x2e8] sm:$0xf0] %v1762
      %1779 = vst [vmem:[#allocation3 + $0x2f0] sm:$0xf0] %v1763
      %1780 = vst [vmem:[#allocation3 + $0x2f8] sm:$0xf0] %v1764
      %v1781 = vld [vmem:[#allocation2 + $0x4] sm:$0xff]
      %v1782 = vld [vmem:[#allocation2 + $0xc] sm:$0xff]
      %v1783 = vld [vmem:[#allocation2 + $0x14] sm:$0xff]
      %v1784 = vld [vmem:[#allocation2 + $0x1c] sm:$0xff]
      %v1785 = vld [vmem:[#allocation2 + $0x24] sm:$0xf]
      %v1791 = vcombine.high %v1781, %v1781
      %v1792 = vcombine.high %v1782, %v1782
      %v1793 = vcombine.high %v1783, %v1783
      %v1794 = vcombine.high %v1784, %v1784
      %1795 = vrot.lane.b32.xlu0 %v1781, 19
      %v1796 = vpop.permute.xlu0 %1795
      %1797 = vrot.lane.b32.xlu0 %v1791, 19
      %v1798 = vpop.permute.xlu0 %1797
      %1799 = vrot.lane.b32.xlu0 %v1782, 19
      %v1800 = vpop.permute.xlu0 %1799
      %1801 = vrot.lane.b32.xlu0 %v1792, 19
      %v1802 = vpop.permute.xlu0 %1801
      %1803 = vrot.lane.b32.xlu0 %v1783, 19
      %v1804 = vpop.permute.xlu0 %1803
      %1805 = vrot.lane.b32.xlu0 %v1793, 19
      %v1806 = vpop.permute.xlu0 %1805
      %1807 = vrot.lane.b32.xlu0 %v1784, 19
      %v1808 = vpop.permute.xlu0 %1807
      %1809 = vrot.lane.b32.xlu0 %v1794, 19
      %v1810 = vpop.permute.xlu0 %1809
      %1811 = vrot.lane.b32.xlu0 %v1785, 19
      %v1812 = vpop.permute.xlu0 %1811
      %vm1813 = vcmask 154624
      %v1814 = vsel %vm1813, %v1796, %v1798
      %v1815 = vsel %vm1813, %v1798, %v1800
      %v1816 = vsel %vm1813, %v1800, %v1802
      %v1817 = vsel %vm1813, %v1802, %v1804
      %v1818 = vsel %vm1813, %v1804, %v1806
      %v1819 = vsel %vm1813, %v1806, %v1808
      %v1820 = vsel %vm1813, %v1808, %v1810
      %v1821 = vsel %vm1813, %v1810, %v1812
      %1830 = vst [vmem:[#allocation3 + $0x300] sm:$0xf] %v1814
      %1831 = vst [vmem:[#allocation3 + $0x308] sm:$0xf] %v1815
      %1832 = vst [vmem:[#allocation3 + $0x310] sm:$0xf] %v1816
      %1833 = vst [vmem:[#allocation3 + $0x318] sm:$0xf] %v1817
      %1834 = vst [vmem:[#allocation3 + $0x320] sm:$0xf] %v1818
      %1835 = vst [vmem:[#allocation3 + $0x328] sm:$0xf] %v1819
      %1836 = vst [vmem:[#allocation3 + $0x330] sm:$0xf] %v1820
      %1837 = vst [vmem:[#allocation3 + $0x338] sm:$0xf] %v1821
      %v1838 = vld [vmem:[#allocation2 + $0x4] sm:$0xff]
      %v1839 = vld [vmem:[#allocation2 + $0xc] sm:$0xff]
      %v1840 = vld [vmem:[#allocation2 + $0x14] sm:$0xff]
      %v1841 = vld [vmem:[#allocation2 + $0x1c] sm:$0xff]
      %v1842 = vld [vmem:[#allocation2 + $0x24] sm:$0xf]
      %v1848 = vcombine.low %v1838, %v1838
      %v1849 = vcombine.low %v1839, %v1839
      %v1850 = vcombine.low %v1840, %v1840
      %v1851 = vcombine.low %v1841, %v1841
      %v1852 = vcombine.low %v1842, %v1842
      %1853 = vrot.lane.b32.xlu0 %v1848, 18
      %v1854 = vpop.permute.xlu0 %1853
      %1855 = vrot.lane.b32.xlu0 %v1838, 18
      %v1856 = vpop.permute.xlu0 %1855
      %1857 = vrot.lane.b32.xlu0 %v1849, 18
      %v1858 = vpop.permute.xlu0 %1857
      %1859 = vrot.lane.b32.xlu0 %v1839, 18
      %v1860 = vpop.permute.xlu0 %1859
      %1861 = vrot.lane.b32.xlu0 %v1850, 18
      %v1862 = vpop.permute.xlu0 %1861
      %1863 = vrot.lane.b32.xlu0 %v1840, 18
      %v1864 = vpop.permute.xlu0 %1863
      %1865 = vrot.lane.b32.xlu0 %v1851, 18
      %v1866 = vpop.permute.xlu0 %1865
      %1867 = vrot.lane.b32.xlu0 %v1841, 18
      %v1868 = vpop.permute.xlu0 %1867
      %1869 = vrot.lane.b32.xlu0 %v1852, 18
      %v1870 = vpop.permute.xlu0 %1869
      %vm1871 = vcmask 146432
      %v1872 = vsel %vm1871, %v1854, %v1856
      %v1873 = vsel %vm1871, %v1856, %v1858
      %v1874 = vsel %vm1871, %v1858, %v1860
      %v1875 = vsel %vm1871, %v1860, %v1862
      %v1876 = vsel %vm1871, %v1862, %v1864
      %v1877 = vsel %vm1871, %v1864, %v1866
      %v1878 = vsel %vm1871, %v1866, %v1868
      %v1879 = vsel %vm1871, %v1868, %v1870
      %1888 = vst [vmem:[#allocation3 + $0x300] sm:$0xf0] %v1872
      %1889 = vst [vmem:[#allocation3 + $0x308] sm:$0xf0] %v1873
      %1890 = vst [vmem:[#allocation3 + $0x310] sm:$0xf0] %v1874
      %1891 = vst [vmem:[#allocation3 + $0x318] sm:$0xf0] %v1875
      %1892 = vst [vmem:[#allocation3 + $0x320] sm:$0xf0] %v1876
      %1893 = vst [vmem:[#allocation3 + $0x328] sm:$0xf0] %v1877
      %1894 = vst [vmem:[#allocation3 + $0x330] sm:$0xf0] %v1878
      %1895 = vst [vmem:[#allocation3 + $0x338] sm:$0xf0] %v1879
      %v1896 = vld [vmem:[#allocation2 + $0x4] sm:$0xff]
      %v1897 = vld [vmem:[#allocation2 + $0xc] sm:$0xff]
      %v1898 = vld [vmem:[#allocation2 + $0x14] sm:$0xff]
      %v1899 = vld [vmem:[#allocation2 + $0x1c] sm:$0xff]
      %v1900 = vld [vmem:[#allocation2 + $0x24] sm:$0xf]
      %v1906 = vcombine.high %v1896, %v1896
      %v1907 = vcombine.high %v1897, %v1897
      %v1908 = vcombine.high %v1898, %v1898
      %v1909 = vcombine.high %v1899, %v1899
      %1910 = vrot.lane.b32.xlu0 %v1896, 17
      %v1911 = vpop.permute.xlu0 %1910
      %1912 = vrot.lane.b32.xlu0 %v1906, 17
      %v1913 = vpop.permute.xlu0 %1912
      %1914 = vrot.lane.b32.xlu0 %v1897, 17
      %v1915 = vpop.permute.xlu0 %1914
      %1916 = vrot.lane.b32.xlu0 %v1907, 17
      %v1917 = vpop.permute.xlu0 %1916
      %1918 = vrot.lane.b32.xlu0 %v1898, 17
      %v1919 = vpop.permute.xlu0 %1918
      %1920 = vrot.lane.b32.xlu0 %v1908, 17
      %v1921 = vpop.permute.xlu0 %1920
      %1922 = vrot.lane.b32.xlu0 %v1899, 17
      %v1923 = vpop.permute.xlu0 %1922
      %1924 = vrot.lane.b32.xlu0 %v1909, 17
      %v1925 = vpop.permute.xlu0 %1924
      %1926 = vrot.lane.b32.xlu0 %v1900, 17
      %v1927 = vpop.permute.xlu0 %1926
      %vm1928 = vcmask 138240
      %v1929 = vsel %vm1928, %v1911, %v1913
      %v1930 = vsel %vm1928, %v1913, %v1915
      %v1931 = vsel %vm1928, %v1915, %v1917
      %v1932 = vsel %vm1928, %v1917, %v1919
      %v1933 = vsel %vm1928, %v1919, %v1921
      %v1934 = vsel %vm1928, %v1921, %v1923
      %v1935 = vsel %vm1928, %v1923, %v1925
      %v1936 = vsel %vm1928, %v1925, %v1927
      %1945 = vst [vmem:[#allocation3 + $0x340] sm:$0xf] %v1929
      %1946 = vst [vmem:[#allocation3 + $0x348] sm:$0xf] %v1930
      %1947 = vst [vmem:[#allocation3 + $0x350] sm:$0xf] %v1931
      %1948 = vst [vmem:[#allocation3 + $0x358] sm:$0xf] %v1932
      %1949 = vst [vmem:[#allocation3 + $0x360] sm:$0xf] %v1933
      %1950 = vst [vmem:[#allocation3 + $0x368] sm:$0xf] %v1934
      %1951 = vst [vmem:[#allocation3 + $0x370] sm:$0xf] %v1935
      %1952 = vst [vmem:[#allocation3 + $0x378] sm:$0xf] %v1936
      %v1953 = vld [vmem:[%s4] sm:$0xf]
      %v1954 = vld [vmem:[#allocation3] sm:$0xff]
      %v1955 = vld [vmem:[#allocation3 + $0x8] sm:$0xff]
      %v1956 = vld [vmem:[#allocation3 + $0x10] sm:$0xff]
      %v1957 = vld [vmem:[#allocation3 + $0x18] sm:$0xff]
      %v1958 = vld [vmem:[#allocation3 + $0x20] sm:$0xff]
      %v1959 = vld [vmem:[#allocation3 + $0x28] sm:$0xff]
      %v1960 = vld [vmem:[#allocation3 + $0x30] sm:$0xff]
      %v1961 = vld [vmem:[#allocation3 + $0x38] sm:$0xff]
      %v1962 = vld [vmem:[#allocation3 + $0x40] sm:$0xff]
      %v1963 = vld [vmem:[#allocation3 + $0x48] sm:$0xff]
      %v1964 = vld [vmem:[#allocation3 + $0x50] sm:$0xff]
      %v1965 = vld [vmem:[#allocation3 + $0x58] sm:$0xff]
      %v1966 = vld [vmem:[#allocation3 + $0x60] sm:$0xff]
      %v1967 = vld [vmem:[#allocation3 + $0x68] sm:$0xff]
      %v1968 = vld [vmem:[#allocation3 + $0x70] sm:$0xff]
      %v1969 = vld [vmem:[#allocation3 + $0x78] sm:$0xff]
      %v1970 = vld [vmem:[#allocation3 + $0x80] sm:$0xff]
      %v1971 = vld [vmem:[#allocation3 + $0x88] sm:$0xff]
      %v1972 = vld [vmem:[#allocation3 + $0x90] sm:$0xff]
      %v1973 = vld [vmem:[#allocation3 + $0x98] sm:$0xff]
      %v1974 = vld [vmem:[#allocation3 + $0xa0] sm:$0xff]
      %v1975 = vld [vmem:[#allocation3 + $0xa8] sm:$0xff]
      %v1976 = vld [vmem:[#allocation3 + $0xb0] sm:$0xff]
      %v1977 = vld [vmem:[#allocation3 + $0xb8] sm:$0xff]
      %v1978 = vld [vmem:[#allocation3 + $0xc0] sm:$0xff]
      %v1979 = vld [vmem:[#allocation3 + $0xc8] sm:$0xff]
      %v1980 = vld [vmem:[#allocation3 + $0xd0] sm:$0xff]
      %v1981 = vld [vmem:[#allocation3 + $0xd8] sm:$0xff]
      %v1982 = vld [vmem:[#allocation3 + $0xe0] sm:$0xff]
      %v1983 = vld [vmem:[#allocation3 + $0xe8] sm:$0xff]
      %v1984 = vld [vmem:[#allocation3 + $0xf0] sm:$0xff]
      %v1985 = vld [vmem:[#allocation3 + $0xf8] sm:$0xff]
      %v1986 = vld [vmem:[#allocation3 + $0x100] sm:$0xff]
      %v1987 = vld [vmem:[#allocation3 + $0x108] sm:$0xff]
      %v1988 = vld [vmem:[#allocation3 + $0x110] sm:$0xff]
      %v1989 = vld [vmem:[#allocation3 + $0x118] sm:$0xff]
      %v1990 = vld [vmem:[#allocation3 + $0x120] sm:$0xff]
      %v1991 = vld [vmem:[#allocation3 + $0x128] sm:$0xff]
      %v1992 = vld [vmem:[#allocation3 + $0x130] sm:$0xff]
      %v1993 = vld [vmem:[#allocation3 + $0x138] sm:$0xff]
      %v1994 = vld [vmem:[#allocation3 + $0x140] sm:$0xff]
      %v1995 = vld [vmem:[#allocation3 + $0x148] sm:$0xff]
      %v1996 = vld [vmem:[#allocation3 + $0x150] sm:$0xff]
      %v1997 = vld [vmem:[#allocation3 + $0x158] sm:$0xff]
      %v1998 = vld [vmem:[#allocation3 + $0x160] sm:$0xff]
      %v1999 = vld [vmem:[#allocation3 + $0x168] sm:$0xff]
      %v2000 = vld [vmem:[#allocation3 + $0x170] sm:$0xff]
      %v2001 = vld [vmem:[#allocation3 + $0x178] sm:$0xff]
      %v2002 = vld [vmem:[#allocation3 + $0x180] sm:$0xff]
      %v2003 = vld [vmem:[#allocation3 + $0x188] sm:$0xff]
      %v2004 = vld [vmem:[#allocation3 + $0x190] sm:$0xff]
      %v2005 = vld [vmem:[#allocation3 + $0x198] sm:$0xff]
      %v2006 = vld [vmem:[#allocation3 + $0x1a0] sm:$0xff]
      %v2007 = vld [vmem:[#allocation3 + $0x1a8] sm:$0xff]
      %v2008 = vld [vmem:[#allocation3 + $0x1b0] sm:$0xff]
      %v2009 = vld [vmem:[#allocation3 + $0x1b8] sm:$0xff]
      %v2010 = vld [vmem:[#allocation3 + $0x1c0] sm:$0xff]
      %v2011 = vld [vmem:[#allocation3 + $0x1c8] sm:$0xff]
      %v2012 = vld [vmem:[#allocation3 + $0x1d0] sm:$0xff]
      %v2013 = vld [vmem:[#allocation3 + $0x1d8] sm:$0xff]
      %v2014 = vld [vmem:[#allocation3 + $0x1e0] sm:$0xff]
      %v2015 = vld [vmem:[#allocation3 + $0x1e8] sm:$0xff]
      %v2016 = vld [vmem:[#allocation3 + $0x1f0] sm:$0xff]
      %v2017 = vld [vmem:[#allocation3 + $0x1f8] sm:$0xff]
      %v2018 = vld [vmem:[#allocation3 + $0x200] sm:$0xff]
      %v2019 = vld [vmem:[#allocation3 + $0x208] sm:$0xff]
      %v2020 = vld [vmem:[#allocation3 + $0x210] sm:$0xff]
      %v2021 = vld [vmem:[#allocation3 + $0x218] sm:$0xff]
      %v2022 = vld [vmem:[#allocation3 + $0x220] sm:$0xff]
      %v2023 = vld [vmem:[#allocation3 + $0x228] sm:$0xff]
      %v2024 = vld [vmem:[#allocation3 + $0x230] sm:$0xff]
      %v2025 = vld [vmem:[#allocation3 + $0x238] sm:$0xff]
      %v2026 = vld [vmem:[#allocation3 + $0x240] sm:$0xff]
      %v2027 = vld [vmem:[#allocation3 + $0x248] sm:$0xff]
      %v2028 = vld [vmem:[#allocation3 + $0x250] sm:$0xff]
      %v2029 = vld [vmem:[#allocation3 + $0x258] sm:$0xff]
      %v2030 = vld [vmem:[#allocation3 + $0x260] sm:$0xff]
      %v2031 = vld [vmem:[#allocation3 + $0x268] sm:$0xff]
      %v2032 = vld [vmem:[#allocation3 + $0x270] sm:$0xff]
      %v2033 = vld [vmem:[#allocation3 + $0x278] sm:$0xff]
      %v2034 = vld [vmem:[#allocation3 + $0x280] sm:$0xff]
      %v2035 = vld [vmem:[#allocation3 + $0x288] sm:$0xff]
      %v2036 = vld [vmem:[#allocation3 + $0x290] sm:$0xff]
      %v2037 = vld [vmem:[#allocation3 + $0x298] sm:$0xff]
      %v2038 = vld [vmem:[#allocation3 + $0x2a0] sm:$0xff]
      %v2039 = vld [vmem:[#allocation3 + $0x2a8] sm:$0xff]
      %v2040 = vld [vmem:[#allocation3 + $0x2b0] sm:$0xff]
      %v2041 = vld [vmem:[#allocation3 + $0x2b8] sm:$0xff]
      %v2042 = vld [vmem:[#allocation3 + $0x2c0] sm:$0xff]
      %v2043 = vld [vmem:[#allocation3 + $0x2c8] sm:$0xff]
      %v2044 = vld [vmem:[#allocation3 + $0x2d0] sm:$0xff]
      %v2045 = vld [vmem:[#allocation3 + $0x2d8] sm:$0xff]
      %v2046 = vld [vmem:[#allocation3 + $0x2e0] sm:$0xff]
      %v2047 = vld [vmem:[#allocation3 + $0x2e8] sm:$0xff]
      %v2048 = vld [vmem:[#allocation3 + $0x2f0] sm:$0xff]
      %v2049 = vld [vmem:[#allocation3 + $0x2f8] sm:$0xff]
      %v2050 = vld [vmem:[#allocation3 + $0x300] sm:$0xff]
      %v2051 = vld [vmem:[#allocation3 + $0x308] sm:$0xff]
      %v2052 = vld [vmem:[#allocation3 + $0x310] sm:$0xff]
      %v2053 = vld [vmem:[#allocation3 + $0x318] sm:$0xff]
      %v2054 = vld [vmem:[#allocation3 + $0x320] sm:$0xff]
      %v2055 = vld [vmem:[#allocation3 + $0x328] sm:$0xff]
      %v2056 = vld [vmem:[#allocation3 + $0x330] sm:$0xff]
      %v2057 = vld [vmem:[#allocation3 + $0x338] sm:$0xff]
      %v2058 = vld [vmem:[#allocation3 + $0x340] sm:$0xf]
      %v2059 = vld [vmem:[#allocation3 + $0x348] sm:$0xf]
      %v2060 = vld [vmem:[#allocation3 + $0x350] sm:$0xf]
      %v2061 = vld [vmem:[#allocation3 + $0x358] sm:$0xf]
      %v2062 = vld [vmem:[#allocation3 + $0x360] sm:$0xf]
      %v2063 = vld [vmem:[#allocation3 + $0x368] sm:$0xf]
      %v2064 = vld [vmem:[#allocation3 + $0x370] sm:$0xf]
      %v2065 = vld [vmem:[#allocation3 + $0x378] sm:$0xf]
      %v2066 = vld [vmem:[%s5] sm:$0xf]
      %2068 = vset.pattern.permute.xlu0 0
      %2069 = vperm.xlu0 %2068, %v2066
      %v2070 = vpop.permute.xlu0 %2069
      %vm2072 = vcmask 883712
      %v2074 = vsel %vm2072, %v1953, 0
      %vm2076 = vcmask 1043456
      %v2078 = vsel %vm2076, %v2058, 0
      %v2081 = vsel %vm2076, %v2059, 0
      %v2084 = vsel %vm2076, %v2060, 0
      %v2087 = vsel %vm2076, %v2061, 0
      %v2090 = vsel %vm2076, %v2062, 0
      %v2093 = vsel %vm2076, %v2063, 0
      %v2096 = vsel %vm2076, %v2064, 0
      %v2099 = vsel %vm2076, %v2065, 0
      %2101 = vmatprep.subr.mxu0 %v1955
      %2102 = vmatpush1.msra.mxu0 %v1954
      %2103 = vmatprep.subr.mxu0 %v1963
      %2104 = vmatpush1.msra.mxu0 %v1962
      %2105 = vmatprep.subr.mxu0 %v1971
      %2106 = vmatpush1.msra.mxu0 %v1970
      %2107 = vmatprep.subr.mxu0 %v1979
      %2108 = vmatpush1.msra.mxu0 %v1978
      %2109 = vmatprep.subr.mxu0 %v1987
      %2110 = vmatpush1.msra.mxu0 %v1986
      %2111 = vmatprep.subr.mxu0 %v1995
      %2112 = vmatpush1.msra.mxu0 %v1994
      %2113 = vmatprep.subr.mxu0 %v2003
      %2114 = vmatpush1.msra.mxu0 %v2002
      %2115 = vmatprep.subr.mxu0 %v2011
      %2116 = vmatpush1.msra.mxu0 %v2010
      %2117 = vmatprep.subr.mxu0 %v2019
      %2118 = vmatpush1.msra.mxu0 %v2018
      %2119 = vmatprep.subr.mxu0 %v2027
      %2120 = vmatpush1.msra.mxu0 %v2026
      %2121 = vmatprep.subr.mxu0 %v2035
      %2122 = vmatpush1.msra.mxu0 %v2034
      %2123 = vmatprep.subr.mxu0 %v2043
      %2124 = vmatpush1.msra.mxu0 %v2042
      %2125 = vmatprep.subr.mxu0 %v2051
      %2126 = vmatpush1.msra.mxu0 %v2050
      %2127 = vmatprep.subr.mxu0 %v2081
      %2128 = vmatpush1.msra.mxu0 %v2078
      %2129 = vmatprep.subr.mxu0 0.0
      %2130 = vmatpush1.msra.mxu0 0.0
      %2131 = vmatprep.subr.mxu0 0.0
      %2132 = vmatpush1.msra.mxu0 0.0
      %2133 = vmatprep.subr.mxu0 0.0
      %2134 = vmatpush1.msra.mxu0 0.0
      %2135 = vmatprep.subr.mxu0 0.0
      %2136 = vmatpush1.msra.mxu0 0.0
      %2137 = vmatprep.subr.mxu0 0.0
      %2138 = vmatpush1.msra.mxu0 0.0
      %2139 = vmatprep.subr.mxu0 0.0
      %2140 = vmatpush1.msra.mxu0 0.0
      %2141 = vmatprep.subr.mxu0 0.0
      %2142 = vmatpush1.msra.mxu0 0.0
      %2143 = vmatprep.subr.mxu0 0.0
      %2144 = vmatpush1.msra.mxu0 0.0
      %2145 = vmatprep.subr.mxu0 0.0
      %2146 = vmatpush1.msra.mxu0 0.0
      %2147 = vmatprep.subr.mxu0 0.0
      %2148 = vmatpush1.msra.mxu0 0.0
      %2149 = vmatprep.subr.mxu0 0.0
      %2150 = vmatpush1.msra.mxu0 0.0
      %2151 = vmatprep.subr.mxu0 0.0
      %2152 = vmatpush1.msra.mxu0 0.0
      %2153 = vmatprep.subr.mxu0 0.0
      %2154 = vmatpush1.msra.mxu0 0.0
      %2155 = vmatprep.subr.mxu0 0.0
      %2156 = vmatpush1.msra.mxu0 0.0
      %2157 = vmatprep.subr.mxu0 0.0
      %2158 = vmatpush1.msra.mxu0 0.0
      %2159 = vmatprep.subr.mxu0 0.0
      %2160 = vmatpush1.msra.mxu0 0.0
      %2161 = vmatprep.subr.mxu0 0.0
      %2162 = vmatpush1.msra.mxu0 0.0
      %2163 = vmatprep.subr.mxu0 0.0
      %2164 = vmatpush1.msra.mxu0 0.0
      %2165 = vmatprep.mubr.f32.mxu0 0.0
      %2166 = vmatmul.mubr.f32.gmra.mrb[0].mxu0 %v2074
      %v2167 = vpop.f32.mrb[0].mxu0
      %v2168 = vadd.f32 %v2070, %v2167
      %v2169 = vpop.f32.mrb[0].mxu0
      %v2170 = vadd.f32 %v2070, %v2169
      %2171 = vdwg.mxu0
      %2172 = vmatprep.subr.mxu0 %v1957
      %2173 = vmatpush1.msra.mxu0 %v1956
      %2174 = vmatprep.subr.mxu0 %v1965
      %2175 = vmatpush1.msra.mxu0 %v1964
      %2176 = vmatprep.subr.mxu0 %v1973
      %2177 = vmatpush1.msra.mxu0 %v1972
      %2178 = vmatprep.subr.mxu0 %v1981
      %2179 = vmatpush1.msra.mxu0 %v1980
      %2180 = vmatprep.subr.mxu0 %v1989
      %2181 = vmatpush1.msra.mxu0 %v1988
      %2182 = vmatprep.subr.mxu0 %v1997
      %2183 = vmatpush1.msra.mxu0 %v1996
      %2184 = vmatprep.subr.mxu0 %v2005
      %2185 = vmatpush1.msra.mxu0 %v2004
      %2186 = vmatprep.subr.mxu0 %v2013
      %2187 = vmatpush1.msra.mxu0 %v2012
      %2188 = vmatprep.subr.mxu0 %v2021
      %2189 = vmatpush1.msra.mxu0 %v2020
      %2190 = vmatprep.subr.mxu0 %v2029
      %2191 = vmatpush1.msra.mxu0 %v2028
      %2192 = vmatprep.subr.mxu0 %v2037
      %2193 = vmatpush1.msra.mxu0 %v2036
      %2194 = vmatprep.subr.mxu0 %v2045
      %2195 = vmatpush1.msra.mxu0 %v2044
      %2196 = vmatprep.subr.mxu0 %v2053
      %2197 = vmatpush1.msra.mxu0 %v2052
      %2198 = vmatprep.subr.mxu0 %v2087
      %2199 = vmatpush1.msra.mxu0 %v2084
      %2200 = vmatprep.subr.mxu0 0.0
      %2201 = vmatpush1.msra.mxu0 0.0
      %2202 = vmatprep.subr.mxu0 0.0
      %2203 = vmatpush1.msra.mxu0 0.0
      %2204 = vmatprep.subr.mxu0 0.0
      %2205 = vmatpush1.msra.mxu0 0.0
      %2206 = vmatprep.subr.mxu0 0.0
      %2207 = vmatpush1.msra.mxu0 0.0
      %2208 = vmatprep.subr.mxu0 0.0
      %2209 = vmatpush1.msra.mxu0 0.0
      %2210 = vmatprep.subr.mxu0 0.0
      %2211 = vmatpush1.msra.mxu0 0.0
      %2212 = vmatprep.subr.mxu0 0.0
      %2213 = vmatpush1.msra.mxu0 0.0
      %2214 = vmatprep.subr.mxu0 0.0
      %2215 = vmatpush1.msra.mxu0 0.0
      %2216 = vmatprep.subr.mxu0 0.0
      %2217 = vmatpush1.msra.mxu0 0.0
      %2218 = vmatprep.subr.mxu0 0.0
      %2219 = vmatpush1.msra.mxu0 0.0
      %2220 = vmatprep.subr.mxu0 0.0
      %2221 = vmatpush1.msra.mxu0 0.0
      %2222 = vmatprep.subr.mxu0 0.0
      %2223 = vmatpush1.msra.mxu0 0.0
      %2224 = vmatprep.subr.mxu0 0.0
      %2225 = vmatpush1.msra.mxu0 0.0
      %2226 = vmatprep.subr.mxu0 0.0
      %2227 = vmatpush1.msra.mxu0 0.0
      %2228 = vmatprep.subr.mxu0 0.0
      %2229 = vmatpush1.msra.mxu0 0.0
      %2230 = vmatprep.subr.mxu0 0.0
      %2231 = vmatpush1.msra.mxu0 0.0
      %2232 = vmatprep.subr.mxu0 0.0
      %2233 = vmatpush1.msra.mxu0 0.0
      %2234 = vmatprep.subr.mxu0 0.0
      %2235 = vmatpush1.msra.mxu0 0.0
      %2236 = vmatprep.mubr.f32.mxu0 0.0
      %2237 = vmatmul.mubr.f32.gmra.mrb[0].mxu0 %v2074
      %v2238 = vpop.f32.mrb[0].mxu0
      %v2239 = vadd.f32 %v2070, %v2238
      %v2240 = vpop.f32.mrb[0].mxu0
      %v2241 = vadd.f32 %v2070, %v2240
      %2242 = vdwg.mxu0
      %2243 = vmatprep.subr.mxu0 %v1959
      %2244 = vmatpush1.msra.mxu0 %v1958
      %2245 = vmatprep.subr.mxu0 %v1967
      %2246 = vmatpush1.msra.mxu0 %v1966
      %2247 = vmatprep.subr.mxu0 %v1975
      %2248 = vmatpush1.msra.mxu0 %v1974
      %2249 = vmatprep.subr.mxu0 %v1983
      %2250 = vmatpush1.msra.mxu0 %v1982
      %2251 = vmatprep.subr.mxu0 %v1991
      %2252 = vmatpush1.msra.mxu0 %v1990
      %2253 = vmatprep.subr.mxu0 %v1999
      %2254 = vmatpush1.msra.mxu0 %v1998
      %2255 = vmatprep.subr.mxu0 %v2007
      %2256 = vmatpush1.msra.mxu0 %v2006
      %2257 = vmatprep.subr.mxu0 %v2015
      %2258 = vmatpush1.msra.mxu0 %v2014
      %2259 = vmatprep.subr.mxu0 %v2023
      %2260 = vmatpush1.msra.mxu0 %v2022
      %2261 = vmatprep.subr.mxu0 %v2031
      %2262 = vmatpush1.msra.mxu0 %v2030
      %2263 = vmatprep.subr.mxu0 %v2039
      %2264 = vmatpush1.msra.mxu0 %v2038
      %2265 = vmatprep.subr.mxu0 %v2047
      %2266 = vmatpush1.msra.mxu0 %v2046
      %2267 = vmatprep.subr.mxu0 %v2055
      %2268 = vmatpush1.msra.mxu0 %v2054
      %2269 = vmatprep.subr.mxu0 %v2093
      %2270 = vmatpush1.msra.mxu0 %v2090
      %2271 = vmatprep.subr.mxu0 0.0
      %2272 = vmatpush1.msra.mxu0 0.0
      %2273 = vmatprep.subr.mxu0 0.0
      %2274 = vmatpush1.msra.mxu0 0.0
      %2275 = vmatprep.subr.mxu0 0.0
      %2276 = vmatpush1.msra.mxu0 0.0
      %2277 = vmatprep.subr.mxu0 0.0
      %2278 = vmatpush1.msra.mxu0 0.0
      %2279 = vmatprep.subr.mxu0 0.0
      %2280 = vmatpush1.msra.mxu0 0.0
      %2281 = vmatprep.subr.mxu0 0.0
      %2282 = vmatpush1.msra.mxu0 0.0
      %2283 = vmatprep.subr.mxu0 0.0
      %2284 = vmatpush1.msra.mxu0 0.0
      %2285 = vmatprep.subr.mxu0 0.0
      %2286 = vmatpush1.msra.mxu0 0.0
      %2287 = vmatprep.subr.mxu0 0.0
      %2288 = vmatpush1.msra.mxu0 0.0
      %2289 = vmatprep.subr.mxu0 0.0
      %2290 = vmatpush1.msra.mxu0 0.0
      %2291 = vmatprep.subr.mxu0 0.0
      %2292 = vmatpush1.msra.mxu0 0.0
      %2293 = vmatprep.subr.mxu0 0.0
      %2294 = vmatpush1.msra.mxu0 0.0
      %2295 = vmatprep.subr.mxu0 0.0
      %2296 = vmatpush1.msra.mxu0 0.0
      %2297 = vmatprep.subr.mxu0 0.0
      %2298 = vmatpush1.msra.mxu0 0.0
      %2299 = vmatprep.subr.mxu0 0.0
      %2300 = vmatpush1.msra.mxu0 0.0
      %2301 = vmatprep.subr.mxu0 0.0
      %2302 = vmatpush1.msra.mxu0 0.0
      %2303 = vmatprep.subr.mxu0 0.0
      %2304 = vmatpush1.msra.mxu0 0.0
      %2305 = vmatprep.subr.mxu0 0.0
      %2306 = vmatpush1.msra.mxu0 0.0
      %2307 = vmatprep.mubr.f32.mxu0 0.0
      %2308 = vmatmul.mubr.f32.gmra.mrb[0].mxu0 %v2074
      %v2309 = vpop.f32.mrb[0].mxu0
      %v2310 = vadd.f32 %v2070, %v2309
      %v2311 = vpop.f32.mrb[0].mxu0
      %v2312 = vadd.f32 %v2070, %v2311
      %2313 = vdwg.mxu0
      %2314 = vmatprep.subr.mxu0 %v1961
      %2315 = vmatpush1.msra.mxu0 %v1960
      %2316 = vmatprep.subr.mxu0 %v1969
      %2317 = vmatpush1.msra.mxu0 %v1968
      %2318 = vmatprep.subr.mxu0 %v1977
      %2319 = vmatpush1.msra.mxu0 %v1976
      %2320 = vmatprep.subr.mxu0 %v1985
      %2321 = vmatpush1.msra.mxu0 %v1984
      %2322 = vmatprep.subr.mxu0 %v1993
      %2323 = vmatpush1.msra.mxu0 %v1992
      %2324 = vmatprep.subr.mxu0 %v2001
      %2325 = vmatpush1.msra.mxu0 %v2000
      %2326 = vmatprep.subr.mxu0 %v2009
      %2327 = vmatpush1.msra.mxu0 %v2008
      %2328 = vmatprep.subr.mxu0 %v2017
      %2329 = vmatpush1.msra.mxu0 %v2016
      %2330 = vmatprep.subr.mxu0 %v2025
      %2331 = vmatpush1.msra.mxu0 %v2024
      %2332 = vmatprep.subr.mxu0 %v2033
      %2333 = vmatpush1.msra.mxu0 %v2032
      %2334 = vmatprep.subr.mxu0 %v2041
      %2335 = vmatpush1.msra.mxu0 %v2040
      %2336 = vmatprep.subr.mxu0 %v2049
      %2337 = vmatpush1.msra.mxu0 %v2048
      %2338 = vmatprep.subr.mxu0 %v2057
      %2339 = vmatpush1.msra.mxu0 %v2056
      %2340 = vmatprep.subr.mxu0 %v2099
      %2341 = vmatpush1.msra.mxu0 %v2096
      %2342 = vmatprep.subr.mxu0 0.0
      %2343 = vmatpush1.msra.mxu0 0.0
      %2344 = vmatprep.subr.mxu0 0.0
      %2345 = vmatpush1.msra.mxu0 0.0
      %2346 = vmatprep.subr.mxu0 0.0
      %2347 = vmatpush1.msra.mxu0 0.0
      %2348 = vmatprep.subr.mxu0 0.0
      %2349 = vmatpush1.msra.mxu0 0.0
      %2350 = vmatprep.subr.mxu0 0.0
      %2351 = vmatpush1.msra.mxu0 0.0
      %2352 = vmatprep.subr.mxu0 0.0
      %2353 = vmatpush1.msra.mxu0 0.0
      %2354 = vmatprep.subr.mxu0 0.0
      %2355 = vmatpush1.msra.mxu0 0.0
      %2356 = vmatprep.subr.mxu0 0.0
      %2357 = vmatpush1.msra.mxu0 0.0
      %2358 = vmatprep.subr.mxu0 0.0
      %2359 = vmatpush1.msra.mxu0 0.0
      %2360 = vmatprep.subr.mxu0 0.0
      %2361 = vmatpush1.msra.mxu0 0.0
      %2362 = vmatprep.subr.mxu0 0.0
      %2363 = vmatpush1.msra.mxu0 0.0
      %2364 = vmatprep.subr.mxu0 0.0
      %2365 = vmatpush1.msra.mxu0 0.0
      %2366 = vmatprep.subr.mxu0 0.0
      %2367 = vmatpush1.msra.mxu0 0.0
      %2368 = vmatprep.subr.mxu0 0.0
      %2369 = vmatpush1.msra.mxu0 0.0
      %2370 = vmatprep.subr.mxu0 0.0
      %2371 = vmatpush1.msra.mxu0 0.0
      %2372 = vmatprep.subr.mxu0 0.0
      %2373 = vmatpush1.msra.mxu0 0.0
      %2374 = vmatprep.subr.mxu0 0.0
      %2375 = vmatpush1.msra.mxu0 0.0
      %2376 = vmatprep.subr.mxu0 0.0
      %2377 = vmatpush1.msra.mxu0 0.0
      %2378 = vmatprep.mubr.f32.mxu0 0.0
      %2379 = vmatmul.mubr.f32.gmra.mrb[0].mxu0 %v2074
      %v2380 = vpop.f32.mrb[0].mxu0
      %v2381 = vadd.f32 %v2070, %v2380
      %v2382 = vpop.f32.mrb[0].mxu0
      %v2383 = vadd.f32 %v2070, %v2382
      %2384 = vdwg.mxu0
      %v2385 = vmax.f32 %v2168, 0.0
      %v2386 = vmax.f32 %v2170, 0.0
      %v2387 = vmax.f32 %v2239, 0.0
      %v2388 = vmax.f32 %v2241, 0.0
      %v2389 = vmax.f32 %v2310, 0.0
      %v2390 = vmax.f32 %v2312, 0.0
      %v2391 = vmax.f32 %v2381, 0.0
      %v2392 = vmax.f32 %v2383, 0.0
      %v2393 = vld [vmem:[%s405] sm:$0xff]
      %v2395 = vlaneseq
      %v2396 = vshrl.u32 %v2395, 7
      %v2397 = vsub.s32 0, %v2396
      %v2398 = vrot.slane %v2393, %v2397
      %v2399 = vlaneseq
      %v2400 = vshrl.u32 %v2399, 7
      %v2401 = vsub.s32 1, %v2400
      %v2402 = vrot.slane %v2393, %v2401
      %v2403 = vlaneseq
      %v2404 = vshrl.u32 %v2403, 7
      %v2405 = vsub.s32 2, %v2404
      %v2406 = vrot.slane %v2393, %v2405
      %v2407 = vlaneseq
      %v2408 = vshrl.u32 %v2407, 7
      %v2409 = vsub.s32 3, %v2408
      %v2410 = vrot.slane %v2393, %v2409
      %v2411 = vlaneseq
      %v2412 = vshrl.u32 %v2411, 7
      %v2413 = vsub.s32 4, %v2412
      %v2414 = vrot.slane %v2393, %v2413
      %v2415 = vlaneseq
      %v2416 = vshrl.u32 %v2415, 7
      %v2417 = vsub.s32 5, %v2416
      %v2418 = vrot.slane %v2393, %v2417
      %v2419 = vlaneseq
      %v2420 = vshrl.u32 %v2419, 7
      %v2421 = vsub.s32 6, %v2420
      %v2422 = vrot.slane %v2393, %v2421
      %v2423 = vlaneseq
      %v2424 = vshrl.u32 %v2423, 7
      %v2425 = vsub.s32 7, %v2424
      %v2426 = vrot.slane %v2393, %v2425
      %v2435 = vmul.f32 %v2385, %v2398
      %v2436 = vmul.f32 %v2386, %v2402
      %v2437 = vmul.f32 %v2387, %v2406
      %v2438 = vmul.f32 %v2388, %v2410
      %v2439 = vmul.f32 %v2389, %v2414
      %v2440 = vmul.f32 %v2390, %v2418
      %v2441 = vmul.f32 %v2391, %v2422
      %v2442 = vmul.f32 %v2392, %v2426
      %v2443 = vpack.c.bf16 %v2435, %v2435
      %v2444 = vpack.c.bf16 %v2436, %v2436
      %v2445 = vpack.c.bf16 %v2437, %v2437
      %v2446 = vpack.c.bf16 %v2438, %v2438
      %v2447 = vpack.c.bf16 %v2439, %v2439
      %v2448 = vpack.c.bf16 %v2440, %v2440
      %v2449 = vpack.c.bf16 %v2441, %v2441
      %v2450 = vpack.c.bf16 %v2442, %v2442
      %v2459 = vcombine.low %v2443, %v2444
      %v2460 = vcombine.low %v2445, %v2446
      %v2462 = vunpack.c.l.s4 1983009808
      %v2463 = vunpack.c.0.s8 %v2462
      %v2464 = vlaneseq
      %v2465 = vshrl.u32 %v2464, 7
      %v2466 = vsub.s32 %v2463, %v2465
      %v2467 = vrot.slane %v2459, %v2466
      %v2469 = vunpack.c.l.s4 1983009808
      %v2470 = vunpack.c.0.s8 %v2469
      %v2471 = vlaneseq
      %v2472 = vshrl.u32 %v2471, 7
      %v2473 = vsub.s32 %v2470, %v2472
      %v2474 = vrot.slane %v2460, %v2473
      %v2475 = vcombine.low %v2467, %v2474
      %v2476 = vcombine.low %v2447, %v2448
      %v2477 = vcombine.low %v2449, %v2450
      %v2479 = vunpack.c.l.s4 1983009808
      %v2480 = vunpack.c.0.s8 %v2479
      %v2481 = vlaneseq
      %v2482 = vshrl.u32 %v2481, 7
      %v2483 = vsub.s32 %v2480, %v2482
      %v2484 = vrot.slane %v2476, %v2483
      %v2486 = vunpack.c.l.s4 1983009808
      %v2487 = vunpack.c.0.s8 %v2486
      %v2488 = vlaneseq
      %v2489 = vshrl.u32 %v2488, 7
      %v2490 = vsub.s32 %v2487, %v2489
      %v2491 = vrot.slane %v2477, %v2490
      %v2492 = vcombine.low %v2484, %v2491
      %2495 = vst [vmem:[%s416] sm:$0xff] %v2475
      %2496 = vst [vmem:[%s416 + $0x8] sm:$0xff] %v2492
      %s2497 = sadd.s32 %s22, 1
      %s2498 = smul.u32 8, %s2497
      %p2499 = scmp.lt.s32.totalorder %s21, 1
      %s2500 = scalar_select %p2499, %s21, 1
      %p2501 = scmp.lt.s32.totalorder %s2498, 23
      %s2502 = scalar_select %p2501, %s2498, 23
      %s2503 = smul.addr %s2500, 24
      %s2504 = sadd.s32 %s2502, %s2503
      %s2505 = smul.addr %s2504, 2
      %s2506 = scalar_lea.vmem %s6, %s2505
      // Predicated region
      $region45: #{simple_rb_forward.2} parent=43 // pred_check
        %p2507 = pneg %p215
      $region46: #{simple_rb_forward.2} parent=43 // pred_check_branch
        %2509 = sbr.rel (%p2507) target = $region48
      $region47: #{simple_rb_forward.2} parent=43 // pred_region
        %s2510 = sadd.s32 %s22, 1
        %s2511 = smul.u32 8, %s2510
      $region48: #{simple_rb_forward.2} parent=43 // pred_fallthru
        _
    $region44: #{simple_rb_forward.2} parent=5 // pred_fallthru
      _
    %p2512 = scmp.le.s32.totalorder 2, %s12
    // Predicated region
    $region49: #{simple_rb_forward.2} parent=5 // pred_check
      %p2513 = pneg %p2512
    $region50: #{simple_rb_forward.2} parent=5 // pred_check_branch
      %2515 = sbr.rel (%p2513) target = $region52
    $region51: #{simple_rb_forward.2} parent=5 // pred_region
      %s2516 = ssub.s32 %s12, 2
      // Predicated region
      $region53: #{simple_rb_forward.2} parent=51 // pred_check
        %p2517 = pneg %p221
      $region54: #{simple_rb_forward.2} parent=51 // pred_check_branch
        %2519 = sbr.rel (%p2517) target = $region56
      $region55: #{simple_rb_forward.2} parent=51 // pred_region
        %s2520 = sadd.s32 %s24, 1
        %s2521 = smul.u32 8, %s2520
        %p2522 = scmp.lt.s32.totalorder %s23, 1
        %s2523 = scalar_select %p2522, %s23, 1
        %p2524 = scmp.lt.s32.totalorder %s2521, 23
        %s2525 = scalar_select %p2524, %s2521, 23
        %s2526 = smul.addr %s2523, 24
        %s2527 = sadd.s32 %s2525, %s2526
        %s2528 = smul.addr %s2527, 2
        %s2529 = scalar_lea.vmem %s6, %s2528
      $region56: #{simple_rb_forward.2} parent=51 // pred_fallthru
        _
    $region52: #{simple_rb_forward.2} parent=5 // pred_fallthru
      _
  $region6: #{simple_rb_forward.2} parent=0 // loop_footer
    %s16 = sadd.s32 1, %s12
  $region7: #{simple_rb_forward.2} parent=0 // loop_footer_branch
    %11 = sbr.rel target = $region3
  $region8: #{simple_rb_forward.2} parent=0 // loop_exit
    _

// kernel: simple_rb_forward.3
$region0: #{simple_rb_forward.3}
  #allocation0 [shape = 'u32[]', space=smem, size = 0x4, offset = 0x4, fixed_abs, tag = 'smem constant byte address 0x4 - core index']
  #allocation1 [shape = 'u32[144,128]{1,0:T(1,128)}', space=vmem, size = 0x12000, scoped, tag = 'internal scratch']
  #allocation2 [shape = 'f32[4,1280]{1,0:T(4,128)}', space=vmem, size = 0x5000, scoped, tag = 'scratch operand']
  #allocation3 [shape = 'f32[108,1024]{1,0:T(8,128)}', space=vmem, size = 0x70000, scoped, tag = 'scratch operand']
  %s0 = inlined_call_operand.vmem [shape: bf16[2,4,3072], index: 0, kind: input, shape index: {}, may-alias: {0,1,2}]
  %s1 = inlined_call_operand.vmem [shape: bf16[2,4,3072], index: 1, kind: input, shape index: {}, may-alias: {0,1,2}]
  %s2 = inlined_call_operand.vmem [shape: bf16[2,4,3072], index: 2, kind: input, shape index: {}, may-alias: {0,1,2}]
  %s3 = inlined_call_operand.vmem [shape: bf16[2,4,3072], index: 3, kind: input, shape index: {}]
  %s4 = inlined_call_operand.vmem [shape: f32[4,108], index: 4, kind: input, shape index: {}]
  %s5 = inlined_call_operand.vmem [shape: f32[4,1], index: 5, kind: input, shape index: {}]
  %s6 = inlined_call_operand.vmem [shape: f32[2,4,3072], index: 6, kind: output, shape index: {}]
  %s7 = sld [smem:[#allocation0]]
  $region57: #{simple_rb_forward.3} parent=0
    _
  %s9 = ssub.s32 1, %s7
  %s10 = scalar_select 0, %s9, %s7
  loop: start=0, step=1, limit=4
  $region2: #{simple_rb_forward.3} parent=0 // loop_pre_header
    _
  $region3: #{simple_rb_forward.3} parent=0 // loop_header
    %s12 = sphi 0, %s16
    %p13 = scmp.ge.s32.totalorder %s12, 4
    %s19 = sphi 0, %s31
    %s20 = sphi 0, %s27
    %s21 = sphi 0, %s19
    %s22 = sphi 0, %s20
    %s23 = sphi 0, %s21
    %s24 = sphi 0, %s22
    %s42 = sphi 0, %s44
    %s45 = sphi 0, %s42
    %s46 = sphi 0, %s45
    %s62 = sphi 0, %s46
    %s72 = sphi 0, %s74
    %s75 = sphi 0, %s72
    %s76 = sphi 0, %s75
    %s92 = sphi 0, %s76
    %s104 = sphi 0, %s106
    %s107 = sphi 0, %s104
    %s108 = sphi 0, %s107
    %s124 = sphi 0, %s108
    %s134 = sphi 0, %s136
    %s137 = sphi 0, %s134
    %s138 = sphi 0, %s137
    %s154 = sphi 0, %s138
    %s158 = sphi 0, %s158
    %s160 = sphi 0, %s158
    %s161 = sphi 0, %s160
    %s175 = sphi 0, %s161
    %s179 = sphi 0, %s179
    %s181 = sphi 0, %s179
    %s182 = sphi 0, %s181
    %s196 = sphi 0, %s182
    %s206 = sphi 0, %s208
    %s209 = sphi 0, %s206
    %s210 = sphi 0, %s209
    %s226 = sphi 0, %s210
  $region4: #{simple_rb_forward.3} parent=0 // loop_header_branch
    %15 = sbr.rel (%p13) target = $region8
  $region5: #{simple_rb_forward.3} parent=0 // loop_body
    %s17 = ssub.s32 %s12, 1
    %s18 = ssub.s32 %s12, 2
    %s25 = sadd.s32 1, %s20
    %p26 = scmp.ge.s32.totalorder %s25, 1
    %s27 = scalar_select %p26, 0, %s25
    %s28 = sadd.s32 1, %s19
    %s29 = scalar_select %p26, %s28, %s19
    %p30 = scmp.ge.s32.totalorder %s29, 2
    %s31 = scalar_select %p30, 0, %s29
    %s32 = sadd.s32 %s20, 1
    %s33 = smul.u32 %s32, 8
    %s34 = ssub.s32 %s33, 1
    %s35 = sadd.s32 %s27, 1
    %s36 = smul.u32 %s35, 8
    %s37 = ssub.s32 %s36, 1
    %s38 = ssub.s32 %s19, %s31
    %s39 = ssub.s32 %s34, %s37
    %s40 = sor.u32 %s38, %s39
    %p41 = scmp.eq.s32.totalorder %s40, 0
    %s43 = sadd.s32 %s42, 1
    %s44 = scalar_select %p41, %s42, %s43
    %p47 = pneg %p41
    %p48 = scmp.eq.s32.totalorder %s12, 1
    %p49 = por %p47, %p48
    %p50 = scmp.ne.s32.totalorder %s42, %s45
    %p51 = scmp.eq.s32.totalorder %s12, 0
    %p52 = por %p50, %p51
    %p53 = scmp.ne.s32.totalorder %s42, %s45
    %p54 = scmp.eq.s32.totalorder %s17, 1
    %p55 = por %p53, %p54
    %p56 = scmp.ne.s32.totalorder %s45, %s46
    %p57 = scmp.eq.s32.totalorder %s17, 0
    %p58 = por %p56, %p57
    %p59 = scmp.ne.s32.totalorder %s45, %s46
    %p60 = scmp.eq.s32.totalorder %s18, 1
    %p61 = por %p59, %p60
    %p63 = scmp.ne.s32.totalorder %s46, %s62
    %p64 = scmp.eq.s32.totalorder %s18, 0
    %p65 = por %p63, %p64
    %s66 = sadd.s32 %s20, 1
    %s67 = sadd.s32 %s27, 1
    %s68 = ssub.s32 %s19, %s31
    %s69 = ssub.s32 %s66, %s67
    %s70 = sor.u32 %s68, %s69
    %p71 = scmp.eq.s32.totalorder %s70, 0
    %s73 = sadd.s32 %s72, 1
    %s74 = scalar_select %p71, %s72, %s73
    %p77 = pneg %p71
    %p78 = scmp.eq.s32.totalorder %s12, 1
    %p79 = por %p77, %p78
    %p80 = scmp.ne.s32.totalorder %s72, %s75
    %p81 = scmp.eq.s32.totalorder %s12, 0
    %p82 = por %p80, %p81
    %p83 = scmp.ne.s32.totalorder %s72, %s75
    %p84 = scmp.eq.s32.totalorder %s17, 1
    %p85 = por %p83, %p84
    %p86 = scmp.ne.s32.totalorder %s75, %s76
    %p87 = scmp.eq.s32.totalorder %s17, 0
    %p88 = por %p86, %p87
    %p89 = scmp.ne.s32.totalorder %s75, %s76
    %p90 = scmp.eq.s32.totalorder %s18, 1
    %p91 = por %p89, %p90
    %p93 = scmp.ne.s32.totalorder %s76, %s92
    %p94 = scmp.eq.s32.totalorder %s18, 0
    %p95 = por %p93, %p94
    %s96 = sadd.s32 %s20, 2
    %s97 = smul.u32 %s96, 8
    %s98 = sadd.s32 %s27, 2
    %s99 = smul.u32 %s98, 8
    %s100 = ssub.s32 %s19, %s31
    %s101 = ssub.s32 %s97, %s99
    %s102 = sor.u32 %s100, %s101
    %p103 = scmp.eq.s32.totalorder %s102, 0
    %s105 = sadd.s32 %s104, 1
    %s106 = scalar_select %p103, %s104, %s105
    %p109 = pneg %p103
    %p110 = scmp.eq.s32.totalorder %s12, 1
    %p111 = por %p109, %p110
    %p112 = scmp.ne.s32.totalorder %s104, %s107
    %p113 = scmp.eq.s32.totalorder %s12, 0
    %p114 = por %p112, %p113
    %p115 = scmp.ne.s32.totalorder %s104, %s107
    %p116 = scmp.eq.s32.totalorder %s17, 1
    %p117 = por %p115, %p116
    %p118 = scmp.ne.s32.totalorder %s107, %s108
    %p119 = scmp.eq.s32.totalorder %s17, 0
    %p120 = por %p118, %p119
    %p121 = scmp.ne.s32.totalorder %s107, %s108
    %p122 = scmp.eq.s32.totalorder %s18, 1
    %p123 = por %p121, %p122
    %p125 = scmp.ne.s32.totalorder %s108, %s124
    %p126 = scmp.eq.s32.totalorder %s18, 0
    %p127 = por %p125, %p126
    %s128 = sadd.s32 %s20, 1
    %s129 = sadd.s32 %s27, 1
    %s130 = ssub.s32 %s19, %s31
    %s131 = ssub.s32 %s128, %s129
    %s132 = sor.u32 %s130, %s131
    %p133 = scmp.eq.s32.totalorder %s132, 0
    %s135 = sadd.s32 %s134, 1
    %s136 = scalar_select %p133, %s134, %s135
    %p139 = pneg %p133
    %p140 = scmp.eq.s32.totalorder %s12, 1
    %p141 = por %p139, %p140
    %p142 = scmp.ne.s32.totalorder %s134, %s137
    %p143 = scmp.eq.s32.totalorder %s12, 0
    %p144 = por %p142, %p143
    %p145 = scmp.ne.s32.totalorder %s134, %s137
    %p146 = scmp.eq.s32.totalorder %s17, 1
    %p147 = por %p145, %p146
    %p148 = scmp.ne.s32.totalorder %s137, %s138
    %p149 = scmp.eq.s32.totalorder %s17, 0
    %p150 = por %p148, %p149
    %p151 = scmp.ne.s32.totalorder %s137, %s138
    %p152 = scmp.eq.s32.totalorder %s18, 1
    %p153 = por %p151, %p152
    %p155 = scmp.ne.s32.totalorder %s138, %s154
    %p156 = scmp.eq.s32.totalorder %s18, 0
    %p157 = por %p155, %p156
    %s159 = sadd.s32 %s158, 1
    %p162 = scmp.eq.s32.totalorder %s12, 1
    %p163 = scmp.ne.s32.totalorder %s158, %s160
    %p164 = scmp.eq.s32.totalorder %s12, 0
    %p165 = por %p163, %p164
    %p166 = scmp.ne.s32.totalorder %s158, %s160
    %p167 = scmp.eq.s32.totalorder %s17, 1
    %p168 = por %p166, %p167
    %p169 = scmp.ne.s32.totalorder %s160, %s161
    %p170 = scmp.eq.s32.totalorder %s17, 0
    %p171 = por %p169, %p170
    %p172 = scmp.ne.s32.totalorder %s160, %s161
    %p173 = scmp.eq.s32.totalorder %s18, 1
    %p174 = por %p172, %p173
    %p176 = scmp.ne.s32.totalorder %s161, %s175
    %p177 = scmp.eq.s32.totalorder %s18, 0
    %p178 = por %p176, %p177
    %s180 = sadd.s32 %s179, 1
    %p183 = scmp.eq.s32.totalorder %s12, 1
    %p184 = scmp.ne.s32.totalorder %s179, %s181
    %p185 = scmp.eq.s32.totalorder %s12, 0
    %p186 = por %p184, %p185
    %p187 = scmp.ne.s32.totalorder %s179, %s181
    %p188 = scmp.eq.s32.totalorder %s17, 1
    %p189 = por %p187, %p188
    %p190 = scmp.ne.s32.totalorder %s181, %s182
    %p191 = scmp.eq.s32.totalorder %s17, 0
    %p192 = por %p190, %p191
    %p193 = scmp.ne.s32.totalorder %s181, %s182
    %p194 = scmp.eq.s32.totalorder %s18, 1
    %p195 = por %p193, %p194
    %p197 = scmp.ne.s32.totalorder %s182, %s196
    %p198 = scmp.eq.s32.totalorder %s18, 0
    %p199 = por %p197, %p198
    %s200 = sadd.s32 %s20, 1
    %s201 = sadd.s32 %s27, 1
    %s202 = ssub.s32 %s19, %s31
    %s203 = ssub.s32 %s200, %s201
    %s204 = sor.u32 %s202, %s203
    %p205 = scmp.eq.s32.totalorder %s204, 0
    %s207 = sadd.s32 %s206, 1
    %s208 = scalar_select %p205, %s206, %s207
    %p211 = pneg %p205
    %p212 = scmp.eq.s32.totalorder %s12, 1
    %p213 = por %p211, %p212
    %p214 = scmp.ne.s32.totalorder %s206, %s209
    %p215 = scmp.eq.s32.totalorder %s12, 0
    %p216 = por %p214, %p215
    %p217 = scmp.ne.s32.totalorder %s206, %s209
    %p218 = scmp.eq.s32.totalorder %s17, 1
    %p219 = por %p217, %p218
    %p220 = scmp.ne.s32.totalorder %s209, %s210
    %p221 = scmp.eq.s32.totalorder %s17, 0
    %p222 = por %p220, %p221
    %p223 = scmp.ne.s32.totalorder %s209, %s210
    %p224 = scmp.eq.s32.totalorder %s18, 1
    %p225 = por %p223, %p224
    %p227 = scmp.ne.s32.totalorder %s210, %s226
    %p228 = scmp.eq.s32.totalorder %s18, 0
    %p229 = por %p227, %p228
    %p230 = scmp.le.s32.totalorder 1, %s12
    %p231 = scmp.lt.s32.totalorder %s12, 3
    %p232 = pnand %p230, %p231
    %p233 = pneg %p232
    // Predicated region
    $region9: #{simple_rb_forward.3} parent=5 // pred_check
      _
    $region10: #{simple_rb_forward.3} parent=5 // pred_check_branch
      %235 = sbr.rel (%p232) target = $region12
    $region11: #{simple_rb_forward.3} parent=5 // pred_region
      %s236 = ssub.s32 %s12, 1
      // Predicated region
      $region13: #{simple_rb_forward.3} parent=11 // pred_check
        %p237 = pneg %p171
      $region14: #{simple_rb_forward.3} parent=11 // pred_check_branch
        %239 = sbr.rel (%p237) target = $region16
      $region15: #{simple_rb_forward.3} parent=11 // pred_region
        _
      $region16: #{simple_rb_forward.3} parent=11 // pred_fallthru
        _
      // Predicated region
      $region17: #{simple_rb_forward.3} parent=11 // pred_check
        %p240 = pneg %p192
      $region18: #{simple_rb_forward.3} parent=11 // pred_check_branch
        %242 = sbr.rel (%p240) target = $region20
      $region19: #{simple_rb_forward.3} parent=11 // pred_region
        _
      $region20: #{simple_rb_forward.3} parent=11 // pred_fallthru
        _
    $region12: #{simple_rb_forward.3} parent=5 // pred_fallthru
      _
    %p243 = scmp.lt.s32.totalorder %s12, 2
    // Predicated region
    $region21: #{simple_rb_forward.3} parent=5 // pred_check
      %p244 = pneg %p243
    $region22: #{simple_rb_forward.3} parent=5 // pred_check_branch
      %246 = sbr.rel (%p244) target = $region24
    $region23: #{simple_rb_forward.3} parent=5 // pred_region
      // Predicated region
      $region25: #{simple_rb_forward.3} parent=23 // pred_check
        %p247 = pneg %p52
      $region26: #{simple_rb_forward.3} parent=23 // pred_check_branch
        %249 = sbr.rel (%p247) target = $region28
      $region27: #{simple_rb_forward.3} parent=23 // pred_region
        %s250 = sadd.s32 %s20, 1
        %s251 = smul.u32 %s250, 8
        %s252 = ssub.s32 %s251, 1
        %p253 = scmp.lt.s32.totalorder %s19, 1
        %s254 = scalar_select %p253, %s19, 1
        %p255 = scmp.lt.s32.totalorder %s252, 23
        %s256 = scalar_select %p255, %s252, 23
        %s257 = smul.addr %s254, 24
        %s258 = sadd.s32 %s256, %s257
        %s259 = smul.addr %s258, 2
        %s260 = scalar_lea.vmem %s0, %s259
        %s261 = sadd.s32 %s20, 1
        %s262 = smul.u32 %s261, 8
        %s263 = ssub.s32 %s262, 1
      $region28: #{simple_rb_forward.3} parent=23 // pred_fallthru
        _
      // Predicated region
      $region29: #{simple_rb_forward.3} parent=23 // pred_check
        %p264 = pneg %p82
      $region30: #{simple_rb_forward.3} parent=23 // pred_check_branch
        %266 = sbr.rel (%p264) target = $region32
      $region31: #{simple_rb_forward.3} parent=23 // pred_region
        %s267 = sadd.s32 %s20, 1
        %s268 = smul.u32 8, %s267
        %p269 = scmp.lt.s32.totalorder %s19, 1
        %s270 = scalar_select %p269, %s19, 1
        %p271 = scmp.lt.s32.totalorder %s268, 23
        %s272 = scalar_select %p271, %s268, 23
        %s273 = smul.addr %s270, 24
        %s274 = sadd.s32 %s272, %s273
        %s275 = smul.addr %s274, 2
        %s276 = scalar_lea.vmem %s1, %s275
        %s277 = sadd.s32 %s20, 1
        %s278 = smul.u32 8, %s277
      $region32: #{simple_rb_forward.3} parent=23 // pred_fallthru
        _
      // Predicated region
      $region33: #{simple_rb_forward.3} parent=23 // pred_check
        %p279 = pneg %p114
      $region34: #{simple_rb_forward.3} parent=23 // pred_check_branch
        %281 = sbr.rel (%p279) target = $region36
      $region35: #{simple_rb_forward.3} parent=23 // pred_region
        %s282 = sadd.s32 %s20, 2
        %s283 = smul.u32 %s282, 8
        %p284 = scmp.lt.s32.totalorder %s19, 1
        %s285 = scalar_select %p284, %s19, 1
        %p286 = scmp.lt.s32.totalorder %s283, 23
        %s287 = scalar_select %p286, %s283, 23
        %s288 = smul.addr %s285, 24
        %s289 = sadd.s32 %s287, %s288
        %s290 = smul.addr %s289, 2
        %s291 = scalar_lea.vmem %s2, %s290
        %s292 = sadd.s32 %s20, 2
        %s293 = smul.u32 %s292, 8
      $region36: #{simple_rb_forward.3} parent=23 // pred_fallthru
        _
      // Predicated region
      $region37: #{simple_rb_forward.3} parent=23 // pred_check
        %p294 = pneg %p144
      $region38: #{simple_rb_forward.3} parent=23 // pred_check_branch
        %296 = sbr.rel (%p294) target = $region40
      $region39: #{simple_rb_forward.3} parent=23 // pred_region
        %s297 = sadd.s32 %s20, 1
        %s298 = smul.u32 8, %s297
        %p299 = scmp.lt.s32.totalorder %s19, 1
        %s300 = scalar_select %p299, %s19, 1
        %p301 = scmp.lt.s32.totalorder %s298, 23
        %s302 = scalar_select %p301, %s298, 23
        %s303 = smul.addr %s300, 24
        %s304 = sadd.s32 %s302, %s303
        %s305 = smul.addr %s304, 2
        %s306 = scalar_lea.vmem %s3, %s305
        %s307 = sadd.s32 %s20, 1
        %s308 = smul.u32 8, %s307
      $region40: #{simple_rb_forward.3} parent=23 // pred_fallthru
        _
    $region24: #{simple_rb_forward.3} parent=5 // pred_fallthru
      _
    %p309 = scmp.le.s32.totalorder 1, %s12
    %p310 = scmp.lt.s32.totalorder %s12, 3
    %p311 = pnand %p309, %p310
    %p312 = pneg %p311
    // Predicated region
    $region41: #{simple_rb_forward.3} parent=5 // pred_check
      _
    $region42: #{simple_rb_forward.3} parent=5 // pred_check_branch
      %314 = sbr.rel (%p311) target = $region44
    $region43: #{simple_rb_forward.3} parent=5 // pred_region
      %s315 = ssub.s32 %s12, 1
      %s316 = sadd.s32 %s22, 1
      %s317 = smul.u32 %s316, 8
      %s318 = ssub.s32 %s317, 1
      %p319 = scmp.lt.s32.totalorder %s21, 1
      %s320 = scalar_select %p319, %s21, 1
      %p321 = scmp.lt.s32.totalorder %s318, 23
      %s322 = scalar_select %p321, %s318, 23
      %s323 = smul.addr %s320, 24
      %s324 = sadd.s32 %s322, %s323
      %s325 = smul.addr %s324, 2
      %s326 = scalar_lea.vmem %s0, %s325
      %p327 = pneg %p58
      %p328 = pneg %p55
      %s329 = sadd.s32 %s22, 1
      %s330 = smul.u32 8, %s329
      %p331 = scmp.lt.s32.totalorder %s21, 1
      %s332 = scalar_select %p331, %s21, 1
      %p333 = scmp.lt.s32.totalorder %s330, 23
      %s334 = scalar_select %p333, %s330, 23
      %s335 = smul.addr %s332, 24
      %s336 = sadd.s32 %s334, %s335
      %s337 = smul.addr %s336, 2
      %s338 = scalar_lea.vmem %s1, %s337
      %p339 = pneg %p88
      %p340 = pneg %p85
      %s341 = sadd.s32 %s22, 2
      %s342 = smul.u32 %s341, 8
      %p343 = scmp.lt.s32.totalorder %s21, 1
      %s344 = scalar_select %p343, %s21, 1
      %p345 = scmp.lt.s32.totalorder %s342, 23
      %s346 = scalar_select %p345, %s342, 23
      %s347 = smul.addr %s344, 24
      %s348 = sadd.s32 %s346, %s347
      %s349 = smul.addr %s348, 2
      %s350 = scalar_lea.vmem %s2, %s349
      %p351 = pneg %p120
      %p352 = pneg %p117
      %s353 = sadd.s32 %s22, 1
      %s354 = smul.u32 8, %s353
      %p355 = scmp.lt.s32.totalorder %s21, 1
      %s356 = scalar_select %p355, %s21, 1
      %p357 = scmp.lt.s32.totalorder %s354, 23
      %s358 = scalar_select %p357, %s354, 23
      %s359 = smul.addr %s356, 24
      %s360 = sadd.s32 %s358, %s359
      %s361 = smul.addr %s360, 2
      %s362 = scalar_lea.vmem %s3, %s361
      %p363 = pneg %p150
      %p364 = pneg %p147
      %p365 = pneg %p171
      %p366 = pneg %p168
      %p367 = pneg %p192
      %p368 = pneg %p189
      %p369 = pneg %p222
      %p370 = pneg %p219
      %s371 = sadd.s32 %s22, 1
      %s372 = smul.u32 8, %s371
      %p373 = scmp.lt.s32.totalorder %s21, 1
      %s374 = scalar_select %p373, %s21, 1
      %p375 = scmp.lt.s32.totalorder %s372, 23
      %s376 = scalar_select %p375, %s372, 23
      %s377 = smul.addr %s374, 24
      %s378 = sadd.s32 %s376, %s377
      %s379 = smul.addr %s378, 4
      %s380 = scalar_lea.vmem %s6, %s379
      %s381 = sadd.s32 %s22, 1
      %s382 = smul.u32 %s381, 8
      %s383 = ssub.s32 %s382, 1
      %p384 = scmp.lt.s32.totalorder %s21, 1
      %s385 = scalar_select %p384, %s21, 1
      %p386 = scmp.lt.s32.totalorder %s383, 23
      %s387 = scalar_select %p386, %s383, 23
      %s388 = smul.addr %s385, 24
      %s389 = sadd.s32 %s387, %s388
      %s390 = smul.addr %s389, 2
      %s391 = scalar_lea.vmem %s0, %s390
      %s392 = sadd.s32 %s22, 1
      %s393 = smul.u32 %s392, 8
      %s394 = ssub.s32 %s393, 1
      %s395 = sadd.s32 %s22, 1
      %s396 = smul.u32 8, %s395
      %p397 = scmp.lt.s32.totalorder %s21, 1
      %s398 = scalar_select %p397, %s21, 1
      %p399 = scmp.lt.s32.totalorder %s396, 23
      %s400 = scalar_select %p399, %s396, 23
      %s401 = smul.addr %s398, 24
      %s402 = sadd.s32 %s400, %s401
      %s403 = smul.addr %s402, 2
      %s404 = scalar_lea.vmem %s1, %s403
      %s405 = sadd.s32 %s22, 1
      %s406 = smul.u32 8, %s405
      %s407 = sadd.s32 %s22, 2
      %s408 = smul.u32 %s407, 8
      %p409 = scmp.lt.s32.totalorder %s21, 1
      %s410 = scalar_select %p409, %s21, 1
      %p411 = scmp.lt.s32.totalorder %s408, 23
      %s412 = scalar_select %p411, %s408, 23
      %s413 = smul.addr %s410, 24
      %s414 = sadd.s32 %s412, %s413
      %s415 = smul.addr %s414, 2
      %s416 = scalar_lea.vmem %s2, %s415
      %s417 = sadd.s32 %s22, 2
      %s418 = smul.u32 %s417, 8
      %s419 = sadd.s32 %s22, 1
      %s420 = smul.u32 8, %s419
      %p421 = scmp.lt.s32.totalorder %s21, 1
      %s422 = scalar_select %p421, %s21, 1
      %p423 = scmp.lt.s32.totalorder %s420, 23
      %s424 = scalar_select %p423, %s420, 23
      %s425 = smul.addr %s422, 24
      %s426 = sadd.s32 %s424, %s425
      %s427 = smul.addr %s426, 2
      %s428 = scalar_lea.vmem %s3, %s427
      %s429 = sadd.s32 %s22, 1
      %s430 = smul.u32 8, %s429
      %s431 = sadd.s32 %s22, 1
      %s432 = smul.u32 8, %s431
      %p433 = scmp.lt.s32.totalorder %s21, 1
      %s434 = scalar_select %p433, %s21, 1
      %p435 = scmp.lt.s32.totalorder %s432, 23
      %s436 = scalar_select %p435, %s432, 23
      %s437 = smul.addr %s434, 24
      %s438 = sadd.s32 %s436, %s437
      %s439 = smul.addr %s438, 4
      %s440 = scalar_lea.vmem %s6, %s439
      %s441 = sadd.s32 %s22, 1
      %s442 = smul.u32 8, %s441
      %v443 = vld [vmem:[%s391] sm:$0x3]
      %v444 = vunpack.c.l.bf16 %v443
      %445 = vst [vmem:[#allocation2] sm:$0xf] %v444
      %v446 = vld [vmem:[%s404] sm:$0xff]
      %v447 = vld [vmem:[%s404 + $0x8] sm:$0xff]
      %v448 = vunpack.c.l.bf16 %v446
      %v449 = vunpack.c.h.bf16 %v446
      %v450 = vunpack.c.l.bf16 %v447
      %v451 = vunpack.c.h.bf16 %v447
      %452 = vst [vmem:[#allocation2 + $0x4] sm:$0xff] %v448
      %453 = vst [vmem:[#allocation2 + $0xc] sm:$0xff] %v449
      %454 = vst [vmem:[#allocation2 + $0x14] sm:$0xff] %v450
      %455 = vst [vmem:[#allocation2 + $0x1c] sm:$0xff] %v451
      %v456 = vld [vmem:[%s416] sm:$0x3]
      %v457 = vunpack.c.l.bf16 %v456
      %458 = vst [vmem:[#allocation2 + $0x24] sm:$0xf] %v457
      %v459 = vld [vmem:[#allocation2] sm:$0xff]
      %v460 = vld [vmem:[#allocation2 + $0x8] sm:$0xff]
      %v461 = vld [vmem:[#allocation2 + $0x10] sm:$0xff]
      %v462 = vld [vmem:[#allocation2 + $0x18] sm:$0xff]
      %v463 = vld [vmem:[#allocation2 + $0x20] sm:$0xf]
      %v469 = vcombine.high %v459, %v459
      %v470 = vcombine.high %v460, %v460
      %v471 = vcombine.high %v461, %v461
      %v472 = vcombine.high %v462, %v462
      %473 = vrot.lane.b32.xlu0 %v459, 111
      %v474 = vpop.permute.xlu0 %473
      %475 = vrot.lane.b32.xlu0 %v469, 111
      %v476 = vpop.permute.xlu0 %475
      %477 = vrot.lane.b32.xlu0 %v460, 111
      %v478 = vpop.permute.xlu0 %477
      %479 = vrot.lane.b32.xlu0 %v470, 111
      %v480 = vpop.permute.xlu0 %479
      %481 = vrot.lane.b32.xlu0 %v461, 111
      %v482 = vpop.permute.xlu0 %481
      %483 = vrot.lane.b32.xlu0 %v471, 111
      %v484 = vpop.permute.xlu0 %483
      %485 = vrot.lane.b32.xlu0 %v462, 111
      %v486 = vpop.permute.xlu0 %485
      %487 = vrot.lane.b32.xlu0 %v472, 111
      %v488 = vpop.permute.xlu0 %487
      %489 = vrot.lane.b32.xlu0 %v463, 111
      %v490 = vpop.permute.xlu0 %489
      %vm491 = vcmask 908288
      %v492 = vsel %vm491, %v474, %v476
      %v493 = vsel %vm491, %v476, %v478
      %v494 = vsel %vm491, %v478, %v480
      %v495 = vsel %vm491, %v480, %v482
      %v496 = vsel %vm491, %v482, %v484
      %v497 = vsel %vm491, %v484, %v486
      %v498 = vsel %vm491, %v486, %v488
      %v499 = vsel %vm491, %v488, %v490
      %508 = vst [vmem:[#allocation3] sm:$0xf] %v492
      %509 = vst [vmem:[#allocation3 + $0x8] sm:$0xf] %v493
      %510 = vst [vmem:[#allocation3 + $0x10] sm:$0xf] %v494
      %511 = vst [vmem:[#allocation3 + $0x18] sm:$0xf] %v495
      %512 = vst [vmem:[#allocation3 + $0x20] sm:$0xf] %v496
      %513 = vst [vmem:[#allocation3 + $0x28] sm:$0xf] %v497
      %514 = vst [vmem:[#allocation3 + $0x30] sm:$0xf] %v498
      %515 = vst [vmem:[#allocation3 + $0x38] sm:$0xf] %v499
      %v516 = vld [vmem:[#allocation2] sm:$0xff]
      %v517 = vld [vmem:[#allocation2 + $0x8] sm:$0xff]
      %v518 = vld [vmem:[#allocation2 + $0x10] sm:$0xff]
      %v519 = vld [vmem:[#allocation2 + $0x18] sm:$0xff]
      %v520 = vld [vmem:[#allocation2 + $0x20] sm:$0xf]
      %v526 = vcombine.low %v516, %v516
      %v527 = vcombine.low %v517, %v517
      %v528 = vcombine.low %v518, %v518
      %v529 = vcombine.low %v519, %v519
      %v530 = vcombine.low %v520, %v520
      %531 = vrot.lane.b32.xlu0 %v526, 110
      %v532 = vpop.permute.xlu0 %531
      %533 = vrot.lane.b32.xlu0 %v516, 110
      %v534 = vpop.permute.xlu0 %533
      %535 = vrot.lane.b32.xlu0 %v527, 110
      %v536 = vpop.permute.xlu0 %535
      %537 = vrot.lane.b32.xlu0 %v517, 110
      %v538 = vpop.permute.xlu0 %537
      %539 = vrot.lane.b32.xlu0 %v528, 110
      %v540 = vpop.permute.xlu0 %539
      %541 = vrot.lane.b32.xlu0 %v518, 110
      %v542 = vpop.permute.xlu0 %541
      %543 = vrot.lane.b32.xlu0 %v529, 110
      %v544 = vpop.permute.xlu0 %543
      %545 = vrot.lane.b32.xlu0 %v519, 110
      %v546 = vpop.permute.xlu0 %545
      %547 = vrot.lane.b32.xlu0 %v530, 110
      %v548 = vpop.permute.xlu0 %547
      %vm549 = vcmask 900096
      %v550 = vsel %vm549, %v532, %v534
      %v551 = vsel %vm549, %v534, %v536
      %v552 = vsel %vm549, %v536, %v538
      %v553 = vsel %vm549, %v538, %v540
      %v554 = vsel %vm549, %v540, %v542
      %v555 = vsel %vm549, %v542, %v544
      %v556 = vsel %vm549, %v544, %v546
      %v557 = vsel %vm549, %v546, %v548
      %566 = vst [vmem:[#allocation3] sm:$0xf0] %v550
      %567 = vst [vmem:[#allocation3 + $0x8] sm:$0xf0] %v551
      %568 = vst [vmem:[#allocation3 + $0x10] sm:$0xf0] %v552
      %569 = vst [vmem:[#allocation3 + $0x18] sm:$0xf0] %v553
      %570 = vst [vmem:[#allocation3 + $0x20] sm:$0xf0] %v554
      %571 = vst [vmem:[#allocation3 + $0x28] sm:$0xf0] %v555
      %572 = vst [vmem:[#allocation3 + $0x30] sm:$0xf0] %v556
      %573 = vst [vmem:[#allocation3 + $0x38] sm:$0xf0] %v557
      %v574 = vld [vmem:[#allocation2] sm:$0xff]
      %v575 = vld [vmem:[#allocation2 + $0x8] sm:$0xff]
      %v576 = vld [vmem:[#allocation2 + $0x10] sm:$0xff]
      %v577 = vld [vmem:[#allocation2 + $0x18] sm:$0xff]
      %v578 = vld [vmem:[#allocation2 + $0x20] sm:$0xf]
      %v584 = vcombine.high %v574, %v574
      %v585 = vcombine.high %v575, %v575
      %v586 = vcombine.high %v576, %v576
      %v587 = vcombine.high %v577, %v577
      %588 = vrot.lane.b32.xlu0 %v574, 109
      %v589 = vpop.permute.xlu0 %588
      %590 = vrot.lane.b32.xlu0 %v584, 109
      %v591 = vpop.permute.xlu0 %590
      %592 = vrot.lane.b32.xlu0 %v575, 109
      %v593 = vpop.permute.xlu0 %592
      %594 = vrot.lane.b32.xlu0 %v585, 109
      %v595 = vpop.permute.xlu0 %594
      %596 = vrot.lane.b32.xlu0 %v576, 109
      %v597 = vpop.permute.xlu0 %596
      %598 = vrot.lane.b32.xlu0 %v586, 109
      %v599 = vpop.permute.xlu0 %598
      %600 = vrot.lane.b32.xlu0 %v577, 109
      %v601 = vpop.permute.xlu0 %600
      %602 = vrot.lane.b32.xlu0 %v587, 109
      %v603 = vpop.permute.xlu0 %602
      %604 = vrot.lane.b32.xlu0 %v578, 109
      %v605 = vpop.permute.xlu0 %604
      %vm606 = vcmask 891904
      %v607 = vsel %vm606, %v589, %v591
      %v608 = vsel %vm606, %v591, %v593
      %v609 = vsel %vm606, %v593, %v595
      %v610 = vsel %vm606, %v595, %v597
      %v611 = vsel %vm606, %v597, %v599
      %v612 = vsel %vm606, %v599, %v601
      %v613 = vsel %vm606, %v601, %v603
      %v614 = vsel %vm606, %v603, %v605
      %623 = vst [vmem:[#allocation3 + $0x40] sm:$0xf] %v607
      %624 = vst [vmem:[#allocation3 + $0x48] sm:$0xf] %v608
      %625 = vst [vmem:[#allocation3 + $0x50] sm:$0xf] %v609
      %626 = vst [vmem:[#allocation3 + $0x58] sm:$0xf] %v610
      %627 = vst [vmem:[#allocation3 + $0x60] sm:$0xf] %v611
      %628 = vst [vmem:[#allocation3 + $0x68] sm:$0xf] %v612
      %629 = vst [vmem:[#allocation3 + $0x70] sm:$0xf] %v613
      %630 = vst [vmem:[#allocation3 + $0x78] sm:$0xf] %v614
      %v631 = vld [vmem:[#allocation2] sm:$0xff]
      %v632 = vld [vmem:[#allocation2 + $0x8] sm:$0xff]
      %v633 = vld [vmem:[#allocation2 + $0x10] sm:$0xff]
      %v634 = vld [vmem:[#allocation2 + $0x18] sm:$0xff]
      %v635 = vld [vmem:[#allocation2 + $0x20] sm:$0xf]
      %v641 = vcombine.low %v631, %v631
      %v642 = vcombine.low %v632, %v632
      %v643 = vcombine.low %v633, %v633
      %v644 = vcombine.low %v634, %v634
      %v645 = vcombine.low %v635, %v635
      %646 = vrot.lane.b32.xlu0 %v641, 101
      %v647 = vpop.permute.xlu0 %646
      %648 = vrot.lane.b32.xlu0 %v631, 101
      %v649 = vpop.permute.xlu0 %648
      %650 = vrot.lane.b32.xlu0 %v642, 101
      %v651 = vpop.permute.xlu0 %650
      %652 = vrot.lane.b32.xlu0 %v632, 101
      %v653 = vpop.permute.xlu0 %652
      %654 = vrot.lane.b32.xlu0 %v643, 101
      %v655 = vpop.permute.xlu0 %654
      %656 = vrot.lane.b32.xlu0 %v633, 101
      %v657 = vpop.permute.xlu0 %656
      %658 = vrot.lane.b32.xlu0 %v644, 101
      %v659 = vpop.permute.xlu0 %658
      %660 = vrot.lane.b32.xlu0 %v634, 101
      %v661 = vpop.permute.xlu0 %660
      %662 = vrot.lane.b32.xlu0 %v645, 101
      %v663 = vpop.permute.xlu0 %662
      %vm664 = vcmask 826368
      %v665 = vsel %vm664, %v647, %v649
      %v666 = vsel %vm664, %v649, %v651
      %v667 = vsel %vm664, %v651, %v653
      %v668 = vsel %vm664, %v653, %v655
      %v669 = vsel %vm664, %v655, %v657
      %v670 = vsel %vm664, %v657, %v659
      %v671 = vsel %vm664, %v659, %v661
      %v672 = vsel %vm664, %v661, %v663
      %681 = vst [vmem:[#allocation3 + $0x40] sm:$0xf0] %v665
      %682 = vst [vmem:[#allocation3 + $0x48] sm:$0xf0] %v666
      %683 = vst [vmem:[#allocation3 + $0x50] sm:$0xf0] %v667
      %684 = vst [vmem:[#allocation3 + $0x58] sm:$0xf0] %v668
      %685 = vst [vmem:[#allocation3 + $0x60] sm:$0xf0] %v669
      %686 = vst [vmem:[#allocation3 + $0x68] sm:$0xf0] %v670
      %687 = vst [vmem:[#allocation3 + $0x70] sm:$0xf0] %v671
      %688 = vst [vmem:[#allocation3 + $0x78] sm:$0xf0] %v672
      %v689 = vld [vmem:[#allocation2] sm:$0xff]
      %v690 = vld [vmem:[#allocation2 + $0x8] sm:$0xff]
      %v691 = vld [vmem:[#allocation2 + $0x10] sm:$0xff]
      %v692 = vld [vmem:[#allocation2 + $0x18] sm:$0xff]
      %v693 = vld [vmem:[#allocation2 + $0x20] sm:$0xf]
      %v699 = vcombine.high %v689, %v689
      %v700 = vcombine.high %v690, %v690
      %v701 = vcombine.high %v691, %v691
      %v702 = vcombine.high %v692, %v692
      %703 = vrot.lane.b32.xlu0 %v689, 100
      %v704 = vpop.permute.xlu0 %703
      %705 = vrot.lane.b32.xlu0 %v699, 100
      %v706 = vpop.permute.xlu0 %705
      %707 = vrot.lane.b32.xlu0 %v690, 100
      %v708 = vpop.permute.xlu0 %707
      %709 = vrot.lane.b32.xlu0 %v700, 100
      %v710 = vpop.permute.xlu0 %709
      %711 = vrot.lane.b32.xlu0 %v691, 100
      %v712 = vpop.permute.xlu0 %711
      %713 = vrot.lane.b32.xlu0 %v701, 100
      %v714 = vpop.permute.xlu0 %713
      %715 = vrot.lane.b32.xlu0 %v692, 100
      %v716 = vpop.permute.xlu0 %715
      %717 = vrot.lane.b32.xlu0 %v702, 100
      %v718 = vpop.permute.xlu0 %717
      %719 = vrot.lane.b32.xlu0 %v693, 100
      %v720 = vpop.permute.xlu0 %719
      %vm721 = vcmask 818176
      %v722 = vsel %vm721, %v704, %v706
      %v723 = vsel %vm721, %v706, %v708
      %v724 = vsel %vm721, %v708, %v710
      %v725 = vsel %vm721, %v710, %v712
      %v726 = vsel %vm721, %v712, %v714
      %v727 = vsel %vm721, %v714, %v716
      %v728 = vsel %vm721, %v716, %v718
      %v729 = vsel %vm721, %v718, %v720
      %738 = vst [vmem:[#allocation3 + $0x80] sm:$0xf] %v722
      %739 = vst [vmem:[#allocation3 + $0x88] sm:$0xf] %v723
      %740 = vst [vmem:[#allocation3 + $0x90] sm:$0xf] %v724
      %741 = vst [vmem:[#allocation3 + $0x98] sm:$0xf] %v725
      %742 = vst [vmem:[#allocation3 + $0xa0] sm:$0xf] %v726
      %743 = vst [vmem:[#allocation3 + $0xa8] sm:$0xf] %v727
      %744 = vst [vmem:[#allocation3 + $0xb0] sm:$0xf] %v728
      %745 = vst [vmem:[#allocation3 + $0xb8] sm:$0xf] %v729
      %v746 = vld [vmem:[#allocation2] sm:$0xff]
      %v747 = vld [vmem:[#allocation2 + $0x8] sm:$0xff]
      %v748 = vld [vmem:[#allocation2 + $0x10] sm:$0xff]
      %v749 = vld [vmem:[#allocation2 + $0x18] sm:$0xff]
      %v750 = vld [vmem:[#allocation2 + $0x20] sm:$0xf]
      %v756 = vcombine.low %v746, %v746
      %v757 = vcombine.low %v747, %v747
      %v758 = vcombine.low %v748, %v748
      %v759 = vcombine.low %v749, %v749
      %v760 = vcombine.low %v750, %v750
      %761 = vrot.lane.b32.xlu0 %v756, 99
      %v762 = vpop.permute.xlu0 %761
      %763 = vrot.lane.b32.xlu0 %v746, 99
      %v764 = vpop.permute.xlu0 %763
      %765 = vrot.lane.b32.xlu0 %v757, 99
      %v766 = vpop.permute.xlu0 %765
      %767 = vrot.lane.b32.xlu0 %v747, 99
      %v768 = vpop.permute.xlu0 %767
      %769 = vrot.lane.b32.xlu0 %v758, 99
      %v770 = vpop.permute.xlu0 %769
      %771 = vrot.lane.b32.xlu0 %v748, 99
      %v772 = vpop.permute.xlu0 %771
      %773 = vrot.lane.b32.xlu0 %v759, 99
      %v774 = vpop.permute.xlu0 %773
      %775 = vrot.lane.b32.xlu0 %v749, 99
      %v776 = vpop.permute.xlu0 %775
      %777 = vrot.lane.b32.xlu0 %v760, 99
      %v778 = vpop.permute.xlu0 %777
      %vm779 = vcmask 809984
      %v780 = vsel %vm779, %v762, %v764
      %v781 = vsel %vm779, %v764, %v766
      %v782 = vsel %vm779, %v766, %v768
      %v783 = vsel %vm779, %v768, %v770
      %v784 = vsel %vm779, %v770, %v772
      %v785 = vsel %vm779, %v772, %v774
      %v786 = vsel %vm779, %v774, %v776
      %v787 = vsel %vm779, %v776, %v778
      %796 = vst [vmem:[#allocation3 + $0x80] sm:$0xf0] %v780
      %797 = vst [vmem:[#allocation3 + $0x88] sm:$0xf0] %v781
      %798 = vst [vmem:[#allocation3 + $0x90] sm:$0xf0] %v782
      %799 = vst [vmem:[#allocation3 + $0x98] sm:$0xf0] %v783
      %800 = vst [vmem:[#allocation3 + $0xa0] sm:$0xf0] %v784
      %801 = vst [vmem:[#allocation3 + $0xa8] sm:$0xf0] %v785
      %802 = vst [vmem:[#allocation3 + $0xb0] sm:$0xf0] %v786
      %803 = vst [vmem:[#allocation3 + $0xb8] sm:$0xf0] %v787
      %v804 = vld [vmem:[#allocation2] sm:$0xff]
      %v805 = vld [vmem:[#allocation2 + $0x8] sm:$0xff]
      %v806 = vld [vmem:[#allocation2 + $0x10] sm:$0xff]
      %v807 = vld [vmem:[#allocation2 + $0x18] sm:$0xff]
      %v808 = vld [vmem:[#allocation2 + $0x20] sm:$0xf]
      %v814 = vcombine.high %v804, %v804
      %v815 = vcombine.high %v805, %v805
      %v816 = vcombine.high %v806, %v806
      %v817 = vcombine.high %v807, %v807
      %818 = vrot.lane.b32.xlu0 %v804, 91
      %v819 = vpop.permute.xlu0 %818
      %820 = vrot.lane.b32.xlu0 %v814, 91
      %v821 = vpop.permute.xlu0 %820
      %822 = vrot.lane.b32.xlu0 %v805, 91
      %v823 = vpop.permute.xlu0 %822
      %824 = vrot.lane.b32.xlu0 %v815, 91
      %v825 = vpop.permute.xlu0 %824
      %826 = vrot.lane.b32.xlu0 %v806, 91
      %v827 = vpop.permute.xlu0 %826
      %828 = vrot.lane.b32.xlu0 %v816, 91
      %v829 = vpop.permute.xlu0 %828
      %830 = vrot.lane.b32.xlu0 %v807, 91
      %v831 = vpop.permute.xlu0 %830
      %832 = vrot.lane.b32.xlu0 %v817, 91
      %v833 = vpop.permute.xlu0 %832
      %834 = vrot.lane.b32.xlu0 %v808, 91
      %v835 = vpop.permute.xlu0 %834
      %vm836 = vcmask 744448
      %v837 = vsel %vm836, %v819, %v821
      %v838 = vsel %vm836, %v821, %v823
      %v839 = vsel %vm836, %v823, %v825
      %v840 = vsel %vm836, %v825, %v827
      %v841 = vsel %vm836, %v827, %v829
      %v842 = vsel %vm836, %v829, %v831
      %v843 = vsel %vm836, %v831, %v833
      %v844 = vsel %vm836, %v833, %v835
      %853 = vst [vmem:[#allocation3 + $0xc0] sm:$0xf] %v837
      %854 = vst [vmem:[#allocation3 + $0xc8] sm:$0xf] %v838
      %855 = vst [vmem:[#allocation3 + $0xd0] sm:$0xf] %v839
      %856 = vst [vmem:[#allocation3 + $0xd8] sm:$0xf] %v840
      %857 = vst [vmem:[#allocation3 + $0xe0] sm:$0xf] %v841
      %858 = vst [vmem:[#allocation3 + $0xe8] sm:$0xf] %v842
      %859 = vst [vmem:[#allocation3 + $0xf0] sm:$0xf] %v843
      %860 = vst [vmem:[#allocation3 + $0xf8] sm:$0xf] %v844
      %v861 = vld [vmem:[#allocation2] sm:$0xff]
      %v862 = vld [vmem:[#allocation2 + $0x8] sm:$0xff]
      %v863 = vld [vmem:[#allocation2 + $0x10] sm:$0xff]
      %v864 = vld [vmem:[#allocation2 + $0x18] sm:$0xff]
      %v865 = vld [vmem:[#allocation2 + $0x20] sm:$0xf]
      %v871 = vcombine.low %v861, %v861
      %v872 = vcombine.low %v862, %v862
      %v873 = vcombine.low %v863, %v863
      %v874 = vcombine.low %v864, %v864
      %v875 = vcombine.low %v865, %v865
      %876 = vrot.lane.b32.xlu0 %v871, 90
      %v877 = vpop.permute.xlu0 %876
      %878 = vrot.lane.b32.xlu0 %v861, 90
      %v879 = vpop.permute.xlu0 %878
      %880 = vrot.lane.b32.xlu0 %v872, 90
      %v881 = vpop.permute.xlu0 %880
      %882 = vrot.lane.b32.xlu0 %v862, 90
      %v883 = vpop.permute.xlu0 %882
      %884 = vrot.lane.b32.xlu0 %v873, 90
      %v885 = vpop.permute.xlu0 %884
      %886 = vrot.lane.b32.xlu0 %v863, 90
      %v887 = vpop.permute.xlu0 %886
      %888 = vrot.lane.b32.xlu0 %v874, 90
      %v889 = vpop.permute.xlu0 %888
      %890 = vrot.lane.b32.xlu0 %v864, 90
      %v891 = vpop.permute.xlu0 %890
      %892 = vrot.lane.b32.xlu0 %v875, 90
      %v893 = vpop.permute.xlu0 %892
      %vm894 = vcmask 736256
      %v895 = vsel %vm894, %v877, %v879
      %v896 = vsel %vm894, %v879, %v881
      %v897 = vsel %vm894, %v881, %v883
      %v898 = vsel %vm894, %v883, %v885
      %v899 = vsel %vm894, %v885, %v887
      %v900 = vsel %vm894, %v887, %v889
      %v901 = vsel %vm894, %v889, %v891
      %v902 = vsel %vm894, %v891, %v893
      %911 = vst [vmem:[#allocation3 + $0xc0] sm:$0xf0] %v895
      %912 = vst [vmem:[#allocation3 + $0xc8] sm:$0xf0] %v896
      %913 = vst [vmem:[#allocation3 + $0xd0] sm:$0xf0] %v897
      %914 = vst [vmem:[#allocation3 + $0xd8] sm:$0xf0] %v898
      %915 = vst [vmem:[#allocation3 + $0xe0] sm:$0xf0] %v899
      %916 = vst [vmem:[#allocation3 + $0xe8] sm:$0xf0] %v900
      %917 = vst [vmem:[#allocation3 + $0xf0] sm:$0xf0] %v901
      %918 = vst [vmem:[#allocation3 + $0xf8] sm:$0xf0] %v902
      %v919 = vld [vmem:[#allocation2] sm:$0xff]
      %v920 = vld [vmem:[#allocation2 + $0x8] sm:$0xff]
      %v921 = vld [vmem:[#allocation2 + $0x10] sm:$0xff]
      %v922 = vld [vmem:[#allocation2 + $0x18] sm:$0xff]
      %v923 = vld [vmem:[#allocation2 + $0x20] sm:$0xf]
      %v929 = vcombine.high %v919, %v919
      %v930 = vcombine.high %v920, %v920
      %v931 = vcombine.high %v921, %v921
      %v932 = vcombine.high %v922, %v922
      %933 = vrot.lane.b32.xlu0 %v919, 89
      %v934 = vpop.permute.xlu0 %933
      %935 = vrot.lane.b32.xlu0 %v929, 89
      %v936 = vpop.permute.xlu0 %935
      %937 = vrot.lane.b32.xlu0 %v920, 89
      %v938 = vpop.permute.xlu0 %937
      %939 = vrot.lane.b32.xlu0 %v930, 89
      %v940 = vpop.permute.xlu0 %939
      %941 = vrot.lane.b32.xlu0 %v921, 89
      %v942 = vpop.permute.xlu0 %941
      %943 = vrot.lane.b32.xlu0 %v931, 89
      %v944 = vpop.permute.xlu0 %943
      %945 = vrot.lane.b32.xlu0 %v922, 89
      %v946 = vpop.permute.xlu0 %945
      %947 = vrot.lane.b32.xlu0 %v932, 89
      %v948 = vpop.permute.xlu0 %947
      %949 = vrot.lane.b32.xlu0 %v923, 89
      %v950 = vpop.permute.xlu0 %949
      %vm951 = vcmask 728064
      %v952 = vsel %vm951, %v934, %v936
      %v953 = vsel %vm951, %v936, %v938
      %v954 = vsel %vm951, %v938, %v940
      %v955 = vsel %vm951, %v940, %v942
      %v956 = vsel %vm951, %v942, %v944
      %v957 = vsel %vm951, %v944, %v946
      %v958 = vsel %vm951, %v946, %v948
      %v959 = vsel %vm951, %v948, %v950
      %968 = vst [vmem:[#allocation3 + $0x100] sm:$0xf] %v952
      %969 = vst [vmem:[#allocation3 + $0x108] sm:$0xf] %v953
      %970 = vst [vmem:[#allocation3 + $0x110] sm:$0xf] %v954
      %971 = vst [vmem:[#allocation3 + $0x118] sm:$0xf] %v955
      %972 = vst [vmem:[#allocation3 + $0x120] sm:$0xf] %v956
      %973 = vst [vmem:[#allocation3 + $0x128] sm:$0xf] %v957
      %974 = vst [vmem:[#allocation3 + $0x130] sm:$0xf] %v958
      %975 = vst [vmem:[#allocation3 + $0x138] sm:$0xf] %v959
      %v976 = vld [vmem:[#allocation2] sm:$0xff]
      %v977 = vld [vmem:[#allocation2 + $0x8] sm:$0xff]
      %v978 = vld [vmem:[#allocation2 + $0x10] sm:$0xff]
      %v979 = vld [vmem:[#allocation2 + $0x18] sm:$0xff]
      %v980 = vld [vmem:[#allocation2 + $0x20] sm:$0xf]
      %v986 = vcombine.low %v976, %v976
      %v987 = vcombine.low %v977, %v977
      %v988 = vcombine.low %v978, %v978
      %v989 = vcombine.low %v979, %v979
      %v990 = vcombine.low %v980, %v980
      %991 = vrot.lane.b32.xlu0 %v986, 11
      %v992 = vpop.permute.xlu0 %991
      %993 = vrot.lane.b32.xlu0 %v976, 11
      %v994 = vpop.permute.xlu0 %993
      %995 = vrot.lane.b32.xlu0 %v987, 11
      %v996 = vpop.permute.xlu0 %995
      %997 = vrot.lane.b32.xlu0 %v977, 11
      %v998 = vpop.permute.xlu0 %997
      %999 = vrot.lane.b32.xlu0 %v988, 11
      %v1000 = vpop.permute.xlu0 %999
      %1001 = vrot.lane.b32.xlu0 %v978, 11
      %v1002 = vpop.permute.xlu0 %1001
      %1003 = vrot.lane.b32.xlu0 %v989, 11
      %v1004 = vpop.permute.xlu0 %1003
      %1005 = vrot.lane.b32.xlu0 %v979, 11
      %v1006 = vpop.permute.xlu0 %1005
      %1007 = vrot.lane.b32.xlu0 %v990, 11
      %v1008 = vpop.permute.xlu0 %1007
      %vm1009 = vcmask 89088
      %v1010 = vsel %vm1009, %v992, %v994
      %v1011 = vsel %vm1009, %v994, %v996
      %v1012 = vsel %vm1009, %v996, %v998
      %v1013 = vsel %vm1009, %v998, %v1000
      %v1014 = vsel %vm1009, %v1000, %v1002
      %v1015 = vsel %vm1009, %v1002, %v1004
      %v1016 = vsel %vm1009, %v1004, %v1006
      %v1017 = vsel %vm1009, %v1006, %v1008
      %1026 = vst [vmem:[#allocation3 + $0x100] sm:$0xf0] %v1010
      %1027 = vst [vmem:[#allocation3 + $0x108] sm:$0xf0] %v1011
      %1028 = vst [vmem:[#allocation3 + $0x110] sm:$0xf0] %v1012
      %1029 = vst [vmem:[#allocation3 + $0x118] sm:$0xf0] %v1013
      %1030 = vst [vmem:[#allocation3 + $0x120] sm:$0xf0] %v1014
      %1031 = vst [vmem:[#allocation3 + $0x128] sm:$0xf0] %v1015
      %1032 = vst [vmem:[#allocation3 + $0x130] sm:$0xf0] %v1016
      %1033 = vst [vmem:[#allocation3 + $0x138] sm:$0xf0] %v1017
      %v1034 = vld [vmem:[#allocation2] sm:$0xff]
      %v1035 = vld [vmem:[#allocation2 + $0x8] sm:$0xff]
      %v1036 = vld [vmem:[#allocation2 + $0x10] sm:$0xff]
      %v1037 = vld [vmem:[#allocation2 + $0x18] sm:$0xff]
      %v1038 = vld [vmem:[#allocation2 + $0x20] sm:$0xf]
      %v1044 = vcombine.high %v1034, %v1034
      %v1045 = vcombine.high %v1035, %v1035
      %v1046 = vcombine.high %v1036, %v1036
      %v1047 = vcombine.high %v1037, %v1037
      %1048 = vrot.lane.b32.xlu0 %v1034, 10
      %v1049 = vpop.permute.xlu0 %1048
      %1050 = vrot.lane.b32.xlu0 %v1044, 10
      %v1051 = vpop.permute.xlu0 %1050
      %1052 = vrot.lane.b32.xlu0 %v1035, 10
      %v1053 = vpop.permute.xlu0 %1052
      %1054 = vrot.lane.b32.xlu0 %v1045, 10
      %v1055 = vpop.permute.xlu0 %1054
      %1056 = vrot.lane.b32.xlu0 %v1036, 10
      %v1057 = vpop.permute.xlu0 %1056
      %1058 = vrot.lane.b32.xlu0 %v1046, 10
      %v1059 = vpop.permute.xlu0 %1058
      %1060 = vrot.lane.b32.xlu0 %v1037, 10
      %v1061 = vpop.permute.xlu0 %1060
      %1062 = vrot.lane.b32.xlu0 %v1047, 10
      %v1063 = vpop.permute.xlu0 %1062
      %1064 = vrot.lane.b32.xlu0 %v1038, 10
      %v1065 = vpop.permute.xlu0 %1064
      %vm1066 = vcmask 80896
      %v1067 = vsel %vm1066, %v1049, %v1051
      %v1068 = vsel %vm1066, %v1051, %v1053
      %v1069 = vsel %vm1066, %v1053, %v1055
      %v1070 = vsel %vm1066, %v1055, %v1057
      %v1071 = vsel %vm1066, %v1057, %v1059
      %v1072 = vsel %vm1066, %v1059, %v1061
      %v1073 = vsel %vm1066, %v1061, %v1063
      %v1074 = vsel %vm1066, %v1063, %v1065
      %1083 = vst [vmem:[#allocation3 + $0x140] sm:$0xf] %v1067
      %1084 = vst [vmem:[#allocation3 + $0x148] sm:$0xf] %v1068
      %1085 = vst [vmem:[#allocation3 + $0x150] sm:$0xf] %v1069
      %1086 = vst [vmem:[#allocation3 + $0x158] sm:$0xf] %v1070
      %1087 = vst [vmem:[#allocation3 + $0x160] sm:$0xf] %v1071
      %1088 = vst [vmem:[#allocation3 + $0x168] sm:$0xf] %v1072
      %1089 = vst [vmem:[#allocation3 + $0x170] sm:$0xf] %v1073
      %1090 = vst [vmem:[#allocation3 + $0x178] sm:$0xf] %v1074
      %v1091 = vld [vmem:[#allocation2] sm:$0xff]
      %v1092 = vld [vmem:[#allocation2 + $0x8] sm:$0xff]
      %v1093 = vld [vmem:[#allocation2 + $0x10] sm:$0xff]
      %v1094 = vld [vmem:[#allocation2 + $0x18] sm:$0xff]
      %v1095 = vld [vmem:[#allocation2 + $0x20] sm:$0xf]
      %v1101 = vcombine.low %v1091, %v1091
      %v1102 = vcombine.low %v1092, %v1092
      %v1103 = vcombine.low %v1093, %v1093
      %v1104 = vcombine.low %v1094, %v1094
      %v1105 = vcombine.low %v1095, %v1095
      %1106 = vrot.lane.b32.xlu0 %v1101, 9
      %v1107 = vpop.permute.xlu0 %1106
      %1108 = vrot.lane.b32.xlu0 %v1091, 9
      %v1109 = vpop.permute.xlu0 %1108
      %1110 = vrot.lane.b32.xlu0 %v1102, 9
      %v1111 = vpop.permute.xlu0 %1110
      %1112 = vrot.lane.b32.xlu0 %v1092, 9
      %v1113 = vpop.permute.xlu0 %1112
      %1114 = vrot.lane.b32.xlu0 %v1103, 9
      %v1115 = vpop.permute.xlu0 %1114
      %1116 = vrot.lane.b32.xlu0 %v1093, 9
      %v1117 = vpop.permute.xlu0 %1116
      %1118 = vrot.lane.b32.xlu0 %v1104, 9
      %v1119 = vpop.permute.xlu0 %1118
      %1120 = vrot.lane.b32.xlu0 %v1094, 9
      %v1121 = vpop.permute.xlu0 %1120
      %1122 = vrot.lane.b32.xlu0 %v1105, 9
      %v1123 = vpop.permute.xlu0 %1122
      %vm1124 = vcmask 72704
      %v1125 = vsel %vm1124, %v1107, %v1109
      %v1126 = vsel %vm1124, %v1109, %v1111
      %v1127 = vsel %vm1124, %v1111, %v1113
      %v1128 = vsel %vm1124, %v1113, %v1115
      %v1129 = vsel %vm1124, %v1115, %v1117
      %v1130 = vsel %vm1124, %v1117, %v1119
      %v1131 = vsel %vm1124, %v1119, %v1121
      %v1132 = vsel %vm1124, %v1121, %v1123
      %1141 = vst [vmem:[#allocation3 + $0x140] sm:$0xf0] %v1125
      %1142 = vst [vmem:[#allocation3 + $0x148] sm:$0xf0] %v1126
      %1143 = vst [vmem:[#allocation3 + $0x150] sm:$0xf0] %v1127
      %1144 = vst [vmem:[#allocation3 + $0x158] sm:$0xf0] %v1128
      %1145 = vst [vmem:[#allocation3 + $0x160] sm:$0xf0] %v1129
      %1146 = vst [vmem:[#allocation3 + $0x168] sm:$0xf0] %v1130
      %1147 = vst [vmem:[#allocation3 + $0x170] sm:$0xf0] %v1131
      %1148 = vst [vmem:[#allocation3 + $0x178] sm:$0xf0] %v1132
      %v1149 = vld [vmem:[#allocation2] sm:$0xff]
      %v1150 = vld [vmem:[#allocation2 + $0x8] sm:$0xff]
      %v1151 = vld [vmem:[#allocation2 + $0x10] sm:$0xff]
      %v1152 = vld [vmem:[#allocation2 + $0x18] sm:$0xff]
      %v1153 = vld [vmem:[#allocation2 + $0x20] sm:$0xf]
      %v1159 = vcombine.high %v1149, %v1149
      %v1160 = vcombine.high %v1150, %v1150
      %v1161 = vcombine.high %v1151, %v1151
      %v1162 = vcombine.high %v1152, %v1152
      %1163 = vrot.lane.b32.xlu0 %v1149, 1
      %v1164 = vpop.permute.xlu0 %1163
      %1165 = vrot.lane.b32.xlu0 %v1159, 1
      %v1166 = vpop.permute.xlu0 %1165
      %1167 = vrot.lane.b32.xlu0 %v1150, 1
      %v1168 = vpop.permute.xlu0 %1167
      %1169 = vrot.lane.b32.xlu0 %v1160, 1
      %v1170 = vpop.permute.xlu0 %1169
      %1171 = vrot.lane.b32.xlu0 %v1151, 1
      %v1172 = vpop.permute.xlu0 %1171
      %1173 = vrot.lane.b32.xlu0 %v1161, 1
      %v1174 = vpop.permute.xlu0 %1173
      %1175 = vrot.lane.b32.xlu0 %v1152, 1
      %v1176 = vpop.permute.xlu0 %1175
      %1177 = vrot.lane.b32.xlu0 %v1162, 1
      %v1178 = vpop.permute.xlu0 %1177
      %1179 = vrot.lane.b32.xlu0 %v1153, 1
      %v1180 = vpop.permute.xlu0 %1179
      %vm1181 = vcmask 7168
      %v1182 = vsel %vm1181, %v1164, %v1166
      %v1183 = vsel %vm1181, %v1166, %v1168
      %v1184 = vsel %vm1181, %v1168, %v1170
      %v1185 = vsel %vm1181, %v1170, %v1172
      %v1186 = vsel %vm1181, %v1172, %v1174
      %v1187 = vsel %vm1181, %v1174, %v1176
      %v1188 = vsel %vm1181, %v1176, %v1178
      %v1189 = vsel %vm1181, %v1178, %v1180
      %1198 = vst [vmem:[#allocation3 + $0x180] sm:$0xf] %v1182
      %1199 = vst [vmem:[#allocation3 + $0x188] sm:$0xf] %v1183
      %1200 = vst [vmem:[#allocation3 + $0x190] sm:$0xf] %v1184
      %1201 = vst [vmem:[#allocation3 + $0x198] sm:$0xf] %v1185
      %1202 = vst [vmem:[#allocation3 + $0x1a0] sm:$0xf] %v1186
      %1203 = vst [vmem:[#allocation3 + $0x1a8] sm:$0xf] %v1187
      %1204 = vst [vmem:[#allocation3 + $0x1b0] sm:$0xf] %v1188
      %1205 = vst [vmem:[#allocation3 + $0x1b8] sm:$0xf] %v1189
      %v1206 = vld [vmem:[#allocation2 + $0x4] sm:$0xff]
      %v1207 = vld [vmem:[#allocation2 + $0xc] sm:$0xff]
      %v1208 = vld [vmem:[#allocation2 + $0x14] sm:$0xff]
      %v1209 = vld [vmem:[#allocation2 + $0x1c] sm:$0xff]
      %v1214 = vcombine.low %v1206, %v1206
      %v1215 = vcombine.low %v1207, %v1207
      %v1216 = vcombine.low %v1208, %v1208
      %v1217 = vcombine.low %v1209, %v1209
      %1222 = vst [vmem:[#allocation3 + $0x180] sm:$0xf0] %v1214
      %1223 = vst [vmem:[#allocation3 + $0x188] sm:$0xf0] %v1206
      %1224 = vst [vmem:[#allocation3 + $0x190] sm:$0xf0] %v1215
      %1225 = vst [vmem:[#allocation3 + $0x198] sm:$0xf0] %v1207
      %1226 = vst [vmem:[#allocation3 + $0x1a0] sm:$0xf0] %v1216
      %1227 = vst [vmem:[#allocation3 + $0x1a8] sm:$0xf0] %v1208
      %1228 = vst [vmem:[#allocation3 + $0x1b0] sm:$0xf0] %v1217
      %1229 = vst [vmem:[#allocation3 + $0x1b8] sm:$0xf0] %v1209
      %v1230 = vld [vmem:[#allocation2 + $0x4] sm:$0xff]
      %v1231 = vld [vmem:[#allocation2 + $0xc] sm:$0xff]
      %v1232 = vld [vmem:[#allocation2 + $0x14] sm:$0xff]
      %v1233 = vld [vmem:[#allocation2 + $0x1c] sm:$0xff]
      %v1234 = vld [vmem:[#allocation2 + $0x24] sm:$0xf]
      %v1240 = vcombine.high %v1230, %v1230
      %v1241 = vcombine.high %v1231, %v1231
      %v1242 = vcombine.high %v1232, %v1232
      %v1243 = vcombine.high %v1233, %v1233
      %1244 = vrot.lane.b32.xlu0 %v1230, 127
      %v1245 = vpop.permute.xlu0 %1244
      %1246 = vrot.lane.b32.xlu0 %v1240, 127
      %v1247 = vpop.permute.xlu0 %1246
      %1248 = vrot.lane.b32.xlu0 %v1231, 127
      %v1249 = vpop.permute.xlu0 %1248
      %1250 = vrot.lane.b32.xlu0 %v1241, 127
      %v1251 = vpop.permute.xlu0 %1250
      %1252 = vrot.lane.b32.xlu0 %v1232, 127
      %v1253 = vpop.permute.xlu0 %1252
      %1254 = vrot.lane.b32.xlu0 %v1242, 127
      %v1255 = vpop.permute.xlu0 %1254
      %1256 = vrot.lane.b32.xlu0 %v1233, 127
      %v1257 = vpop.permute.xlu0 %1256
      %1258 = vrot.lane.b32.xlu0 %v1243, 127
      %v1259 = vpop.permute.xlu0 %1258
      %1260 = vrot.lane.b32.xlu0 %v1234, 127
      %v1261 = vpop.permute.xlu0 %1260
      %vm1262 = vcmask 1039360
      %v1263 = vsel %vm1262, %v1245, %v1247
      %v1264 = vsel %vm1262, %v1247, %v1249
      %v1265 = vsel %vm1262, %v1249, %v1251
      %v1266 = vsel %vm1262, %v1251, %v1253
      %v1267 = vsel %vm1262, %v1253, %v1255
      %v1268 = vsel %vm1262, %v1255, %v1257
      %v1269 = vsel %vm1262, %v1257, %v1259
      %v1270 = vsel %vm1262, %v1259, %v1261
      %1279 = vst [vmem:[#allocation3 + $0x1c0] sm:$0xf] %v1263
      %1280 = vst [vmem:[#allocation3 + $0x1c8] sm:$0xf] %v1264
      %1281 = vst [vmem:[#allocation3 + $0x1d0] sm:$0xf] %v1265
      %1282 = vst [vmem:[#allocation3 + $0x1d8] sm:$0xf] %v1266
      %1283 = vst [vmem:[#allocation3 + $0x1e0] sm:$0xf] %v1267
      %1284 = vst [vmem:[#allocation3 + $0x1e8] sm:$0xf] %v1268
      %1285 = vst [vmem:[#allocation3 + $0x1f0] sm:$0xf] %v1269
      %1286 = vst [vmem:[#allocation3 + $0x1f8] sm:$0xf] %v1270
      %v1287 = vld [vmem:[#allocation2 + $0x4] sm:$0xff]
      %v1288 = vld [vmem:[#allocation2 + $0xc] sm:$0xff]
      %v1289 = vld [vmem:[#allocation2 + $0x14] sm:$0xff]
      %v1290 = vld [vmem:[#allocation2 + $0x1c] sm:$0xff]
      %v1291 = vld [vmem:[#allocation2 + $0x24] sm:$0xf]
      %v1297 = vcombine.low %v1287, %v1287
      %v1298 = vcombine.low %v1288, %v1288
      %v1299 = vcombine.low %v1289, %v1289
      %v1300 = vcombine.low %v1290, %v1290
      %v1301 = vcombine.low %v1291, %v1291
      %1302 = vrot.lane.b32.xlu0 %v1297, 119
      %v1303 = vpop.permute.xlu0 %1302
      %1304 = vrot.lane.b32.xlu0 %v1287, 119
      %v1305 = vpop.permute.xlu0 %1304
      %1306 = vrot.lane.b32.xlu0 %v1298, 119
      %v1307 = vpop.permute.xlu0 %1306
      %1308 = vrot.lane.b32.xlu0 %v1288, 119
      %v1309 = vpop.permute.xlu0 %1308
      %1310 = vrot.lane.b32.xlu0 %v1299, 119
      %v1311 = vpop.permute.xlu0 %1310
      %1312 = vrot.lane.b32.xlu0 %v1289, 119
      %v1313 = vpop.permute.xlu0 %1312
      %1314 = vrot.lane.b32.xlu0 %v1300, 119
      %v1315 = vpop.permute.xlu0 %1314
      %1316 = vrot.lane.b32.xlu0 %v1290, 119
      %v1317 = vpop.permute.xlu0 %1316
      %1318 = vrot.lane.b32.xlu0 %v1301, 119
      %v1319 = vpop.permute.xlu0 %1318
      %vm1320 = vcmask 973824
      %v1321 = vsel %vm1320, %v1303, %v1305
      %v1322 = vsel %vm1320, %v1305, %v1307
      %v1323 = vsel %vm1320, %v1307, %v1309
      %v1324 = vsel %vm1320, %v1309, %v1311
      %v1325 = vsel %vm1320, %v1311, %v1313
      %v1326 = vsel %vm1320, %v1313, %v1315
      %v1327 = vsel %vm1320, %v1315, %v1317
      %v1328 = vsel %vm1320, %v1317, %v1319
      %1337 = vst [vmem:[#allocation3 + $0x1c0] sm:$0xf0] %v1321
      %1338 = vst [vmem:[#allocation3 + $0x1c8] sm:$0xf0] %v1322
      %1339 = vst [vmem:[#allocation3 + $0x1d0] sm:$0xf0] %v1323
      %1340 = vst [vmem:[#allocation3 + $0x1d8] sm:$0xf0] %v1324
      %1341 = vst [vmem:[#allocation3 + $0x1e0] sm:$0xf0] %v1325
      %1342 = vst [vmem:[#allocation3 + $0x1e8] sm:$0xf0] %v1326
      %1343 = vst [vmem:[#allocation3 + $0x1f0] sm:$0xf0] %v1327
      %1344 = vst [vmem:[#allocation3 + $0x1f8] sm:$0xf0] %v1328
      %v1345 = vld [vmem:[#allocation2 + $0x4] sm:$0xff]
      %v1346 = vld [vmem:[#allocation2 + $0xc] sm:$0xff]
      %v1347 = vld [vmem:[#allocation2 + $0x14] sm:$0xff]
      %v1348 = vld [vmem:[#allocation2 + $0x1c] sm:$0xff]
      %v1349 = vld [vmem:[#allocation2 + $0x24] sm:$0xf]
      %v1355 = vcombine.high %v1345, %v1345
      %v1356 = vcombine.high %v1346, %v1346
      %v1357 = vcombine.high %v1347, %v1347
      %v1358 = vcombine.high %v1348, %v1348
      %1359 = vrot.lane.b32.xlu0 %v1345, 118
      %v1360 = vpop.permute.xlu0 %1359
      %1361 = vrot.lane.b32.xlu0 %v1355, 118
      %v1362 = vpop.permute.xlu0 %1361
      %1363 = vrot.lane.b32.xlu0 %v1346, 118
      %v1364 = vpop.permute.xlu0 %1363
      %1365 = vrot.lane.b32.xlu0 %v1356, 118
      %v1366 = vpop.permute.xlu0 %1365
      %1367 = vrot.lane.b32.xlu0 %v1347, 118
      %v1368 = vpop.permute.xlu0 %1367
      %1369 = vrot.lane.b32.xlu0 %v1357, 118
      %v1370 = vpop.permute.xlu0 %1369
      %1371 = vrot.lane.b32.xlu0 %v1348, 118
      %v1372 = vpop.permute.xlu0 %1371
      %1373 = vrot.lane.b32.xlu0 %v1358, 118
      %v1374 = vpop.permute.xlu0 %1373
      %1375 = vrot.lane.b32.xlu0 %v1349, 118
      %v1376 = vpop.permute.xlu0 %1375
      %vm1377 = vcmask 965632
      %v1378 = vsel %vm1377, %v1360, %v1362
      %v1379 = vsel %vm1377, %v1362, %v1364
      %v1380 = vsel %vm1377, %v1364, %v1366
      %v1381 = vsel %vm1377, %v1366, %v1368
      %v1382 = vsel %vm1377, %v1368, %v1370
      %v1383 = vsel %vm1377, %v1370, %v1372
      %v1384 = vsel %vm1377, %v1372, %v1374
      %v1385 = vsel %vm1377, %v1374, %v1376
      %1394 = vst [vmem:[#allocation3 + $0x200] sm:$0xf] %v1378
      %1395 = vst [vmem:[#allocation3 + $0x208] sm:$0xf] %v1379
      %1396 = vst [vmem:[#allocation3 + $0x210] sm:$0xf] %v1380
      %1397 = vst [vmem:[#allocation3 + $0x218] sm:$0xf] %v1381
      %1398 = vst [vmem:[#allocation3 + $0x220] sm:$0xf] %v1382
      %1399 = vst [vmem:[#allocation3 + $0x228] sm:$0xf] %v1383
      %1400 = vst [vmem:[#allocation3 + $0x230] sm:$0xf] %v1384
      %1401 = vst [vmem:[#allocation3 + $0x238] sm:$0xf] %v1385
      %v1402 = vld [vmem:[#allocation2 + $0x4] sm:$0xff]
      %v1403 = vld [vmem:[#allocation2 + $0xc] sm:$0xff]
      %v1404 = vld [vmem:[#allocation2 + $0x14] sm:$0xff]
      %v1405 = vld [vmem:[#allocation2 + $0x1c] sm:$0xff]
      %v1406 = vld [vmem:[#allocation2 + $0x24] sm:$0xf]
      %v1412 = vcombine.low %v1402, %v1402
      %v1413 = vcombine.low %v1403, %v1403
      %v1414 = vcombine.low %v1404, %v1404
      %v1415 = vcombine.low %v1405, %v1405
      %v1416 = vcombine.low %v1406, %v1406
      %1417 = vrot.lane.b32.xlu0 %v1412, 117
      %v1418 = vpop.permute.xlu0 %1417
      %1419 = vrot.lane.b32.xlu0 %v1402, 117
      %v1420 = vpop.permute.xlu0 %1419
      %1421 = vrot.lane.b32.xlu0 %v1413, 117
      %v1422 = vpop.permute.xlu0 %1421
      %1423 = vrot.lane.b32.xlu0 %v1403, 117
      %v1424 = vpop.permute.xlu0 %1423
      %1425 = vrot.lane.b32.xlu0 %v1414, 117
      %v1426 = vpop.permute.xlu0 %1425
      %1427 = vrot.lane.b32.xlu0 %v1404, 117
      %v1428 = vpop.permute.xlu0 %1427
      %1429 = vrot.lane.b32.xlu0 %v1415, 117
      %v1430 = vpop.permute.xlu0 %1429
      %1431 = vrot.lane.b32.xlu0 %v1405, 117
      %v1432 = vpop.permute.xlu0 %1431
      %1433 = vrot.lane.b32.xlu0 %v1416, 117
      %v1434 = vpop.permute.xlu0 %1433
      %vm1435 = vcmask 957440
      %v1436 = vsel %vm1435, %v1418, %v1420
      %v1437 = vsel %vm1435, %v1420, %v1422
      %v1438 = vsel %vm1435, %v1422, %v1424
      %v1439 = vsel %vm1435, %v1424, %v1426
      %v1440 = vsel %vm1435, %v1426, %v1428
      %v1441 = vsel %vm1435, %v1428, %v1430
      %v1442 = vsel %vm1435, %v1430, %v1432
      %v1443 = vsel %vm1435, %v1432, %v1434
      %1452 = vst [vmem:[#allocation3 + $0x200] sm:$0xf0] %v1436
      %1453 = vst [vmem:[#allocation3 + $0x208] sm:$0xf0] %v1437
      %1454 = vst [vmem:[#allocation3 + $0x210] sm:$0xf0] %v1438
      %1455 = vst [vmem:[#allocation3 + $0x218] sm:$0xf0] %v1439
      %1456 = vst [vmem:[#allocation3 + $0x220] sm:$0xf0] %v1440
      %1457 = vst [vmem:[#allocation3 + $0x228] sm:$0xf0] %v1441
      %1458 = vst [vmem:[#allocation3 + $0x230] sm:$0xf0] %v1442
      %1459 = vst [vmem:[#allocation3 + $0x238] sm:$0xf0] %v1443
      %v1460 = vld [vmem:[#allocation2 + $0x4] sm:$0xff]
      %v1461 = vld [vmem:[#allocation2 + $0xc] sm:$0xff]
      %v1462 = vld [vmem:[#allocation2 + $0x14] sm:$0xff]
      %v1463 = vld [vmem:[#allocation2 + $0x1c] sm:$0xff]
      %v1464 = vld [vmem:[#allocation2 + $0x24] sm:$0xf]
      %v1470 = vcombine.high %v1460, %v1460
      %v1471 = vcombine.high %v1461, %v1461
      %v1472 = vcombine.high %v1462, %v1462
      %v1473 = vcombine.high %v1463, %v1463
      %1474 = vrot.lane.b32.xlu0 %v1460, 39
      %v1475 = vpop.permute.xlu0 %1474
      %1476 = vrot.lane.b32.xlu0 %v1470, 39
      %v1477 = vpop.permute.xlu0 %1476
      %1478 = vrot.lane.b32.xlu0 %v1461, 39
      %v1479 = vpop.permute.xlu0 %1478
      %1480 = vrot.lane.b32.xlu0 %v1471, 39
      %v1481 = vpop.permute.xlu0 %1480
      %1482 = vrot.lane.b32.xlu0 %v1462, 39
      %v1483 = vpop.permute.xlu0 %1482
      %1484 = vrot.lane.b32.xlu0 %v1472, 39
      %v1485 = vpop.permute.xlu0 %1484
      %1486 = vrot.lane.b32.xlu0 %v1463, 39
      %v1487 = vpop.permute.xlu0 %1486
      %1488 = vrot.lane.b32.xlu0 %v1473, 39
      %v1489 = vpop.permute.xlu0 %1488
      %1490 = vrot.lane.b32.xlu0 %v1464, 39
      %v1491 = vpop.permute.xlu0 %1490
      %vm1492 = vcmask 318464
      %v1493 = vsel %vm1492, %v1475, %v1477
      %v1494 = vsel %vm1492, %v1477, %v1479
      %v1495 = vsel %vm1492, %v1479, %v1481
      %v1496 = vsel %vm1492, %v1481, %v1483
      %v1497 = vsel %vm1492, %v1483, %v1485
      %v1498 = vsel %vm1492, %v1485, %v1487
      %v1499 = vsel %vm1492, %v1487, %v1489
      %v1500 = vsel %vm1492, %v1489, %v1491
      %1509 = vst [vmem:[#allocation3 + $0x240] sm:$0xf] %v1493
      %1510 = vst [vmem:[#allocation3 + $0x248] sm:$0xf] %v1494
      %1511 = vst [vmem:[#allocation3 + $0x250] sm:$0xf] %v1495
      %1512 = vst [vmem:[#allocation3 + $0x258] sm:$0xf] %v1496
      %1513 = vst [vmem:[#allocation3 + $0x260] sm:$0xf] %v1497
      %1514 = vst [vmem:[#allocation3 + $0x268] sm:$0xf] %v1498
      %1515 = vst [vmem:[#allocation3 + $0x270] sm:$0xf] %v1499
      %1516 = vst [vmem:[#allocation3 + $0x278] sm:$0xf] %v1500
      %v1517 = vld [vmem:[#allocation2 + $0x4] sm:$0xff]
      %v1518 = vld [vmem:[#allocation2 + $0xc] sm:$0xff]
      %v1519 = vld [vmem:[#allocation2 + $0x14] sm:$0xff]
      %v1520 = vld [vmem:[#allocation2 + $0x1c] sm:$0xff]
      %v1521 = vld [vmem:[#allocation2 + $0x24] sm:$0xf]
      %v1527 = vcombine.low %v1517, %v1517
      %v1528 = vcombine.low %v1518, %v1518
      %v1529 = vcombine.low %v1519, %v1519
      %v1530 = vcombine.low %v1520, %v1520
      %v1531 = vcombine.low %v1521, %v1521
      %1532 = vrot.lane.b32.xlu0 %v1527, 38
      %v1533 = vpop.permute.xlu0 %1532
      %1534 = vrot.lane.b32.xlu0 %v1517, 38
      %v1535 = vpop.permute.xlu0 %1534
      %1536 = vrot.lane.b32.xlu0 %v1528, 38
      %v1537 = vpop.permute.xlu0 %1536
      %1538 = vrot.lane.b32.xlu0 %v1518, 38
      %v1539 = vpop.permute.xlu0 %1538
      %1540 = vrot.lane.b32.xlu0 %v1529, 38
      %v1541 = vpop.permute.xlu0 %1540
      %1542 = vrot.lane.b32.xlu0 %v1519, 38
      %v1543 = vpop.permute.xlu0 %1542
      %1544 = vrot.lane.b32.xlu0 %v1530, 38
      %v1545 = vpop.permute.xlu0 %1544
      %1546 = vrot.lane.b32.xlu0 %v1520, 38
      %v1547 = vpop.permute.xlu0 %1546
      %1548 = vrot.lane.b32.xlu0 %v1531, 38
      %v1549 = vpop.permute.xlu0 %1548
      %vm1550 = vcmask 310272
      %v1551 = vsel %vm1550, %v1533, %v1535
      %v1552 = vsel %vm1550, %v1535, %v1537
      %v1553 = vsel %vm1550, %v1537, %v1539
      %v1554 = vsel %vm1550, %v1539, %v1541
      %v1555 = vsel %vm1550, %v1541, %v1543
      %v1556 = vsel %vm1550, %v1543, %v1545
      %v1557 = vsel %vm1550, %v1545, %v1547
      %v1558 = vsel %vm1550, %v1547, %v1549
      %1567 = vst [vmem:[#allocation3 + $0x240] sm:$0xf0] %v1551
      %1568 = vst [vmem:[#allocation3 + $0x248] sm:$0xf0] %v1552
      %1569 = vst [vmem:[#allocation3 + $0x250] sm:$0xf0] %v1553
      %1570 = vst [vmem:[#allocation3 + $0x258] sm:$0xf0] %v1554
      %1571 = vst [vmem:[#allocation3 + $0x260] sm:$0xf0] %v1555
      %1572 = vst [vmem:[#allocation3 + $0x268] sm:$0xf0] %v1556
      %1573 = vst [vmem:[#allocation3 + $0x270] sm:$0xf0] %v1557
      %1574 = vst [vmem:[#allocation3 + $0x278] sm:$0xf0] %v1558
      %v1575 = vld [vmem:[#allocation2 + $0x4] sm:$0xff]
      %v1576 = vld [vmem:[#allocation2 + $0xc] sm:$0xff]
      %v1577 = vld [vmem:[#allocation2 + $0x14] sm:$0xff]
      %v1578 = vld [vmem:[#allocation2 + $0x1c] sm:$0xff]
      %v1579 = vld [vmem:[#allocation2 + $0x24] sm:$0xf]
      %v1585 = vcombine.high %v1575, %v1575
      %v1586 = vcombine.high %v1576, %v1576
      %v1587 = vcombine.high %v1577, %v1577
      %v1588 = vcombine.high %v1578, %v1578
      %1589 = vrot.lane.b32.xlu0 %v1575, 37
      %v1590 = vpop.permute.xlu0 %1589
      %1591 = vrot.lane.b32.xlu0 %v1585, 37
      %v1592 = vpop.permute.xlu0 %1591
      %1593 = vrot.lane.b32.xlu0 %v1576, 37
      %v1594 = vpop.permute.xlu0 %1593
      %1595 = vrot.lane.b32.xlu0 %v1586, 37
      %v1596 = vpop.permute.xlu0 %1595
      %1597 = vrot.lane.b32.xlu0 %v1577, 37
      %v1598 = vpop.permute.xlu0 %1597
      %1599 = vrot.lane.b32.xlu0 %v1587, 37
      %v1600 = vpop.permute.xlu0 %1599
      %1601 = vrot.lane.b32.xlu0 %v1578, 37
      %v1602 = vpop.permute.xlu0 %1601
      %1603 = vrot.lane.b32.xlu0 %v1588, 37
      %v1604 = vpop.permute.xlu0 %1603
      %1605 = vrot.lane.b32.xlu0 %v1579, 37
      %v1606 = vpop.permute.xlu0 %1605
      %vm1607 = vcmask 302080
      %v1608 = vsel %vm1607, %v1590, %v1592
      %v1609 = vsel %vm1607, %v1592, %v1594
      %v1610 = vsel %vm1607, %v1594, %v1596
      %v1611 = vsel %vm1607, %v1596, %v1598
      %v1612 = vsel %vm1607, %v1598, %v1600
      %v1613 = vsel %vm1607, %v1600, %v1602
      %v1614 = vsel %vm1607, %v1602, %v1604
      %v1615 = vsel %vm1607, %v1604, %v1606
      %1624 = vst [vmem:[#allocation3 + $0x280] sm:$0xf] %v1608
      %1625 = vst [vmem:[#allocation3 + $0x288] sm:$0xf] %v1609
      %1626 = vst [vmem:[#allocation3 + $0x290] sm:$0xf] %v1610
      %1627 = vst [vmem:[#allocation3 + $0x298] sm:$0xf] %v1611
      %1628 = vst [vmem:[#allocation3 + $0x2a0] sm:$0xf] %v1612
      %1629 = vst [vmem:[#allocation3 + $0x2a8] sm:$0xf] %v1613
      %1630 = vst [vmem:[#allocation3 + $0x2b0] sm:$0xf] %v1614
      %1631 = vst [vmem:[#allocation3 + $0x2b8] sm:$0xf] %v1615
      %v1632 = vld [vmem:[#allocation2 + $0x4] sm:$0xff]
      %v1633 = vld [vmem:[#allocation2 + $0xc] sm:$0xff]
      %v1634 = vld [vmem:[#allocation2 + $0x14] sm:$0xff]
      %v1635 = vld [vmem:[#allocation2 + $0x1c] sm:$0xff]
      %v1636 = vld [vmem:[#allocation2 + $0x24] sm:$0xf]
      %v1642 = vcombine.low %v1632, %v1632
      %v1643 = vcombine.low %v1633, %v1633
      %v1644 = vcombine.low %v1634, %v1634
      %v1645 = vcombine.low %v1635, %v1635
      %v1646 = vcombine.low %v1636, %v1636
      %1647 = vrot.lane.b32.xlu0 %v1642, 29
      %v1648 = vpop.permute.xlu0 %1647
      %1649 = vrot.lane.b32.xlu0 %v1632, 29
      %v1650 = vpop.permute.xlu0 %1649
      %1651 = vrot.lane.b32.xlu0 %v1643, 29
      %v1652 = vpop.permute.xlu0 %1651
      %1653 = vrot.lane.b32.xlu0 %v1633, 29
      %v1654 = vpop.permute.xlu0 %1653
      %1655 = vrot.lane.b32.xlu0 %v1644, 29
      %v1656 = vpop.permute.xlu0 %1655
      %1657 = vrot.lane.b32.xlu0 %v1634, 29
      %v1658 = vpop.permute.xlu0 %1657
      %1659 = vrot.lane.b32.xlu0 %v1645, 29
      %v1660 = vpop.permute.xlu0 %1659
      %1661 = vrot.lane.b32.xlu0 %v1635, 29
      %v1662 = vpop.permute.xlu0 %1661
      %1663 = vrot.lane.b32.xlu0 %v1646, 29
      %v1664 = vpop.permute.xlu0 %1663
      %vm1665 = vcmask 236544
      %v1666 = vsel %vm1665, %v1648, %v1650
      %v1667 = vsel %vm1665, %v1650, %v1652
      %v1668 = vsel %vm1665, %v1652, %v1654
      %v1669 = vsel %vm1665, %v1654, %v1656
      %v1670 = vsel %vm1665, %v1656, %v1658
      %v1671 = vsel %vm1665, %v1658, %v1660
      %v1672 = vsel %vm1665, %v1660, %v1662
      %v1673 = vsel %vm1665, %v1662, %v1664
      %1682 = vst [vmem:[#allocation3 + $0x280] sm:$0xf0] %v1666
      %1683 = vst [vmem:[#allocation3 + $0x288] sm:$0xf0] %v1667
      %1684 = vst [vmem:[#allocation3 + $0x290] sm:$0xf0] %v1668
      %1685 = vst [vmem:[#allocation3 + $0x298] sm:$0xf0] %v1669
      %1686 = vst [vmem:[#allocation3 + $0x2a0] sm:$0xf0] %v1670
      %1687 = vst [vmem:[#allocation3 + $0x2a8] sm:$0xf0] %v1671
      %1688 = vst [vmem:[#allocation3 + $0x2b0] sm:$0xf0] %v1672
      %1689 = vst [vmem:[#allocation3 + $0x2b8] sm:$0xf0] %v1673
      %v1690 = vld [vmem:[#allocation2 + $0x4] sm:$0xff]
      %v1691 = vld [vmem:[#allocation2 + $0xc] sm:$0xff]
      %v1692 = vld [vmem:[#allocation2 + $0x14] sm:$0xff]
      %v1693 = vld [vmem:[#allocation2 + $0x1c] sm:$0xff]
      %v1694 = vld [vmem:[#allocation2 + $0x24] sm:$0xf]
      %v1700 = vcombine.high %v1690, %v1690
      %v1701 = vcombine.high %v1691, %v1691
      %v1702 = vcombine.high %v1692, %v1692
      %v1703 = vcombine.high %v1693, %v1693
      %1704 = vrot.lane.b32.xlu0 %v1690, 28
      %v1705 = vpop.permute.xlu0 %1704
      %1706 = vrot.lane.b32.xlu0 %v1700, 28
      %v1707 = vpop.permute.xlu0 %1706
      %1708 = vrot.lane.b32.xlu0 %v1691, 28
      %v1709 = vpop.permute.xlu0 %1708
      %1710 = vrot.lane.b32.xlu0 %v1701, 28
      %v1711 = vpop.permute.xlu0 %1710
      %1712 = vrot.lane.b32.xlu0 %v1692, 28
      %v1713 = vpop.permute.xlu0 %1712
      %1714 = vrot.lane.b32.xlu0 %v1702, 28
      %v1715 = vpop.permute.xlu0 %1714
      %1716 = vrot.lane.b32.xlu0 %v1693, 28
      %v1717 = vpop.permute.xlu0 %1716
      %1718 = vrot.lane.b32.xlu0 %v1703, 28
      %v1719 = vpop.permute.xlu0 %1718
      %1720 = vrot.lane.b32.xlu0 %v1694, 28
      %v1721 = vpop.permute.xlu0 %1720
      %vm1722 = vcmask 228352
      %v1723 = vsel %vm1722, %v1705, %v1707
      %v1724 = vsel %vm1722, %v1707, %v1709
      %v1725 = vsel %vm1722, %v1709, %v1711
      %v1726 = vsel %vm1722, %v1711, %v1713
      %v1727 = vsel %vm1722, %v1713, %v1715
      %v1728 = vsel %vm1722, %v1715, %v1717
      %v1729 = vsel %vm1722, %v1717, %v1719
      %v1730 = vsel %vm1722, %v1719, %v1721
      %1739 = vst [vmem:[#allocation3 + $0x2c0] sm:$0xf] %v1723
      %1740 = vst [vmem:[#allocation3 + $0x2c8] sm:$0xf] %v1724
      %1741 = vst [vmem:[#allocation3 + $0x2d0] sm:$0xf] %v1725
      %1742 = vst [vmem:[#allocation3 + $0x2d8] sm:$0xf] %v1726
      %1743 = vst [vmem:[#allocation3 + $0x2e0] sm:$0xf] %v1727
      %1744 = vst [vmem:[#allocation3 + $0x2e8] sm:$0xf] %v1728
      %1745 = vst [vmem:[#allocation3 + $0x2f0] sm:$0xf] %v1729
      %1746 = vst [vmem:[#allocation3 + $0x2f8] sm:$0xf] %v1730
      %v1747 = vld [vmem:[#allocation2 + $0x4] sm:$0xff]
      %v1748 = vld [vmem:[#allocation2 + $0xc] sm:$0xff]
      %v1749 = vld [vmem:[#allocation2 + $0x14] sm:$0xff]
      %v1750 = vld [vmem:[#allocation2 + $0x1c] sm:$0xff]
      %v1751 = vld [vmem:[#allocation2 + $0x24] sm:$0xf]
      %v1757 = vcombine.low %v1747, %v1747
      %v1758 = vcombine.low %v1748, %v1748
      %v1759 = vcombine.low %v1749, %v1749
      %v1760 = vcombine.low %v1750, %v1750
      %v1761 = vcombine.low %v1751, %v1751
      %1762 = vrot.lane.b32.xlu0 %v1757, 27
      %v1763 = vpop.permute.xlu0 %1762
      %1764 = vrot.lane.b32.xlu0 %v1747, 27
      %v1765 = vpop.permute.xlu0 %1764
      %1766 = vrot.lane.b32.xlu0 %v1758, 27
      %v1767 = vpop.permute.xlu0 %1766
      %1768 = vrot.lane.b32.xlu0 %v1748, 27
      %v1769 = vpop.permute.xlu0 %1768
      %1770 = vrot.lane.b32.xlu0 %v1759, 27
      %v1771 = vpop.permute.xlu0 %1770
      %1772 = vrot.lane.b32.xlu0 %v1749, 27
      %v1773 = vpop.permute.xlu0 %1772
      %1774 = vrot.lane.b32.xlu0 %v1760, 27
      %v1775 = vpop.permute.xlu0 %1774
      %1776 = vrot.lane.b32.xlu0 %v1750, 27
      %v1777 = vpop.permute.xlu0 %1776
      %1778 = vrot.lane.b32.xlu0 %v1761, 27
      %v1779 = vpop.permute.xlu0 %1778
      %vm1780 = vcmask 220160
      %v1781 = vsel %vm1780, %v1763, %v1765
      %v1782 = vsel %vm1780, %v1765, %v1767
      %v1783 = vsel %vm1780, %v1767, %v1769
      %v1784 = vsel %vm1780, %v1769, %v1771
      %v1785 = vsel %vm1780, %v1771, %v1773
      %v1786 = vsel %vm1780, %v1773, %v1775
      %v1787 = vsel %vm1780, %v1775, %v1777
      %v1788 = vsel %vm1780, %v1777, %v1779
      %1797 = vst [vmem:[#allocation3 + $0x2c0] sm:$0xf0] %v1781
      %1798 = vst [vmem:[#allocation3 + $0x2c8] sm:$0xf0] %v1782
      %1799 = vst [vmem:[#allocation3 + $0x2d0] sm:$0xf0] %v1783
      %1800 = vst [vmem:[#allocation3 + $0x2d8] sm:$0xf0] %v1784
      %1801 = vst [vmem:[#allocation3 + $0x2e0] sm:$0xf0] %v1785
      %1802 = vst [vmem:[#allocation3 + $0x2e8] sm:$0xf0] %v1786
      %1803 = vst [vmem:[#allocation3 + $0x2f0] sm:$0xf0] %v1787
      %1804 = vst [vmem:[#allocation3 + $0x2f8] sm:$0xf0] %v1788
      %v1805 = vld [vmem:[#allocation2 + $0x4] sm:$0xff]
      %v1806 = vld [vmem:[#allocation2 + $0xc] sm:$0xff]
      %v1807 = vld [vmem:[#allocation2 + $0x14] sm:$0xff]
      %v1808 = vld [vmem:[#allocation2 + $0x1c] sm:$0xff]
      %v1809 = vld [vmem:[#allocation2 + $0x24] sm:$0xf]
      %v1815 = vcombine.high %v1805, %v1805
      %v1816 = vcombine.high %v1806, %v1806
      %v1817 = vcombine.high %v1807, %v1807
      %v1818 = vcombine.high %v1808, %v1808
      %1819 = vrot.lane.b32.xlu0 %v1805, 19
      %v1820 = vpop.permute.xlu0 %1819
      %1821 = vrot.lane.b32.xlu0 %v1815, 19
      %v1822 = vpop.permute.xlu0 %1821
      %1823 = vrot.lane.b32.xlu0 %v1806, 19
      %v1824 = vpop.permute.xlu0 %1823
      %1825 = vrot.lane.b32.xlu0 %v1816, 19
      %v1826 = vpop.permute.xlu0 %1825
      %1827 = vrot.lane.b32.xlu0 %v1807, 19
      %v1828 = vpop.permute.xlu0 %1827
      %1829 = vrot.lane.b32.xlu0 %v1817, 19
      %v1830 = vpop.permute.xlu0 %1829
      %1831 = vrot.lane.b32.xlu0 %v1808, 19
      %v1832 = vpop.permute.xlu0 %1831
      %1833 = vrot.lane.b32.xlu0 %v1818, 19
      %v1834 = vpop.permute.xlu0 %1833
      %1835 = vrot.lane.b32.xlu0 %v1809, 19
      %v1836 = vpop.permute.xlu0 %1835
      %vm1837 = vcmask 154624
      %v1838 = vsel %vm1837, %v1820, %v1822
      %v1839 = vsel %vm1837, %v1822, %v1824
      %v1840 = vsel %vm1837, %v1824, %v1826
      %v1841 = vsel %vm1837, %v1826, %v1828
      %v1842 = vsel %vm1837, %v1828, %v1830
      %v1843 = vsel %vm1837, %v1830, %v1832
      %v1844 = vsel %vm1837, %v1832, %v1834
      %v1845 = vsel %vm1837, %v1834, %v1836
      %1854 = vst [vmem:[#allocation3 + $0x300] sm:$0xf] %v1838
      %1855 = vst [vmem:[#allocation3 + $0x308] sm:$0xf] %v1839
      %1856 = vst [vmem:[#allocation3 + $0x310] sm:$0xf] %v1840
      %1857 = vst [vmem:[#allocation3 + $0x318] sm:$0xf] %v1841
      %1858 = vst [vmem:[#allocation3 + $0x320] sm:$0xf] %v1842
      %1859 = vst [vmem:[#allocation3 + $0x328] sm:$0xf] %v1843
      %1860 = vst [vmem:[#allocation3 + $0x330] sm:$0xf] %v1844
      %1861 = vst [vmem:[#allocation3 + $0x338] sm:$0xf] %v1845
      %v1862 = vld [vmem:[#allocation2 + $0x4] sm:$0xff]
      %v1863 = vld [vmem:[#allocation2 + $0xc] sm:$0xff]
      %v1864 = vld [vmem:[#allocation2 + $0x14] sm:$0xff]
      %v1865 = vld [vmem:[#allocation2 + $0x1c] sm:$0xff]
      %v1866 = vld [vmem:[#allocation2 + $0x24] sm:$0xf]
      %v1872 = vcombine.low %v1862, %v1862
      %v1873 = vcombine.low %v1863, %v1863
      %v1874 = vcombine.low %v1864, %v1864
      %v1875 = vcombine.low %v1865, %v1865
      %v1876 = vcombine.low %v1866, %v1866
      %1877 = vrot.lane.b32.xlu0 %v1872, 18
      %v1878 = vpop.permute.xlu0 %1877
      %1879 = vrot.lane.b32.xlu0 %v1862, 18
      %v1880 = vpop.permute.xlu0 %1879
      %1881 = vrot.lane.b32.xlu0 %v1873, 18
      %v1882 = vpop.permute.xlu0 %1881
      %1883 = vrot.lane.b32.xlu0 %v1863, 18
      %v1884 = vpop.permute.xlu0 %1883
      %1885 = vrot.lane.b32.xlu0 %v1874, 18
      %v1886 = vpop.permute.xlu0 %1885
      %1887 = vrot.lane.b32.xlu0 %v1864, 18
      %v1888 = vpop.permute.xlu0 %1887
      %1889 = vrot.lane.b32.xlu0 %v1875, 18
      %v1890 = vpop.permute.xlu0 %1889
      %1891 = vrot.lane.b32.xlu0 %v1865, 18
      %v1892 = vpop.permute.xlu0 %1891
      %1893 = vrot.lane.b32.xlu0 %v1876, 18
      %v1894 = vpop.permute.xlu0 %1893
      %vm1895 = vcmask 146432
      %v1896 = vsel %vm1895, %v1878, %v1880
      %v1897 = vsel %vm1895, %v1880, %v1882
      %v1898 = vsel %vm1895, %v1882, %v1884
      %v1899 = vsel %vm1895, %v1884, %v1886
      %v1900 = vsel %vm1895, %v1886, %v1888
      %v1901 = vsel %vm1895, %v1888, %v1890
      %v1902 = vsel %vm1895, %v1890, %v1892
      %v1903 = vsel %vm1895, %v1892, %v1894
      %1912 = vst [vmem:[#allocation3 + $0x300] sm:$0xf0] %v1896
      %1913 = vst [vmem:[#allocation3 + $0x308] sm:$0xf0] %v1897
      %1914 = vst [vmem:[#allocation3 + $0x310] sm:$0xf0] %v1898
      %1915 = vst [vmem:[#allocation3 + $0x318] sm:$0xf0] %v1899
      %1916 = vst [vmem:[#allocation3 + $0x320] sm:$0xf0] %v1900
      %1917 = vst [vmem:[#allocation3 + $0x328] sm:$0xf0] %v1901
      %1918 = vst [vmem:[#allocation3 + $0x330] sm:$0xf0] %v1902
      %1919 = vst [vmem:[#allocation3 + $0x338] sm:$0xf0] %v1903
      %v1920 = vld [vmem:[#allocation2 + $0x4] sm:$0xff]
      %v1921 = vld [vmem:[#allocation2 + $0xc] sm:$0xff]
      %v1922 = vld [vmem:[#allocation2 + $0x14] sm:$0xff]
      %v1923 = vld [vmem:[#allocation2 + $0x1c] sm:$0xff]
      %v1924 = vld [vmem:[#allocation2 + $0x24] sm:$0xf]
      %v1930 = vcombine.high %v1920, %v1920
      %v1931 = vcombine.high %v1921, %v1921
      %v1932 = vcombine.high %v1922, %v1922
      %v1933 = vcombine.high %v1923, %v1923
      %1934 = vrot.lane.b32.xlu0 %v1920, 17
      %v1935 = vpop.permute.xlu0 %1934
      %1936 = vrot.lane.b32.xlu0 %v1930, 17
      %v1937 = vpop.permute.xlu0 %1936
      %1938 = vrot.lane.b32.xlu0 %v1921, 17
      %v1939 = vpop.permute.xlu0 %1938
      %1940 = vrot.lane.b32.xlu0 %v1931, 17
      %v1941 = vpop.permute.xlu0 %1940
      %1942 = vrot.lane.b32.xlu0 %v1922, 17
      %v1943 = vpop.permute.xlu0 %1942
      %1944 = vrot.lane.b32.xlu0 %v1932, 17
      %v1945 = vpop.permute.xlu0 %1944
      %1946 = vrot.lane.b32.xlu0 %v1923, 17
      %v1947 = vpop.permute.xlu0 %1946
      %1948 = vrot.lane.b32.xlu0 %v1933, 17
      %v1949 = vpop.permute.xlu0 %1948
      %1950 = vrot.lane.b32.xlu0 %v1924, 17
      %v1951 = vpop.permute.xlu0 %1950
      %vm1952 = vcmask 138240
      %v1953 = vsel %vm1952, %v1935, %v1937
      %v1954 = vsel %vm1952, %v1937, %v1939
      %v1955 = vsel %vm1952, %v1939, %v1941
      %v1956 = vsel %vm1952, %v1941, %v1943
      %v1957 = vsel %vm1952, %v1943, %v1945
      %v1958 = vsel %vm1952, %v1945, %v1947
      %v1959 = vsel %vm1952, %v1947, %v1949
      %v1960 = vsel %vm1952, %v1949, %v1951
      %1969 = vst [vmem:[#allocation3 + $0x340] sm:$0xf] %v1953
      %1970 = vst [vmem:[#allocation3 + $0x348] sm:$0xf] %v1954
      %1971 = vst [vmem:[#allocation3 + $0x350] sm:$0xf] %v1955
      %1972 = vst [vmem:[#allocation3 + $0x358] sm:$0xf] %v1956
      %1973 = vst [vmem:[#allocation3 + $0x360] sm:$0xf] %v1957
      %1974 = vst [vmem:[#allocation3 + $0x368] sm:$0xf] %v1958
      %1975 = vst [vmem:[#allocation3 + $0x370] sm:$0xf] %v1959
      %1976 = vst [vmem:[#allocation3 + $0x378] sm:$0xf] %v1960
      %v1977 = vld [vmem:[%s4] sm:$0xf]
      %v1978 = vld [vmem:[#allocation3] sm:$0xff]
      %v1979 = vld [vmem:[#allocation3 + $0x8] sm:$0xff]
      %v1980 = vld [vmem:[#allocation3 + $0x10] sm:$0xff]
      %v1981 = vld [vmem:[#allocation3 + $0x18] sm:$0xff]
      %v1982 = vld [vmem:[#allocation3 + $0x20] sm:$0xff]
      %v1983 = vld [vmem:[#allocation3 + $0x28] sm:$0xff]
      %v1984 = vld [vmem:[#allocation3 + $0x30] sm:$0xff]
      %v1985 = vld [vmem:[#allocation3 + $0x38] sm:$0xff]
      %v1986 = vld [vmem:[#allocation3 + $0x40] sm:$0xff]
      %v1987 = vld [vmem:[#allocation3 + $0x48] sm:$0xff]
      %v1988 = vld [vmem:[#allocation3 + $0x50] sm:$0xff]
      %v1989 = vld [vmem:[#allocation3 + $0x58] sm:$0xff]
      %v1990 = vld [vmem:[#allocation3 + $0x60] sm:$0xff]
      %v1991 = vld [vmem:[#allocation3 + $0x68] sm:$0xff]
      %v1992 = vld [vmem:[#allocation3 + $0x70] sm:$0xff]
      %v1993 = vld [vmem:[#allocation3 + $0x78] sm:$0xff]
      %v1994 = vld [vmem:[#allocation3 + $0x80] sm:$0xff]
      %v1995 = vld [vmem:[#allocation3 + $0x88] sm:$0xff]
      %v1996 = vld [vmem:[#allocation3 + $0x90] sm:$0xff]
      %v1997 = vld [vmem:[#allocation3 + $0x98] sm:$0xff]
      %v1998 = vld [vmem:[#allocation3 + $0xa0] sm:$0xff]
      %v1999 = vld [vmem:[#allocation3 + $0xa8] sm:$0xff]
      %v2000 = vld [vmem:[#allocation3 + $0xb0] sm:$0xff]
      %v2001 = vld [vmem:[#allocation3 + $0xb8] sm:$0xff]
      %v2002 = vld [vmem:[#allocation3 + $0xc0] sm:$0xff]
      %v2003 = vld [vmem:[#allocation3 + $0xc8] sm:$0xff]
      %v2004 = vld [vmem:[#allocation3 + $0xd0] sm:$0xff]
      %v2005 = vld [vmem:[#allocation3 + $0xd8] sm:$0xff]
      %v2006 = vld [vmem:[#allocation3 + $0xe0] sm:$0xff]
      %v2007 = vld [vmem:[#allocation3 + $0xe8] sm:$0xff]
      %v2008 = vld [vmem:[#allocation3 + $0xf0] sm:$0xff]
      %v2009 = vld [vmem:[#allocation3 + $0xf8] sm:$0xff]
      %v2010 = vld [vmem:[#allocation3 + $0x100] sm:$0xff]
      %v2011 = vld [vmem:[#allocation3 + $0x108] sm:$0xff]
      %v2012 = vld [vmem:[#allocation3 + $0x110] sm:$0xff]
      %v2013 = vld [vmem:[#allocation3 + $0x118] sm:$0xff]
      %v2014 = vld [vmem:[#allocation3 + $0x120] sm:$0xff]
      %v2015 = vld [vmem:[#allocation3 + $0x128] sm:$0xff]
      %v2016 = vld [vmem:[#allocation3 + $0x130] sm:$0xff]
      %v2017 = vld [vmem:[#allocation3 + $0x138] sm:$0xff]
      %v2018 = vld [vmem:[#allocation3 + $0x140] sm:$0xff]
      %v2019 = vld [vmem:[#allocation3 + $0x148] sm:$0xff]
      %v2020 = vld [vmem:[#allocation3 + $0x150] sm:$0xff]
      %v2021 = vld [vmem:[#allocation3 + $0x158] sm:$0xff]
      %v2022 = vld [vmem:[#allocation3 + $0x160] sm:$0xff]
      %v2023 = vld [vmem:[#allocation3 + $0x168] sm:$0xff]
      %v2024 = vld [vmem:[#allocation3 + $0x170] sm:$0xff]
      %v2025 = vld [vmem:[#allocation3 + $0x178] sm:$0xff]
      %v2026 = vld [vmem:[#allocation3 + $0x180] sm:$0xff]
      %v2027 = vld [vmem:[#allocation3 + $0x188] sm:$0xff]
      %v2028 = vld [vmem:[#allocation3 + $0x190] sm:$0xff]
      %v2029 = vld [vmem:[#allocation3 + $0x198] sm:$0xff]
      %v2030 = vld [vmem:[#allocation3 + $0x1a0] sm:$0xff]
      %v2031 = vld [vmem:[#allocation3 + $0x1a8] sm:$0xff]
      %v2032 = vld [vmem:[#allocation3 + $0x1b0] sm:$0xff]
      %v2033 = vld [vmem:[#allocation3 + $0x1b8] sm:$0xff]
      %v2034 = vld [vmem:[#allocation3 + $0x1c0] sm:$0xff]
      %v2035 = vld [vmem:[#allocation3 + $0x1c8] sm:$0xff]
      %v2036 = vld [vmem:[#allocation3 + $0x1d0] sm:$0xff]
      %v2037 = vld [vmem:[#allocation3 + $0x1d8] sm:$0xff]
      %v2038 = vld [vmem:[#allocation3 + $0x1e0] sm:$0xff]
      %v2039 = vld [vmem:[#allocation3 + $0x1e8] sm:$0xff]
      %v2040 = vld [vmem:[#allocation3 + $0x1f0] sm:$0xff]
      %v2041 = vld [vmem:[#allocation3 + $0x1f8] sm:$0xff]
      %v2042 = vld [vmem:[#allocation3 + $0x200] sm:$0xff]
      %v2043 = vld [vmem:[#allocation3 + $0x208] sm:$0xff]
      %v2044 = vld [vmem:[#allocation3 + $0x210] sm:$0xff]
      %v2045 = vld [vmem:[#allocation3 + $0x218] sm:$0xff]
      %v2046 = vld [vmem:[#allocation3 + $0x220] sm:$0xff]
      %v2047 = vld [vmem:[#allocation3 + $0x228] sm:$0xff]
      %v2048 = vld [vmem:[#allocation3 + $0x230] sm:$0xff]
      %v2049 = vld [vmem:[#allocation3 + $0x238] sm:$0xff]
      %v2050 = vld [vmem:[#allocation3 + $0x240] sm:$0xff]
      %v2051 = vld [vmem:[#allocation3 + $0x248] sm:$0xff]
      %v2052 = vld [vmem:[#allocation3 + $0x250] sm:$0xff]
      %v2053 = vld [vmem:[#allocation3 + $0x258] sm:$0xff]
      %v2054 = vld [vmem:[#allocation3 + $0x260] sm:$0xff]
      %v2055 = vld [vmem:[#allocation3 + $0x268] sm:$0xff]
      %v2056 = vld [vmem:[#allocation3 + $0x270] sm:$0xff]
      %v2057 = vld [vmem:[#allocation3 + $0x278] sm:$0xff]
      %v2058 = vld [vmem:[#allocation3 + $0x280] sm:$0xff]
      %v2059 = vld [vmem:[#allocation3 + $0x288] sm:$0xff]
      %v2060 = vld [vmem:[#allocation3 + $0x290] sm:$0xff]
      %v2061 = vld [vmem:[#allocation3 + $0x298] sm:$0xff]
      %v2062 = vld [vmem:[#allocation3 + $0x2a0] sm:$0xff]
      %v2063 = vld [vmem:[#allocation3 + $0x2a8] sm:$0xff]
      %v2064 = vld [vmem:[#allocation3 + $0x2b0] sm:$0xff]
      %v2065 = vld [vmem:[#allocation3 + $0x2b8] sm:$0xff]
      %v2066 = vld [vmem:[#allocation3 + $0x2c0] sm:$0xff]
      %v2067 = vld [vmem:[#allocation3 + $0x2c8] sm:$0xff]
      %v2068 = vld [vmem:[#allocation3 + $0x2d0] sm:$0xff]
      %v2069 = vld [vmem:[#allocation3 + $0x2d8] sm:$0xff]
      %v2070 = vld [vmem:[#allocation3 + $0x2e0] sm:$0xff]
      %v2071 = vld [vmem:[#allocation3 + $0x2e8] sm:$0xff]
      %v2072 = vld [vmem:[#allocation3 + $0x2f0] sm:$0xff]
      %v2073 = vld [vmem:[#allocation3 + $0x2f8] sm:$0xff]
      %v2074 = vld [vmem:[#allocation3 + $0x300] sm:$0xff]
      %v2075 = vld [vmem:[#allocation3 + $0x308] sm:$0xff]
      %v2076 = vld [vmem:[#allocation3 + $0x310] sm:$0xff]
      %v2077 = vld [vmem:[#allocation3 + $0x318] sm:$0xff]
      %v2078 = vld [vmem:[#allocation3 + $0x320] sm:$0xff]
      %v2079 = vld [vmem:[#allocation3 + $0x328] sm:$0xff]
      %v2080 = vld [vmem:[#allocation3 + $0x330] sm:$0xff]
      %v2081 = vld [vmem:[#allocation3 + $0x338] sm:$0xff]
      %v2082 = vld [vmem:[#allocation3 + $0x340] sm:$0xf]
      %v2083 = vld [vmem:[#allocation3 + $0x348] sm:$0xf]
      %v2084 = vld [vmem:[#allocation3 + $0x350] sm:$0xf]
      %v2085 = vld [vmem:[#allocation3 + $0x358] sm:$0xf]
      %v2086 = vld [vmem:[#allocation3 + $0x360] sm:$0xf]
      %v2087 = vld [vmem:[#allocation3 + $0x368] sm:$0xf]
      %v2088 = vld [vmem:[#allocation3 + $0x370] sm:$0xf]
      %v2089 = vld [vmem:[#allocation3 + $0x378] sm:$0xf]
      %v2090 = vld [vmem:[%s5] sm:$0xf]
      %2092 = vset.pattern.permute.xlu0 0
      %2093 = vperm.xlu0 %2092, %v2090
      %v2094 = vpop.permute.xlu0 %2093
      %vm2096 = vcmask 883712
      %v2098 = vsel %vm2096, %v1977, 0
      %vm2100 = vcmask 1043456
      %v2102 = vsel %vm2100, %v2082, 0
      %v2105 = vsel %vm2100, %v2083, 0
      %v2108 = vsel %vm2100, %v2084, 0
      %v2111 = vsel %vm2100, %v2085, 0
      %v2114 = vsel %vm2100, %v2086, 0
      %v2117 = vsel %vm2100, %v2087, 0
      %v2120 = vsel %vm2100, %v2088, 0
      %v2123 = vsel %vm2100, %v2089, 0
      %2125 = vmatprep.subr.mxu0 %v1979
      %2126 = vmatpush1.msra.mxu0 %v1978
      %2127 = vmatprep.subr.mxu0 %v1987
      %2128 = vmatpush1.msra.mxu0 %v1986
      %2129 = vmatprep.subr.mxu0 %v1995
      %2130 = vmatpush1.msra.mxu0 %v1994
      %2131 = vmatprep.subr.mxu0 %v2003
      %2132 = vmatpush1.msra.mxu0 %v2002
      %2133 = vmatprep.subr.mxu0 %v2011
      %2134 = vmatpush1.msra.mxu0 %v2010
      %2135 = vmatprep.subr.mxu0 %v2019
      %2136 = vmatpush1.msra.mxu0 %v2018
      %2137 = vmatprep.subr.mxu0 %v2027
      %2138 = vmatpush1.msra.mxu0 %v2026
      %2139 = vmatprep.subr.mxu0 %v2035
      %2140 = vmatpush1.msra.mxu0 %v2034
      %2141 = vmatprep.subr.mxu0 %v2043
      %2142 = vmatpush1.msra.mxu0 %v2042
      %2143 = vmatprep.subr.mxu0 %v2051
      %2144 = vmatpush1.msra.mxu0 %v2050
      %2145 = vmatprep.subr.mxu0 %v2059
      %2146 = vmatpush1.msra.mxu0 %v2058
      %2147 = vmatprep.subr.mxu0 %v2067
      %2148 = vmatpush1.msra.mxu0 %v2066
      %2149 = vmatprep.subr.mxu0 %v2075
      %2150 = vmatpush1.msra.mxu0 %v2074
      %2151 = vmatprep.subr.mxu0 %v2105
      %2152 = vmatpush1.msra.mxu0 %v2102
      %2153 = vmatprep.subr.mxu0 0.0
      %2154 = vmatpush1.msra.mxu0 0.0
      %2155 = vmatprep.subr.mxu0 0.0
      %2156 = vmatpush1.msra.mxu0 0.0
      %2157 = vmatprep.subr.mxu0 0.0
      %2158 = vmatpush1.msra.mxu0 0.0
      %2159 = vmatprep.subr.mxu0 0.0
      %2160 = vmatpush1.msra.mxu0 0.0
      %2161 = vmatprep.subr.mxu0 0.0
      %2162 = vmatpush1.msra.mxu0 0.0
      %2163 = vmatprep.subr.mxu0 0.0
      %2164 = vmatpush1.msra.mxu0 0.0
      %2165 = vmatprep.subr.mxu0 0.0
      %2166 = vmatpush1.msra.mxu0 0.0
      %2167 = vmatprep.subr.mxu0 0.0
      %2168 = vmatpush1.msra.mxu0 0.0
      %2169 = vmatprep.subr.mxu0 0.0
      %2170 = vmatpush1.msra.mxu0 0.0
      %2171 = vmatprep.subr.mxu0 0.0
      %2172 = vmatpush1.msra.mxu0 0.0
      %2173 = vmatprep.subr.mxu0 0.0
      %2174 = vmatpush1.msra.mxu0 0.0
      %2175 = vmatprep.subr.mxu0 0.0
      %2176 = vmatpush1.msra.mxu0 0.0
      %2177 = vmatprep.subr.mxu0 0.0
      %2178 = vmatpush1.msra.mxu0 0.0
      %2179 = vmatprep.subr.mxu0 0.0
      %2180 = vmatpush1.msra.mxu0 0.0
      %2181 = vmatprep.subr.mxu0 0.0
      %2182 = vmatpush1.msra.mxu0 0.0
      %2183 = vmatprep.subr.mxu0 0.0
      %2184 = vmatpush1.msra.mxu0 0.0
      %2185 = vmatprep.subr.mxu0 0.0
      %2186 = vmatpush1.msra.mxu0 0.0
      %2187 = vmatprep.subr.mxu0 0.0
      %2188 = vmatpush1.msra.mxu0 0.0
      %2189 = vmatprep.mubr.f32.mxu0 0.0
      %2190 = vmatmul.mubr.f32.gmra.mrb[0].mxu0 %v2098
      %v2191 = vpop.f32.mrb[0].mxu0
      %v2192 = vadd.f32 %v2094, %v2191
      %v2193 = vpop.f32.mrb[0].mxu0
      %v2194 = vadd.f32 %v2094, %v2193
      %2195 = vdwg.mxu0
      %2196 = vmatprep.subr.mxu0 %v1981
      %2197 = vmatpush1.msra.mxu0 %v1980
      %2198 = vmatprep.subr.mxu0 %v1989
      %2199 = vmatpush1.msra.mxu0 %v1988
      %2200 = vmatprep.subr.mxu0 %v1997
      %2201 = vmatpush1.msra.mxu0 %v1996
      %2202 = vmatprep.subr.mxu0 %v2005
      %2203 = vmatpush1.msra.mxu0 %v2004
      %2204 = vmatprep.subr.mxu0 %v2013
      %2205 = vmatpush1.msra.mxu0 %v2012
      %2206 = vmatprep.subr.mxu0 %v2021
      %2207 = vmatpush1.msra.mxu0 %v2020
      %2208 = vmatprep.subr.mxu0 %v2029
      %2209 = vmatpush1.msra.mxu0 %v2028
      %2210 = vmatprep.subr.mxu0 %v2037
      %2211 = vmatpush1.msra.mxu0 %v2036
      %2212 = vmatprep.subr.mxu0 %v2045
      %2213 = vmatpush1.msra.mxu0 %v2044
      %2214 = vmatprep.subr.mxu0 %v2053
      %2215 = vmatpush1.msra.mxu0 %v2052
      %2216 = vmatprep.subr.mxu0 %v2061
      %2217 = vmatpush1.msra.mxu0 %v2060
      %2218 = vmatprep.subr.mxu0 %v2069
      %2219 = vmatpush1.msra.mxu0 %v2068
      %2220 = vmatprep.subr.mxu0 %v2077
      %2221 = vmatpush1.msra.mxu0 %v2076
      %2222 = vmatprep.subr.mxu0 %v2111
      %2223 = vmatpush1.msra.mxu0 %v2108
      %2224 = vmatprep.subr.mxu0 0.0
      %2225 = vmatpush1.msra.mxu0 0.0
      %2226 = vmatprep.subr.mxu0 0.0
      %2227 = vmatpush1.msra.mxu0 0.0
      %2228 = vmatprep.subr.mxu0 0.0
      %2229 = vmatpush1.msra.mxu0 0.0
      %2230 = vmatprep.subr.mxu0 0.0
      %2231 = vmatpush1.msra.mxu0 0.0
      %2232 = vmatprep.subr.mxu0 0.0
      %2233 = vmatpush1.msra.mxu0 0.0
      %2234 = vmatprep.subr.mxu0 0.0
      %2235 = vmatpush1.msra.mxu0 0.0
      %2236 = vmatprep.subr.mxu0 0.0
      %2237 = vmatpush1.msra.mxu0 0.0
      %2238 = vmatprep.subr.mxu0 0.0
      %2239 = vmatpush1.msra.mxu0 0.0
      %2240 = vmatprep.subr.mxu0 0.0
      %2241 = vmatpush1.msra.mxu0 0.0
      %2242 = vmatprep.subr.mxu0 0.0
      %2243 = vmatpush1.msra.mxu0 0.0
      %2244 = vmatprep.subr.mxu0 0.0
      %2245 = vmatpush1.msra.mxu0 0.0
      %2246 = vmatprep.subr.mxu0 0.0
      %2247 = vmatpush1.msra.mxu0 0.0
      %2248 = vmatprep.subr.mxu0 0.0
      %2249 = vmatpush1.msra.mxu0 0.0
      %2250 = vmatprep.subr.mxu0 0.0
      %2251 = vmatpush1.msra.mxu0 0.0
      %2252 = vmatprep.subr.mxu0 0.0
      %2253 = vmatpush1.msra.mxu0 0.0
      %2254 = vmatprep.subr.mxu0 0.0
      %2255 = vmatpush1.msra.mxu0 0.0
      %2256 = vmatprep.subr.mxu0 0.0
      %2257 = vmatpush1.msra.mxu0 0.0
      %2258 = vmatprep.subr.mxu0 0.0
      %2259 = vmatpush1.msra.mxu0 0.0
      %2260 = vmatprep.mubr.f32.mxu0 0.0
      %2261 = vmatmul.mubr.f32.gmra.mrb[0].mxu0 %v2098
      %v2262 = vpop.f32.mrb[0].mxu0
      %v2263 = vadd.f32 %v2094, %v2262
      %v2264 = vpop.f32.mrb[0].mxu0
      %v2265 = vadd.f32 %v2094, %v2264
      %2266 = vdwg.mxu0
      %2267 = vmatprep.subr.mxu0 %v1983
      %2268 = vmatpush1.msra.mxu0 %v1982
      %2269 = vmatprep.subr.mxu0 %v1991
      %2270 = vmatpush1.msra.mxu0 %v1990
      %2271 = vmatprep.subr.mxu0 %v1999
      %2272 = vmatpush1.msra.mxu0 %v1998
      %2273 = vmatprep.subr.mxu0 %v2007
      %2274 = vmatpush1.msra.mxu0 %v2006
      %2275 = vmatprep.subr.mxu0 %v2015
      %2276 = vmatpush1.msra.mxu0 %v2014
      %2277 = vmatprep.subr.mxu0 %v2023
      %2278 = vmatpush1.msra.mxu0 %v2022
      %2279 = vmatprep.subr.mxu0 %v2031
      %2280 = vmatpush1.msra.mxu0 %v2030
      %2281 = vmatprep.subr.mxu0 %v2039
      %2282 = vmatpush1.msra.mxu0 %v2038
      %2283 = vmatprep.subr.mxu0 %v2047
      %2284 = vmatpush1.msra.mxu0 %v2046
      %2285 = vmatprep.subr.mxu0 %v2055
      %2286 = vmatpush1.msra.mxu0 %v2054
      %2287 = vmatprep.subr.mxu0 %v2063
      %2288 = vmatpush1.msra.mxu0 %v2062
      %2289 = vmatprep.subr.mxu0 %v2071
      %2290 = vmatpush1.msra.mxu0 %v2070
      %2291 = vmatprep.subr.mxu0 %v2079
      %2292 = vmatpush1.msra.mxu0 %v2078
      %2293 = vmatprep.subr.mxu0 %v2117
      %2294 = vmatpush1.msra.mxu0 %v2114
      %2295 = vmatprep.subr.mxu0 0.0
      %2296 = vmatpush1.msra.mxu0 0.0
      %2297 = vmatprep.subr.mxu0 0.0
      %2298 = vmatpush1.msra.mxu0 0.0
      %2299 = vmatprep.subr.mxu0 0.0
      %2300 = vmatpush1.msra.mxu0 0.0
      %2301 = vmatprep.subr.mxu0 0.0
      %2302 = vmatpush1.msra.mxu0 0.0
      %2303 = vmatprep.subr.mxu0 0.0
      %2304 = vmatpush1.msra.mxu0 0.0
      %2305 = vmatprep.subr.mxu0 0.0
      %2306 = vmatpush1.msra.mxu0 0.0
      %2307 = vmatprep.subr.mxu0 0.0
      %2308 = vmatpush1.msra.mxu0 0.0
      %2309 = vmatprep.subr.mxu0 0.0
      %2310 = vmatpush1.msra.mxu0 0.0
      %2311 = vmatprep.subr.mxu0 0.0
      %2312 = vmatpush1.msra.mxu0 0.0
      %2313 = vmatprep.subr.mxu0 0.0
      %2314 = vmatpush1.msra.mxu0 0.0
      %2315 = vmatprep.subr.mxu0 0.0
      %2316 = vmatpush1.msra.mxu0 0.0
      %2317 = vmatprep.subr.mxu0 0.0
      %2318 = vmatpush1.msra.mxu0 0.0
      %2319 = vmatprep.subr.mxu0 0.0
      %2320 = vmatpush1.msra.mxu0 0.0
      %2321 = vmatprep.subr.mxu0 0.0
      %2322 = vmatpush1.msra.mxu0 0.0
      %2323 = vmatprep.subr.mxu0 0.0
      %2324 = vmatpush1.msra.mxu0 0.0
      %2325 = vmatprep.subr.mxu0 0.0
      %2326 = vmatpush1.msra.mxu0 0.0
      %2327 = vmatprep.subr.mxu0 0.0
      %2328 = vmatpush1.msra.mxu0 0.0
      %2329 = vmatprep.subr.mxu0 0.0
      %2330 = vmatpush1.msra.mxu0 0.0
      %2331 = vmatprep.mubr.f32.mxu0 0.0
      %2332 = vmatmul.mubr.f32.gmra.mrb[0].mxu0 %v2098
      %v2333 = vpop.f32.mrb[0].mxu0
      %v2334 = vadd.f32 %v2094, %v2333
      %v2335 = vpop.f32.mrb[0].mxu0
      %v2336 = vadd.f32 %v2094, %v2335
      %2337 = vdwg.mxu0
      %2338 = vmatprep.subr.mxu0 %v1985
      %2339 = vmatpush1.msra.mxu0 %v1984
      %2340 = vmatprep.subr.mxu0 %v1993
      %2341 = vmatpush1.msra.mxu0 %v1992
      %2342 = vmatprep.subr.mxu0 %v2001
      %2343 = vmatpush1.msra.mxu0 %v2000
      %2344 = vmatprep.subr.mxu0 %v2009
      %2345 = vmatpush1.msra.mxu0 %v2008
      %2346 = vmatprep.subr.mxu0 %v2017
      %2347 = vmatpush1.msra.mxu0 %v2016
      %2348 = vmatprep.subr.mxu0 %v2025
      %2349 = vmatpush1.msra.mxu0 %v2024
      %2350 = vmatprep.subr.mxu0 %v2033
      %2351 = vmatpush1.msra.mxu0 %v2032
      %2352 = vmatprep.subr.mxu0 %v2041
      %2353 = vmatpush1.msra.mxu0 %v2040
      %2354 = vmatprep.subr.mxu0 %v2049
      %2355 = vmatpush1.msra.mxu0 %v2048
      %2356 = vmatprep.subr.mxu0 %v2057
      %2357 = vmatpush1.msra.mxu0 %v2056
      %2358 = vmatprep.subr.mxu0 %v2065
      %2359 = vmatpush1.msra.mxu0 %v2064
      %2360 = vmatprep.subr.mxu0 %v2073
      %2361 = vmatpush1.msra.mxu0 %v2072
      %2362 = vmatprep.subr.mxu0 %v2081
      %2363 = vmatpush1.msra.mxu0 %v2080
      %2364 = vmatprep.subr.mxu0 %v2123
      %2365 = vmatpush1.msra.mxu0 %v2120
      %2366 = vmatprep.subr.mxu0 0.0
      %2367 = vmatpush1.msra.mxu0 0.0
      %2368 = vmatprep.subr.mxu0 0.0
      %2369 = vmatpush1.msra.mxu0 0.0
      %2370 = vmatprep.subr.mxu0 0.0
      %2371 = vmatpush1.msra.mxu0 0.0
      %2372 = vmatprep.subr.mxu0 0.0
      %2373 = vmatpush1.msra.mxu0 0.0
      %2374 = vmatprep.subr.mxu0 0.0
      %2375 = vmatpush1.msra.mxu0 0.0
      %2376 = vmatprep.subr.mxu0 0.0
      %2377 = vmatpush1.msra.mxu0 0.0
      %2378 = vmatprep.subr.mxu0 0.0
      %2379 = vmatpush1.msra.mxu0 0.0
      %2380 = vmatprep.subr.mxu0 0.0
      %2381 = vmatpush1.msra.mxu0 0.0
      %2382 = vmatprep.subr.mxu0 0.0
      %2383 = vmatpush1.msra.mxu0 0.0
      %2384 = vmatprep.subr.mxu0 0.0
      %2385 = vmatpush1.msra.mxu0 0.0
      %2386 = vmatprep.subr.mxu0 0.0
      %2387 = vmatpush1.msra.mxu0 0.0
      %2388 = vmatprep.subr.mxu0 0.0
      %2389 = vmatpush1.msra.mxu0 0.0
      %2390 = vmatprep.subr.mxu0 0.0
      %2391 = vmatpush1.msra.mxu0 0.0
      %2392 = vmatprep.subr.mxu0 0.0
      %2393 = vmatpush1.msra.mxu0 0.0
      %2394 = vmatprep.subr.mxu0 0.0
      %2395 = vmatpush1.msra.mxu0 0.0
      %2396 = vmatprep.subr.mxu0 0.0
      %2397 = vmatpush1.msra.mxu0 0.0
      %2398 = vmatprep.subr.mxu0 0.0
      %2399 = vmatpush1.msra.mxu0 0.0
      %2400 = vmatprep.subr.mxu0 0.0
      %2401 = vmatpush1.msra.mxu0 0.0
      %2402 = vmatprep.mubr.f32.mxu0 0.0
      %2403 = vmatmul.mubr.f32.gmra.mrb[0].mxu0 %v2098
      %v2404 = vpop.f32.mrb[0].mxu0
      %v2405 = vadd.f32 %v2094, %v2404
      %v2406 = vpop.f32.mrb[0].mxu0
      %v2407 = vadd.f32 %v2094, %v2406
      %2408 = vdwg.mxu0
      %v2409 = vld [vmem:[%s428] sm:$0xff]
      %v2410 = vld [vmem:[%s428 + $0x8] sm:$0xff]
      %v2411 = vunpack.c.l.bf16 %v2409
      %v2412 = vunpack.c.h.bf16 %v2409
      %v2413 = vunpack.c.l.bf16 %v2410
      %v2414 = vunpack.c.h.bf16 %v2410
      %v2419 = vcombine.high %v2411, %v2411
      %v2420 = vcombine.high %v2412, %v2412
      %v2421 = vcombine.high %v2413, %v2413
      %v2422 = vcombine.high %v2414, %v2414
      %v2427 = vadd.f32 %v2192, %v2411
      %v2428 = vadd.f32 %v2194, %v2419
      %v2429 = vadd.f32 %v2263, %v2412
      %v2430 = vadd.f32 %v2265, %v2420
      %v2431 = vadd.f32 %v2334, %v2413
      %v2432 = vadd.f32 %v2336, %v2421
      %v2433 = vadd.f32 %v2405, %v2414
      %v2434 = vadd.f32 %v2407, %v2422
      %v2435 = vmax.f32 %v2427, 0.0
      %v2436 = vmax.f32 %v2428, 0.0
      %v2437 = vmax.f32 %v2429, 0.0
      %v2438 = vmax.f32 %v2430, 0.0
      %v2439 = vmax.f32 %v2431, 0.0
      %v2440 = vmax.f32 %v2432, 0.0
      %v2441 = vmax.f32 %v2433, 0.0
      %v2442 = vmax.f32 %v2434, 0.0
      %v2451 = vcombine.low %v2435, %v2436
      %v2452 = vcombine.low %v2437, %v2438
      %v2453 = vcombine.low %v2439, %v2440
      %v2454 = vcombine.low %v2441, %v2442
      %2459 = vst [vmem:[%s440] sm:$0xff] %v2451
      %2460 = vst [vmem:[%s440 + $0x8] sm:$0xff] %v2452
      %2461 = vst [vmem:[%s440 + $0x10] sm:$0xff] %v2453
      %2462 = vst [vmem:[%s440 + $0x18] sm:$0xff] %v2454
      %s2463 = sadd.s32 %s22, 1
      %s2464 = smul.u32 8, %s2463
      %p2465 = scmp.lt.s32.totalorder %s21, 1
      %s2466 = scalar_select %p2465, %s21, 1
      %p2467 = scmp.lt.s32.totalorder %s2464, 23
      %s2468 = scalar_select %p2467, %s2464, 23
      %s2469 = smul.addr %s2466, 24
      %s2470 = sadd.s32 %s2468, %s2469
      %s2471 = smul.addr %s2470, 4
      %s2472 = scalar_lea.vmem %s6, %s2471
      // Predicated region
      $region45: #{simple_rb_forward.3} parent=43 // pred_check
        %p2473 = pneg %p219
      $region46: #{simple_rb_forward.3} parent=43 // pred_check_branch
        %2475 = sbr.rel (%p2473) target = $region48
      $region47: #{simple_rb_forward.3} parent=43 // pred_region
        %s2476 = sadd.s32 %s22, 1
        %s2477 = smul.u32 8, %s2476
      $region48: #{simple_rb_forward.3} parent=43 // pred_fallthru
        _
    $region44: #{simple_rb_forward.3} parent=5 // pred_fallthru
      _
    %p2478 = scmp.le.s32.totalorder 2, %s12
    // Predicated region
    $region49: #{simple_rb_forward.3} parent=5 // pred_check
      %p2479 = pneg %p2478
    $region50: #{simple_rb_forward.3} parent=5 // pred_check_branch
      %2481 = sbr.rel (%p2479) target = $region52
    $region51: #{simple_rb_forward.3} parent=5 // pred_region
      %s2482 = ssub.s32 %s12, 2
      // Predicated region
      $region53: #{simple_rb_forward.3} parent=51 // pred_check
        %p2483 = pneg %p225
      $region54: #{simple_rb_forward.3} parent=51 // pred_check_branch
        %2485 = sbr.rel (%p2483) target = $region56
      $region55: #{simple_rb_forward.3} parent=51 // pred_region
        %s2486 = sadd.s32 %s24, 1
        %s2487 = smul.u32 8, %s2486
        %p2488 = scmp.lt.s32.totalorder %s23, 1
        %s2489 = scalar_select %p2488, %s23, 1
        %p2490 = scmp.lt.s32.totalorder %s2487, 23
        %s2491 = scalar_select %p2490, %s2487, 23
        %s2492 = smul.addr %s2489, 24
        %s2493 = sadd.s32 %s2491, %s2492
        %s2494 = smul.addr %s2493, 4
        %s2495 = scalar_lea.vmem %s6, %s2494
      $region56: #{simple_rb_forward.3} parent=51 // pred_fallthru
        _
    $region52: #{simple_rb_forward.3} parent=5 // pred_fallthru
      _
  $region6: #{simple_rb_forward.3} parent=0 // loop_footer
    %s16 = sadd.s32 1, %s12
  $region7: #{simple_rb_forward.3} parent=0 // loop_footer_branch
    %11 = sbr.rel target = $region3
  $region8: #{simple_rb_forward.3} parent=0 // loop_exit
    _

</llo_original>
